<compile_context>
chip_gen: v6e
topology: v6e:2x2x1
jax: 0.10.0
libtpu: 0.0.40
codegen_flags: <defaults>
</compile_context>

<pallas_src>
import functools

import numpy as np
import jax
import jax.numpy as jnp
from jax.experimental import pallas as pl
from jax.experimental.pallas import tpu as pltpu

LN_EPS = 1e-5
VMEM_LIMIT_BYTES = 48 * 1024 * 1024

_BUFFERED_OK = None  # runtime probe result for pipeline_mode=pl.Buffered(1)


def _buffered_supported():
    """Probe whether pl.Buffered(1) single-buffering lowers on this backend."""
    global _BUFFERED_OK
    if _BUFFERED_OK is not None:
        return _BUFFERED_OK
    try:
        spec = pl.BlockSpec((8, 128), lambda i: (0, 0),
                            pipeline_mode=pl.Buffered(1))

        def _probe_kernel(x_ref, o_ref):
            o_ref[...] = x_ref[...] + 1.0

        out = pl.pallas_call(
            _probe_kernel,
            out_shape=jax.ShapeDtypeStruct((8, 128), jnp.float32),
            grid=(1,),
            in_specs=[spec],
            out_specs=pl.BlockSpec((8, 128), lambda i: (0, 0)),
        )(jnp.zeros((8, 128), jnp.float32))
        jax.block_until_ready(out)
        _BUFFERED_OK = True
    except Exception:
        _BUFFERED_OK = False
    return _BUFFERED_OK


def _const_spec(shape, index_map):
    """BlockSpec for inputs whose block index never changes (weights etc.)."""
    if _buffered_supported():
        return pl.BlockSpec(shape, index_map, pipeline_mode=pl.Buffered(1))
    return pl.BlockSpec(shape, index_map)


# ----------------------------------------------------------------------------
# Pallas kernels
# ----------------------------------------------------------------------------
def window_attn_kernel(*refs, num_heads, has_mask, fuse_norm):
    # refs: [norm1_g, norm1_b]?, x, [mask]?, bias, qkv_w, qkv_b, proj_w, proj_b,
    #       out, o_scratch
    o_ref, osc_ref = refs[-2], refs[-1]
    refs = refs[:-2]
    idx = 0
    if fuse_norm:
        g_ref, b_ref = refs[idx], refs[idx + 1]
        idx += 2
    x_ref = refs[idx]; idx += 1
    if has_mask:
        mask_ref = refs[idx]; idx += 1
    bias_ref, qkvw_ref, qkvb_ref, projw_ref, projb_ref = refs[idx:idx + 5]

    x = x_ref[...].astype(jnp.float32)            # (WB, N, C)
    WB, N, C = x.shape
    hd = C // num_heads

    if fuse_norm:                                 # fused norm1 (per-token LN)
        mu = jnp.mean(x, axis=-1, keepdims=True)
        var = jnp.mean((x - mu) ** 2, axis=-1, keepdims=True)
        x = (x - mu) * jax.lax.rsqrt(var + LN_EPS)
        x = x * g_ref[...].astype(jnp.float32) + b_ref[...].astype(jnp.float32)

    # fused qkv projection over all WB*N tokens (bf16 MXU, f32 accumulation);
    # the qk scale is already folded into the q columns of qkv_w at init.
    x2 = x.reshape(WB * N, C).astype(jnp.bfloat16)
    qkv = jnp.dot(x2, qkvw_ref[...], preferred_element_type=jnp.float32)
    qkv = (qkv + qkvb_ref[...].astype(jnp.float32)).astype(jnp.bfloat16)
    qkv = qkv.reshape(WB, N, 3 * C)

    if has_mask:
        mask = mask_ref[...].astype(jnp.float32)  # (WB, N, N) additive 0/-100

    # TODO(synk): for very large head counts a fully head-batched einsum
    # (whnd,whmd->whnm) would bound live ranges better than this static loop.
    for h in range(num_heads):                    # static, small head loop
        q = qkv[:, :, h * hd:(h + 1) * hd]
        k = qkv[:, :, C + h * hd:C + (h + 1) * hd]
        v = qkv[:, :, 2 * C + h * hd:2 * C + (h + 1) * hd]

        # batched over WB windows: (WB, N, hd) x (WB, N, hd) -> (WB, N, N)
        s = jnp.einsum('wnd,wmd->wnm', q, k,
                       preferred_element_type=jnp.float32)
        s = s + bias_ref[h].astype(jnp.float32)   # (N, N) broadcast over WB
        if has_mask:
            s = s + mask

        s = s - jnp.max(s, axis=-1, keepdims=True)
        p = jnp.exp(s)
        # approx reciprocal (EUP); exact enough for inference-quality softmax
        p = p * pl.reciprocal(jnp.sum(p, axis=-1, keepdims=True), approx=True)

        o_h = jnp.einsum('wnm,wmd->wnd', p.astype(jnp.bfloat16), v,
                         preferred_element_type=jnp.float32)   # (WB, N, hd)
        # stash per-head output at its static lane offset; one projection later
        osc_ref[:, :, h * hd:(h + 1) * hd] = o_h.astype(jnp.bfloat16)

    # single (WB*N, C) x (C, C) output projection (full K=C MXU contraction)
    o_full = osc_ref[...].reshape(WB * N, C)
    out = jnp.dot(o_full, projw_ref[...], preferred_element_type=jnp.float32)
    out = out + projb_ref[...].astype(jnp.float32)
    o_ref[...] = out.reshape(WB, N, C).astype(o_ref.dtype)


def mlp_residual_kernel(sc_ref, attn_ref, g_ref, b_ref,
                        w1_ref, b1_ref, w2_ref, b2_ref, o_ref):
    # x = shortcut + attention_branch ; out = x + fc2(gelu(fc1(norm2(x))))
    x = sc_ref[...] + attn_ref[...]
    mu = jnp.mean(x, axis=-1, keepdims=True)
    var = jnp.mean((x - mu) ** 2, axis=-1, keepdims=True)
    xn = (x - mu) * jax.lax.rsqrt(var + LN_EPS)
    xn = xn * g_ref[...] + b_ref[...]

    h = jnp.dot(xn.astype(jnp.bfloat16), w1_ref[...],
                preferred_element_type=jnp.float32) + b1_ref[...]
    # exact (erf) GELU — matches torch.nn.GELU default
    h = 0.5 * h * (1.0 + jax.lax.erf(h * 0.7071067811865476))
    y = jnp.dot(h.astype(jnp.bfloat16), w2_ref[...],
                preferred_element_type=jnp.float32) + b2_ref[...]
    o_ref[...] = (x + y).astype(o_ref.dtype)


# ----------------------------------------------------------------------------
# Pallas wrappers
# ----------------------------------------------------------------------------
def _pick_wb(nW, N, batch, target_rows=256):
    """Windows per grid step: divides nW, ~<=256 rows, keeps grid length >= 2."""
    best = 1
    for cand in range(1, nW + 1):
        if nW % cand:
            continue
        if cand * N > max(target_rows, N):
            continue
        if (nW // cand) * batch < 2 and cand != nW:
            continue
        best = cand
    return best


def _token_tile(T, target=256):
    """Token tile for the MLP pass; caller pads T up to a multiple of it."""
    for tm in (target, 128, 64, 32, 16, 8):
        if tm <= T and T % tm == 0:
            return tm
    if T <= target:
        return -(-T // 8) * 8       # single padded block (tiny inputs)
    return target                    # pad T up to a multiple of `target`


def window_attention_pallas(x_windows, attn_mask, rel_bias, p, num_heads,
                            *, fuse_norm, has_mask, batch):
    Bw, N, C = x_windows.shape
    nW = Bw // batch
    WB = _pick_wb(nW, N, batch)
    nmb = nW // WB

    inputs, in_specs = [], []
    if fuse_norm:
        inputs += [p['norm1_g'], p['norm1_b']]
        in_specs += [_const_spec((1, C), lambda wi, bi: (0, 0)),
                     _const_spec((1, C), lambda wi, bi: (0, 0))]

    inputs.append(x_windows)
    in_specs.append(pl.BlockSpec(
        (WB, N, C), lambda wi, bi, _n=nmb: (bi * _n + wi, 0, 0)))

    if has_mask:
        # mask block index depends only on the OUTER grid axis -> constant
        # across consecutive (inner, batch) steps, so its DMA is not repeated.
        inputs.append(attn_mask)
        in_specs.append(pl.BlockSpec((WB, N, N), lambda wi, bi: (wi, 0, 0)))

    inputs += [rel_bias, p['qkv_w'], p['qkv_b'], p['proj_w'], p['proj_b']]
    in_specs += [
        _const_spec((num_heads, N, N), lambda wi, bi: (0, 0, 0)),
        _const_spec((C, 3 * C), lambda wi, bi: (0, 0)),
        _const_spec((1, 3 * C), lambda wi, bi: (0, 0)),
        _const_spec((C, C), lambda wi, bi: (0, 0)),
        _const_spec((1, C), lambda wi, bi: (0, 0)),
    ]

    kernel = functools.partial(window_attn_kernel, num_heads=num_heads,
                               has_mask=has_mask, fuse_norm=fuse_norm)
    return pl.pallas_call(
        kernel,
        out_shape=jax.ShapeDtypeStruct((Bw, N, C), x_windows.dtype),
        grid=(nmb, batch),
        in_specs=in_specs,
        out_specs=pl.BlockSpec(
            (WB, N, C), lambda wi, bi, _n=nmb: (bi * _n + wi, 0, 0)),
        scratch_shapes=[pltpu.VMEM((WB, N, C), jnp.bfloat16)],
        compiler_params=pltpu.CompilerParams(
            dimension_semantics=("parallel", "parallel"),
            vmem_limit_bytes=VMEM_LIMIT_BYTES),
    )(*inputs)


def mlp_residual_pallas(shortcut, attn_out, p):
    T, C = shortcut.shape
    Hd = p['fc1_w'].shape[1]
    TM = _token_tile(T)
    Tp = -(-T // TM) * TM
    if Tp != T:                                     # pad tokens to tile multiple
        shortcut = jnp.pad(shortcut, ((0, Tp - T), (0, 0)))
        attn_out = jnp.pad(attn_out, ((0, Tp - T), (0, 0)))

    out = pl.pallas_call(
        mlp_residual_kernel,
        out_shape=jax.ShapeDtypeStruct((Tp, C), shortcut.dtype),
        grid=(Tp // TM,),
        in_specs=[
            pl.BlockSpec((TM, C), lambda i: (i, 0)),
            pl.BlockSpec((TM, C), lambda i: (i, 0)),
            _const_spec((1, C), lambda i: (0, 0)),
            _const_spec((1, C), lambda i: (0, 0)),
            _const_spec((C, Hd), lambda i: (0, 0)),
            _const_spec((1, Hd), lambda i: (0, 0)),
            _const_spec((Hd, C), lambda i: (0, 0)),
            _const_spec((1, C), lambda i: (0, 0)),
        ],
        out_specs=pl.BlockSpec((TM, C), lambda i: (i, 0)),
        compiler_params=pltpu.CompilerParams(
            dimension_semantics=("parallel",),
            vmem_limit_bytes=VMEM_LIMIT_BYTES),
    )(shortcut, attn_out,
      p['norm2_g'], p['norm2_b'],
      p['fc1_w'], p['fc1_b'], p['fc2_w'], p['fc2_b'])
    return out[:T] if Tp != T else out


# ----------------------------------------------------------------------------
# Glue: window helpers, mask, parameters
# ----------------------------------------------------------------------------
def get_window_size(x_size, window_size, shift_size=None):
    ws = list(window_size)
    ss = list(shift_size) if shift_size is not None else None
    for i in range(len(x_size)):
        if x_size[i] <= window_size[i]:
            ws[i] = x_size[i]
            if ss is not None:
                ss[i] = 0
    if shift_size is None:
        return tuple(ws)
    return tuple(ws), tuple(ss)


def window_partition(x, ws):
    B, D, H, W, C = x.shape
    x = x.reshape(B, D // ws[0], ws[0], H // ws[1], ws[1], W // ws[2], ws[2], C)
    x = jnp.transpose(x, (0, 1, 3, 5, 2, 4, 6, 7))
    return x.reshape(-1, ws[0] * ws[1] * ws[2], C)


def window_reverse(windows, ws, B, D, H, W):
    x = windows.reshape(B, D // ws[0], H // ws[1], W // ws[2],
                        ws[0], ws[1], ws[2], -1)
    x = jnp.transpose(x, (0, 1, 4, 2, 5, 3, 6, 7))
    return x.reshape(B, D, H, W, -1)


def compute_mask(Dp, Hp, Wp, window_size, shift_size):
    img_mask = np.zeros((1, Dp, Hp, Wp, 1), np.float32)
    cnt = 0
    for d in (slice(-window_size[0]),
              slice(-window_size[0], -shift_size[0]),
              slice(-shift_size[0], None)):
        for h in (slice(-window_size[1]),
                  slice(-window_size[1], -shift_size[1]),
                  slice(-shift_size[1], None)):
            for w in (slice(-window_size[2]),
                      slice(-window_size[2], -shift_size[2]),
                      slice(-shift_size[2], None)):
                img_mask[:, d, h, w, :] = cnt
                cnt += 1
    mask_windows = window_partition(jnp.asarray(img_mask), window_size)
    mask_windows = mask_windows[..., 0]                        # (nW, N)
    attn_mask = mask_windows[:, None, :] - mask_windows[:, :, None]
    attn_mask = jnp.where(attn_mask != 0,
                          jnp.float32(-100.0), jnp.float32(0.0))
    return attn_mask.astype(jnp.bfloat16)       # -100 / 0 are exact in bf16


def _relative_position_index(window_size):
    wd, wh, ww = window_size
    coords = np.stack(np.meshgrid(np.arange(wd), np.arange(wh),
                                  np.arange(ww), indexing='ij'))
    coords_flatten = coords.reshape(3, -1)
    rel = coords_flatten[:, :, None] - coords_flatten[:, None, :]
    rel = rel.transpose(1, 2, 0).astype(np.int64)
    rel[:, :, 0] += wd - 1
    rel[:, :, 1] += wh - 1
    rel[:, :, 2] += ww - 1
    rel[:, :, 0] *= (2 * wh - 1) * (2 * ww - 1)
    rel[:, :, 1] *= 2 * ww - 1
    return rel.sum(-1)                                          # (Nf, Nf)


def init_params(key, dim, depth, num_heads, window_size, mlp_ratio):
    wd, wh, ww = window_size
    Nf = wd * wh * ww
    hidden = int(dim * mlp_ratio)
    hd = dim // num_heads
    scale = hd ** (-0.5)
    rp_index = jnp.asarray(_relative_position_index(window_size), jnp.int32)
    table_len = (2 * wd - 1) * (2 * wh - 1) * (2 * ww - 1)

    blocks = []
    for _ in range(depth):
        key, k0, k1, k2, k3, k4 = jax.random.split(key, 6)
        rpb_table = 0.02 * jax.random.normal(k2, (table_len, num_heads),
                                             jnp.float32)
        # precompute relative-position bias once (constant per forward), bf16
        rel_bias = rpb_table[rp_index.reshape(-1)].reshape(Nf, Nf, num_heads)
        rel_bias = jnp.transpose(rel_bias, (2, 0, 1)).astype(jnp.bfloat16)

        qkv_w = 0.02 * jax.random.normal(k0, (dim, 3 * dim), jnp.float32)
        qkv_w = qkv_w.at[:, :dim].multiply(scale)   # fold qk scale into q cols
        # qkv_bias=False is the BasicLayer default -> zeros (scale fold no-op)
        qkv_b = jnp.zeros((3 * dim,), jnp.float32).at[:dim].multiply(scale)

        blocks.append(dict(
            norm1_g=jnp.ones((1, dim), jnp.float32),
            norm1_b=jnp.zeros((1, dim), jnp.float32),
            qkv_w=qkv_w.astype(jnp.bfloat16),               # bf16 in params
            qkv_b=qkv_b.reshape(1, 3 * dim),
            proj_w=(0.02 * jax.random.normal(k1, (dim, dim), jnp.float32)
                    ).astype(jnp.bfloat16),
            proj_b=jnp.zeros((1, dim), jnp.float32),
            rpb_table=rpb_table,
            rp_index=rp_index,
            rel_bias=rel_bias,
            norm2_g=jnp.ones((1, dim), jnp.float32),
            norm2_b=jnp.zeros((1, dim), jnp.float32),
            fc1_w=(0.02 * jax.random.normal(k3, (dim, hidden), jnp.float32)
                   ).astype(jnp.bfloat16),
            fc1_b=jnp.zeros((1, hidden), jnp.float32),
            fc2_w=(0.02 * jax.random.normal(k4, (hidden, dim), jnp.float32)
                   ).astype(jnp.bfloat16),
            fc2_b=jnp.zeros((1, dim), jnp.float32),
        ))
    return dict(blocks=blocks)


# ----------------------------------------------------------------------------
# Swin block + BasicLayer forward (drop/droppath = 0 -> identity)
# ----------------------------------------------------------------------------
def swin_block_forward(x, p, window_size, shift_size, mask_matrix, num_heads):
    B, D, H, W, C = x.shape
    ws, ss = get_window_size((D, H, W), window_size, shift_size)
    shortcut = x

    pad_d1 = (ws[0] - D % ws[0]) % ws[0]
    pad_b = (ws[1] - H % ws[1]) % ws[1]
    pad_r = (ws[2] - W % ws[2]) % ws[2]
    need_pad = (pad_d1 > 0) or (pad_b > 0) or (pad_r > 0)
    fuse_norm = not need_pad

    if fuse_norm:
        xp = x                              # norm1 fused inside attention kernel
    else:
        # Padding present: apply norm1 here so padded tokens stay exactly zero
        # post-norm (matches the PyTorch order norm -> pad). Plain-JAX LN.
        mu = jnp.mean(x, axis=-1, keepdims=True)
        var = jnp.mean((x - mu) ** 2, axis=-1, keepdims=True)
        xn = (x - mu) * jax.lax.rsqrt(var + LN_EPS)
        xn = xn * p['norm1_g'] + p['norm1_b']
        xp = jnp.pad(xn, ((0, 0), (0, pad_d1), (0, pad_b), (0, pad_r), (0, 0)))

    _, Dp, Hp, Wp, _ = xp.shape
    N = ws[0] * ws[1] * ws[2]

    shifted_flag = any(i > 0 for i in ss)
    if shifted_flag:
        shifted = jnp.roll(xp, (-ss[0], -ss[1], -ss[2]), axis=(1, 2, 3))
        attn_mask = mask_matrix
    else:
        shifted = xp
        attn_mask = None                    # non-shifted: no mask DMA / add

    x_windows = window_partition(shifted, ws)            # (B*nW, N, C)

    if N == p['rel_bias'].shape[-1]:
        rel_bias = p['rel_bias']                          # precomputed at init
    else:                                                 # shrunken window
        idx = p['rp_index'][:N, :N].reshape(-1)
        rel_bias = p['rpb_table'][idx].reshape(N, N, num_heads)
        rel_bias = jnp.transpose(rel_bias, (2, 0, 1)).astype(jnp.bfloat16)

    attn_windows = window_attention_pallas(
        x_windows, attn_mask, rel_bias, p, num_heads,
        fuse_norm=fuse_norm, has_mask=shifted_flag, batch=B)

    shifted_o = window_reverse(attn_windows, ws, B, Dp, Hp, Wp)
    if shifted_flag:
        xo = jnp.roll(shifted_o, (ss[0], ss[1], ss[2]), axis=(1, 2, 3))
    else:
        xo = shifted_o
    xo = xo[:, :D, :H, :W, :]

    T = B * D * H * W
    out = mlp_residual_pallas(shortcut.reshape(T, C), xo.reshape(T, C), p)
    return out.reshape(B, D, H, W, C)


def basic_layer_forward(x, params, window_size, depth, num_heads):
    # x: (B, C, D, H, W)  -- downsample / upsample are None (defaults)
    B, C, D, H, W = x.shape
    shift_size = tuple(i // 2 for i in window_size)
    ws, ss = get_window_size((D, H, W), window_size, shift_size)

    x = jnp.transpose(x, (0, 2, 3, 4, 1))                 # b d h w c
    Dp = int(np.ceil(D / ws[0])) * ws[0]
    Hp = int(np.ceil(H / ws[1])) * ws[1]
    Wp = int(np.ceil(W / ws[2])) * ws[2]
    attn_mask = compute_mask(Dp, Hp, Wp, ws, ss)

    for i in range(depth):
        blk_shift = (0, 0, 0) if i % 2 == 0 else shift_size
        x = swin_block_forward(x, params['blocks'][i], window_size,
                               blk_shift, attn_mask, num_heads)

    x = x.reshape(B, D, H, W, -1)
    x = jnp.transpose(x, (0, 4, 1, 2, 3))                 # b c d h w
    return x


# ----------------------------------------------------------------------------
if __name__ == "__main__":
    key = jax.random.PRNGKey(0)
    B, C, D, H, W = 2, 16, 4, 8, 8
    depth, num_heads = 2, 2
    window_size = (2, 4, 4)
    mlp_ratio = 4.0

    kx, kp = jax.random.split(key)
    x = jax.random.normal(kx, (B, C, D, H, W), jnp.float32)
    params = init_params(kp, C, depth, num_heads, window_size, mlp_ratio)

    y = basic_layer_forward(x, params, window_size, depth, num_heads)
    y = jax.block_until_ready(y)
    assert y.shape == (B, C, D, H, W), y.shape
    assert jnp.all(jnp.isfinite(y))
    print("KERNEL_OK")
</pallas_src>

<mosaic_0001>
module attributes {stable_mosaic.version = 11 : i64} {
  func.func @_probe_kernel(%arg0: i32, %arg1: memref<8x128xf32, #tpu.memory_space<vmem>>, %arg2: memref<8x128xf32, #tpu.memory_space<vmem>>) attributes {dimension_semantics = [#tpu.dimension_semantics<arbitrary>], iteration_bounds = array<i64: 1>, scalar_prefetch = 0 : i64, scratch_operands = 0 : i64, tpu.core_type = #tpu.core_type<tc>, window_params = [{pipeline_mode = #tpu.pipeline_mode<synchronous>, transform_indices = @transform_0, window_bounds = array<i64: 8, 128>}, {pipeline_mode = #tpu.pipeline_mode<synchronous>, transform_indices = @transform_1, window_bounds = array<i64: 8, 128>}]} {
    %c0 = arith.constant 0 : index
    %c0_0 = arith.constant 0 : index
    %0 = vector.load %arg1[%c0, %c0_0] : memref<8x128xf32, #tpu.memory_space<vmem>>, vector<8x128xf32>
    %cst = arith.constant 1.000000e+00 : f32
    %1 = vector.broadcast %cst : f32 to vector<8x128xf32>
    %2 = arith.addf %0, %1 : vector<8x128xf32>
    %c0_1 = arith.constant 0 : index
    %c0_2 = arith.constant 0 : index
    %3 = vector.load %arg2[%c0_1, %c0_2] : memref<8x128xf32, #tpu.memory_space<vmem>>, vector<8x128xf32>
    tpu.vector_store %arg2[%c0_1, %c0_2], %2 {strides = array<i32>} : memref<8x128xf32, #tpu.memory_space<vmem>>, vector<8x128xf32>,
    return
  }
  func.func @transform_0(%arg0: i32) -> (i32, i32) {
    %c0_i32 = arith.constant 0 : i32
    %c0_i32_0 = arith.constant 0 : i32
    %c0_i32_1 = arith.constant 0 : i32
    return %c0_i32, %c0_i32_0 : i32, i32
  }
  func.func @transform_1(%arg0: i32) -> (i32, i32) {
    %c0_i32 = arith.constant 0 : i32
    %c0_i32_0 = arith.constant 0 : i32
    %c0_i32_1 = arith.constant 0 : i32
    return %c0_i32, %c0_i32_0 : i32, i32
  }
}

module attributes {stable_mosaic.version = 11 : i64} {
  func.func @window_attn_kernel(%arg0: i32, %arg1: i32, %arg2: memref<1x16xf32, #tpu.memory_space<vmem>>, %arg3: memref<1x16xf32, #tpu.memory_space<vmem>>, %arg4: memref<8x32x16xf32, #tpu.memory_space<vmem>>, %arg5: memref<2x32x32xbf16, #tpu.memory_space<vmem>>, %arg6: memref<16x48xbf16, #tpu.memory_space<vmem>>, %arg7: memref<1x48xf32, #tpu.memory_space<vmem>>, %arg8: memref<16x16xbf16, #tpu.memory_space<vmem>>, %arg9: memref<1x16xf32, #tpu.memory_space<vmem>>, %arg10: memref<8x32x16xf32, #tpu.memory_space<vmem>>, %arg11: memref<8x32x16xbf16, #tpu.memory_space<vmem>>) attributes {dimension_semantics = [#tpu.dimension_semantics<parallel>, #tpu.dimension_semantics<parallel>], iteration_bounds = array<i64: 1, 2>, scalar_prefetch = 0 : i64, scratch_operands = 1 : i64, tpu.core_type = #tpu.core_type<tc>, window_params = [{pipeline_mode = #tpu.pipeline_mode<synchronous>, transform_indices = @transform_0, window_bounds = array<i64: 1, 16>}, {pipeline_mode = #tpu.pipeline_mode<synchronous>, transform_indices = @transform_1, window_bounds = array<i64: 1, 16>}, {transform_indices = @transform_2, window_bounds = array<i64: 8, 32, 16>}, {pipeline_mode = #tpu.pipeline_mode<synchronous>, transform_indices = @transform_3, window_bounds = array<i64: 2, 32, 32>}, {pipeline_mode = #tpu.pipeline_mode<synchronous>, transform_indices = @transform_4, window_bounds = array<i64: 16, 48>}, {pipeline_mode = #tpu.pipeline_mode<synchronous>, transform_indices = @transform_5, window_bounds = array<i64: 1, 48>}, {pipeline_mode = #tpu.pipeline_mode<synchronous>, transform_indices = @transform_6, window_bounds = array<i64: 16, 16>}, {pipeline_mode = #tpu.pipeline_mode<synchronous>, transform_indices = @transform_7, window_bounds = array<i64: 1, 16>}, {transform_indices = @transform_8, window_bounds = array<i64: 8, 32, 16>}]} {
    %c0 = arith.constant 0 : index
    %c0_0 = arith.constant 0 : index
    %c0_1 = arith.constant 0 : index
    %0 = vector.load %arg4[%c0, %c0_0, %c0_1] : memref<8x32x16xf32, #tpu.memory_space<vmem>>, vector<8x32x16xf32>
    %cst = arith.constant dense<0.000000e+00> : vector<8x32xf32>
    %1 = vector.multi_reduction <add>, %0, %cst [2] : vector<8x32x16xf32> to vector<8x32xf32>
    %2 = vector.shape_cast %1 : vector<8x32xf32> to vector<8x32x1xf32>
    %cst_2 = arith.constant 1.600000e+01 : f32
    %3 = vector.broadcast %cst_2 : f32 to vector<8x32x1xf32>
    %4 = arith.divf %2, %3 : vector<8x32x1xf32>
    %5 = vector.broadcast %4 : vector<8x32x1xf32> to vector<8x32x16xf32>
    %6 = arith.subf %0, %5 : vector<8x32x16xf32>
    %7 = arith.mulf %6, %6 : vector<8x32x16xf32>
    %cst_3 = arith.constant dense<0.000000e+00> : vector<8x32xf32>
    %8 = vector.multi_reduction <add>, %7, %cst_3 [2] : vector<8x32x16xf32> to vector<8x32xf32>
    %9 = vector.shape_cast %8 : vector<8x32xf32> to vector<8x32x1xf32>
    %cst_4 = arith.constant 1.600000e+01 : f32
    %10 = vector.broadcast %cst_4 : f32 to vector<8x32x1xf32>
    %11 = arith.divf %9, %10 : vector<8x32x1xf32>
    %12 = vector.broadcast %4 : vector<8x32x1xf32> to vector<8x32x16xf32>
    %13 = arith.subf %0, %12 : vector<8x32x16xf32>
    %cst_5 = arith.constant 9.99999974E-6 : f32
    %14 = vector.broadcast %cst_5 : f32 to vector<8x32x1xf32>
    %15 = arith.addf %11, %14 : vector<8x32x1xf32>
    %16 = math.rsqrt %15 : vector<8x32x1xf32>
    %17 = vector.broadcast %16 : vector<8x32x1xf32> to vector<8x32x16xf32>
    %18 = arith.mulf %13, %17 : vector<8x32x16xf32>
    %c0_6 = arith.constant 0 : index
    %c0_7 = arith.constant 0 : index
    %19 = vector.load %arg2[%c0_6, %c0_7] : memref<1x16xf32, #tpu.memory_space<vmem>>, vector<1x16xf32>
    %20 = vector.shape_cast %19 : vector<1x16xf32> to vector<1x1x16xf32>
    %21 = vector.broadcast %20 : vector<1x1x16xf32> to vector<8x32x16xf32>
    %22 = arith.mulf %18, %21 : vector<8x32x16xf32>
    %c0_8 = arith.constant 0 : index
    %c0_9 = arith.constant 0 : index
    %23 = vector.load %arg3[%c0_8, %c0_9] : memref<1x16xf32, #tpu.memory_space<vmem>>, vector<1x16xf32>
    %24 = vector.shape_cast %23 : vector<1x16xf32> to vector<1x1x16xf32>
    %25 = vector.broadcast %24 : vector<1x1x16xf32> to vector<8x32x16xf32>
    %26 = arith.addf %22, %25 : vector<8x32x16xf32>
    %27 = vector.shape_cast %26 : vector<8x32x16xf32> to vector<256x16xf32>
    %28 = arith.truncf %27 : vector<256x16xf32> to vector<256x16xbf16>
    %c0_10 = arith.constant 0 : index
    %c0_11 = arith.constant 0 : index
    %29 = vector.load %arg6[%c0_10, %c0_11] : memref<16x48xbf16, #tpu.memory_space<vmem>>, vector<16x48xbf16>
    %cst_12 = arith.constant dense<0.000000e+00> : vector<256x48xf32>
    %30 = tpu.matmul %28, %29, %cst_12 {dimension_numbers = #tpu.dot_dimension_numbers<[1], [0], [0], [1], [0, 0, 1, 1], [], []>} : vector<256x16xbf16>, vector<16x48xbf16>, vector<256x48xf32> -> vector<256x48xf32>
    %c0_13 = arith.constant 0 : index
    %c0_14 = arith.constant 0 : index
    %31 = vector.load %arg7[%c0_13, %c0_14] : memref<1x48xf32, #tpu.memory_space<vmem>>, vector<1x48xf32>
    %32 = vector.broadcast %31 : vector<1x48xf32> to vector<256x48xf32>
    %33 = arith.addf %30, %32 : vector<256x48xf32>
    %34 = arith.truncf %33 : vector<256x48xf32> to vector<256x48xbf16>
    %35 = vector.shape_cast %34 : vector<256x48xbf16> to vector<8x32x48xbf16>
    %36 = vector.extract_strided_slice %35 {offsets = [0, 0, 0], sizes = [8, 32, 8], strides = [1, 1, 1]} : vector<8x32x48xbf16> to vector<8x32x8xbf16>
    %37 = vector.extract_strided_slice %35 {offsets = [0, 0, 16], sizes = [8, 32, 8], strides = [1, 1, 1]} : vector<8x32x48xbf16> to vector<8x32x8xbf16>
    %38 = vector.extract_strided_slice %35 {offsets = [0, 0, 32], sizes = [8, 32, 8], strides = [1, 1, 1]} : vector<8x32x48xbf16> to vector<8x32x8xbf16>
    "tpu.trace_start"() <{level = 10 : i32, message = "wnd,wmd->wnm"}> : () -> ()
    %cst_15 = arith.constant dense<0.000000e+00> : vector<8x32x32xf32>
    %39 = tpu.matmul %36, %37, %cst_15 {dimension_numbers = #tpu.dot_dimension_numbers<[2], [2], [1], [1], [0, 0, 0, 1, 1, 1], [0], [0]>} : vector<8x32x8xbf16>, vector<8x32x8xbf16>, vector<8x32x32xf32> -> vector<8x32x32xf32>
    "tpu.trace_stop"() : () -> ()
    %c0_16 = arith.constant 0 : index
    %c0_17 = arith.constant 0 : index
    %c0_18 = arith.constant 0 : index
    %40 = vector.load %arg5[%c0_16, %c0_17, %c0_18] : memref<2x32x32xbf16, #tpu.memory_space<vmem>>, vector<1x32x32xbf16>
    %41 = vector.shape_cast %40 : vector<1x32x32xbf16> to vector<32x32xbf16>
    %42 = arith.extf %41 : vector<32x32xbf16> to vector<32x32xf32>
    %43 = vector.shape_cast %42 : vector<32x32xf32> to vector<1x32x32xf32>
    %44 = vector.broadcast %43 : vector<1x32x32xf32> to vector<8x32x32xf32>
    %45 = arith.addf %39, %44 : vector<8x32x32xf32>
    %cst_19 = arith.constant dense<0xFF800000> : vector<8x32xf32>
    %46 = vector.multi_reduction <maximumf>, %45, %cst_19 [2] : vector<8x32x32xf32> to vector<8x32xf32>
    %47 = vector.shape_cast %46 : vector<8x32xf32> to vector<8x32x1xf32>
    %48 = vector.broadcast %47 : vector<8x32x1xf32> to vector<8x32x32xf32>
    %49 = arith.subf %45, %48 : vector<8x32x32xf32>
    %50 = math.exp %49 : vector<8x32x32xf32>
    %cst_20 = arith.constant dense<0.000000e+00> : vector<8x32xf32>
    %51 = vector.multi_reduction <add>, %50, %cst_20 [2] : vector<8x32x32xf32> to vector<8x32xf32>
    %52 = vector.shape_cast %51 : vector<8x32xf32> to vector<8x32x1xf32>
    %53 = tpu.reciprocal %52 {approx = true} : vector<8x32x1xf32> -> vector<8x32x1xf32>
    %54 = vector.broadcast %53 : vector<8x32x1xf32> to vector<8x32x32xf32>
    %55 = arith.mulf %50, %54 : vector<8x32x32xf32>
    %56 = arith.truncf %55 : vector<8x32x32xf32> to vector<8x32x32xbf16>
    "tpu.trace_start"() <{level = 10 : i32, message = "wnm,wmd->wnd"}> : () -> ()
    %cst_21 = arith.constant dense<0.000000e+00> : vector<8x32x8xf32>
    %57 = tpu.matmul %56, %38, %cst_21 {dimension_numbers = #tpu.dot_dimension_numbers<[2], [1], [1], [2], [0, 0, 0, 1, 1, 2], [0], [0]>} : vector<8x32x32xbf16>, vector<8x32x8xbf16>, vector<8x32x8xf32> -> vector<8x32x8xf32>
    "tpu.trace_stop"() : () -> ()
    %58 = arith.truncf %57 : vector<8x32x8xf32> to vector<8x32x8xbf16>
    %c0_22 = arith.constant 0 : index
    %c0_23 = arith.constant 0 : index
    %c0_24 = arith.constant 0 : index
    %59 = vector.load %arg11[%c0_22, %c0_23, %c0_24] : memref<8x32x16xbf16, #tpu.memory_space<vmem>>, vector<8x32x8xbf16>
    tpu.vector_store %arg11[%c0_22, %c0_23, %c0_24], %58 {strides = array<i32>} : memref<8x32x16xbf16, #tpu.memory_space<vmem>>, vector<8x32x8xbf16>,
    %60 = vector.extract_strided_slice %35 {offsets = [0, 0, 8], sizes = [8, 32, 8], strides = [1, 1, 1]} : vector<8x32x48xbf16> to vector<8x32x8xbf16>
    %61 = vector.extract_strided_slice %35 {offsets = [0, 0, 24], sizes = [8, 32, 8], strides = [1, 1, 1]} : vector<8x32x48xbf16> to vector<8x32x8xbf16>
    %62 = vector.extract_strided_slice %35 {offsets = [0, 0, 40], sizes = [8, 32, 8], strides = [1, 1, 1]} : vector<8x32x48xbf16> to vector<8x32x8xbf16>
    "tpu.trace_start"() <{level = 10 : i32, message = "wnd,wmd->wnm"}> : () -> ()
    %cst_25 = arith.constant dense<0.000000e+00> : vector<8x32x32xf32>
    %63 = tpu.matmul %60, %61, %cst_25 {dimension_numbers = #tpu.dot_dimension_numbers<[2], [2], [1], [1], [0, 0, 0, 1, 1, 1], [0], [0]>} : vector<8x32x8xbf16>, vector<8x32x8xbf16>, vector<8x32x32xf32> -> vector<8x32x32xf32>
    "tpu.trace_stop"() : () -> ()
    %c1 = arith.constant 1 : index
    %c0_26 = arith.constant 0 : index
    %c0_27 = arith.constant 0 : index
    %64 = vector.load %arg5[%c1, %c0_26, %c0_27] : memref<2x32x32xbf16, #tpu.memory_space<vmem>>, vector<1x32x32xbf16>
    %65 = vector.shape_cast %64 : vector<1x32x32xbf16> to vector<32x32xbf16>
    %66 = arith.extf %65 : vector<32x32xbf16> to vector<32x32xf32>
    %67 = vector.shape_cast %66 : vector<32x32xf32> to vector<1x32x32xf32>
    %68 = vector.broadcast %67 : vector<1x32x32xf32> to vector<8x32x32xf32>
    %69 = arith.addf %63, %68 : vector<8x32x32xf32>
    %cst_28 = arith.constant dense<0xFF800000> : vector<8x32xf32>
    %70 = vector.multi_reduction <maximumf>, %69, %cst_28 [2] : vector<8x32x32xf32> to vector<8x32xf32>
    %71 = vector.shape_cast %70 : vector<8x32xf32> to vector<8x32x1xf32>
    %72 = vector.broadcast %71 : vector<8x32x1xf32> to vector<8x32x32xf32>
    %73 = arith.subf %69, %72 : vector<8x32x32xf32>
    %74 = math.exp %73 : vector<8x32x32xf32>
    %cst_29 = arith.constant dense<0.000000e+00> : vector<8x32xf32>
    %75 = vector.multi_reduction <add>, %74, %cst_29 [2] : vector<8x32x32xf32> to vector<8x32xf32>
    %76 = vector.shape_cast %75 : vector<8x32xf32> to vector<8x32x1xf32>
    %77 = tpu.reciprocal %76 {approx = true} : vector<8x32x1xf32> -> vector<8x32x1xf32>
    %78 = vector.broadcast %77 : vector<8x32x1xf32> to vector<8x32x32xf32>
    %79 = arith.mulf %74, %78 : vector<8x32x32xf32>
    %80 = arith.truncf %79 : vector<8x32x32xf32> to vector<8x32x32xbf16>
    "tpu.trace_start"() <{level = 10 : i32, message = "wnm,wmd->wnd"}> : () -> ()
    %cst_30 = arith.constant dense<0.000000e+00> : vector<8x32x8xf32>
    %81 = tpu.matmul %80, %62, %cst_30 {dimension_numbers = #tpu.dot_dimension_numbers<[2], [1], [1], [2], [0, 0, 0, 1, 1, 2], [0], [0]>} : vector<8x32x32xbf16>, vector<8x32x8xbf16>, vector<8x32x8xf32> -> vector<8x32x8xf32>
    "tpu.trace_stop"() : () -> ()
    %82 = arith.truncf %81 : vector<8x32x8xf32> to vector<8x32x8xbf16>
    %c0_31 = arith.constant 0 : index
    %c0_32 = arith.constant 0 : index
    %c8 = arith.constant 8 : index
    %83 = vector.load %arg11[%c0_31, %c0_32, %c8] : memref<8x32x16xbf16, #tpu.memory_space<vmem>>, vector<8x32x8xbf16>
    tpu.vector_store %arg11[%c0_31, %c0_32, %c8], %82 {strides = array<i32>} : memref<8x32x16xbf16, #tpu.memory_space<vmem>>, vector<8x32x8xbf16>,
    %c0_33 = arith.constant 0 : index
    %c0_34 = arith.constant 0 : index
    %c0_35 = arith.constant 0 : index
    %84 = vector.load %arg11[%c0_33, %c0_34, %c0_35] : memref<8x32x16xbf16, #tpu.memory_space<vmem>>, vector<8x32x16xbf16>
    %85 = vector.shape_cast %84 : vector<8x32x16xbf16> to vector<256x16xbf16>
    %c0_36 = arith.constant 0 : index
    %c0_37 = arith.constant 0 : index
    %86 = vector.load %arg8[%c0_36, %c0_37] : memref<16x16xbf16, #tpu.memory_space<vmem>>, vector<16x16xbf16>
    %cst_38 = arith.constant dense<0.000000e+00> : vector<256x16xf32>
    %87 = tpu.matmul %85, %86, %cst_38 {dimension_numbers = #tpu.dot_dimension_numbers<[1], [0], [0], [1], [0, 0, 1, 1], [], []>} : vector<256x16xbf16>, vector<16x16xbf16>, vector<256x16xf32> -> vector<256x16xf32>
    %c0_39 = arith.constant 0 : index
    %c0_40 = arith.constant 0 : index
    %88 = vector.load %arg9[%c0_39, %c0_40] : memref<1x16xf32, #tpu.memory_space<vmem>>, vector<1x16xf32>
    %89 = vector.broadcast %88 : vector<1x16xf32> to vector<256x16xf32>
    %90 = arith.addf %87, %89 : vector<256x16xf32>
    %91 = vector.shape_cast %90 : vector<256x16xf32> to vector<8x32x16xf32>
    %c0_41 = arith.constant 0 : index
    %c0_42 = arith.constant 0 : index
    %c0_43 = arith.constant 0 : index
    %92 = vector.load %arg10[%c0_41, %c0_42, %c0_43] : memref<8x32x16xf32, #tpu.memory_space<vmem>>, vector<8x32x16xf32>
    tpu.vector_store %arg10[%c0_41, %c0_42, %c0_43], %91 {strides = array<i32>} : memref<8x32x16xf32, #tpu.memory_space<vmem>>, vector<8x32x16xf32>,
    return
  }
  func.func @transform_0(%arg0: i32, %arg1: i32) -> (i32, i32) {
    %c0_i32 = arith.constant 0 : i32
    %c0_i32_0 = arith.constant 0 : i32
    %c0_i32_1 = arith.constant 0 : i32
    return %c0_i32, %c0_i32_0 : i32, i32
  }
  func.func @transform_1(%arg0: i32, %arg1: i32) -> (i32, i32) {
    %c0_i32 = arith.constant 0 : i32
    %c0_i32_0 = arith.constant 0 : i32
    %c0_i32_1 = arith.constant 0 : i32
    return %c0_i32, %c0_i32_0 : i32, i32
  }
  func.func @transform_2(%arg0: i32, %arg1: i32) -> (i32, i32, i32) {
    %c1_i32 = arith.constant 1 : i32
    %0 = arith.muli %arg1, %c1_i32 : i32
    %1 = arith.addi %0, %arg0 : i32
    %c0_i32 = arith.constant 0 : i32
    %c0_i32_0 = arith.constant 0 : i32
    %c0_i32_1 = arith.constant 0 : i32
    return %1, %c0_i32, %c0_i32_0 : i32, i32, i32
  }
  func.func @transform_3(%arg0: i32, %arg1: i32) -> (i32, i32, i32) {
    %c0_i32 = arith.constant 0 : i32
    %c0_i32_0 = arith.constant 0 : i32
    %c0_i32_1 = arith.constant 0 : i32
    %c0_i32_2 = arith.constant 0 : i32
    return %c0_i32, %c0_i32_0, %c0_i32_1 : i32, i32, i32
  }
  func.func @transform_4(%arg0: i32, %arg1: i32) -> (i32, i32) {
    %c0_i32 = arith.constant 0 : i32
    %c0_i32_0 = arith.constant 0 : i32
    %c0_i32_1 = arith.constant 0 : i32
    return %c0_i32, %c0_i32_0 : i32, i32
  }
  func.func @transform_5(%arg0: i32, %arg1: i32) -> (i32, i32) {
    %c0_i32 = arith.constant 0 : i32
    %c0_i32_0 = arith.constant 0 : i32
    %c0_i32_1 = arith.constant 0 : i32
    return %c0_i32, %c0_i32_0 : i32, i32
  }
  func.func @transform_6(%arg0: i32, %arg1: i32) -> (i32, i32) {
    %c0_i32 = arith.constant 0 : i32
    %c0_i32_0 = arith.constant 0 : i32
    %c0_i32_1 = arith.constant 0 : i32
    return %c0_i32, %c0_i32_0 : i32, i32
  }
  func.func @transform_7(%arg0: i32, %arg1: i32) -> (i32, i32) {
    %c0_i32 = arith.constant 0 : i32
    %c0_i32_0 = arith.constant 0 : i32
    %c0_i32_1 = arith.constant 0 : i32
    return %c0_i32, %c0_i32_0 : i32, i32
  }
  func.func @transform_8(%arg0: i32, %arg1: i32) -> (i32, i32, i32) {
    %c1_i32 = arith.constant 1 : i32
    %0 = arith.muli %arg1, %c1_i32 : i32
    %1 = arith.addi %0, %arg0 : i32
    %c0_i32 = arith.constant 0 : i32
    %c0_i32_0 = arith.constant 0 : i32
    %c0_i32_1 = arith.constant 0 : i32
    return %1, %c0_i32, %c0_i32_0 : i32, i32, i32
  }
}

</mosaic_0001>

<llo_original>
// kernel: tpu_custom_call.1
$region0: #{tpu_custom_call.1}
  #allocation0 [shape = 'u32[]', space=smem, size = 0x4, offset = 0x4, fixed_abs, tag = 'smem constant byte address 0x4 - core index']
  #allocation1 [shape = 'u32[144,128]{1,0:T(1,128)}', space=vmem, size = 0x12000, scoped, tag = 'internal scratch']
  %s0 = inlined_call_operand.hbm [shape: f32[8,128], index: 0, kind: input, shape index: {}]
  %s1 = inlined_call_operand.hbm [shape: f32[8,128], index: 1, kind: output, shape index: {}]
  %s2 = sld [smem:[#allocation0]]
  $region18: #{tpu_custom_call.1} parent=0
    _
  %s4 = ssub.s32 1, %s2
  %s5 = scalar_select 0, %s4, %s2
  $region1: #{tpu_custom_call.1} parent=0
    #allocation2 [shape = 'u8[4096]{0}', space=vmem, size = 0x1000, scoped, tag = 'input window, operand 0, single buffered']
    #allocation3 [shape = 's32[1]{0}', space=sflag, size = 0x4, scoped, tag = 'scoped memory for tpu_custom_call.1']
    #allocation4 [shape = 's32[1]{0}', space=sflag, size = 0x4, scoped, tag = 'scoped memory for tpu_custom_call.1']
    #allocation5 [shape = 'u8[4096]{0}', space=vmem, size = 0x1000, scoped, tag = 'output window, operand 0, single buffered']
    %6 = vsyncpa [#allocation3], 0
    %7 = vsyncpa [#allocation4], 0
    // Predicated region
    $region2: #{tpu_custom_call.1} parent=1 // pred_check
      _
    $region3: #{tpu_custom_call.1} parent=1 // pred_check_branch
      %9 = sbr.rel (0) target = $region5
    $region4: #{tpu_custom_call.1} parent=1 // pred_region
      %s11 = ssub.s32 128, 128
      %12 = vsyncadd [#allocation3], %s11
      %s14 = sshll.u32 [#allocation2], 4
      %s15 = int_to_ptr.vmem [resolvable:$true] %s14
      %17 = dma.hbm_to_vmem [thread:$0]  %s0, 128, %s15, [#allocation3]
    $region5: #{tpu_custom_call.1} parent=1 // pred_fallthru
      _
    // Predicated region
    $region6: #{tpu_custom_call.1} parent=1 // pred_check
      _
    $region7: #{tpu_custom_call.1} parent=1 // pred_check_branch
      %19 = sbr.rel (0) target = $region9
    $region8: #{tpu_custom_call.1} parent=1 // pred_region
      %20 = dma.done [#allocation3], 128
    $region9: #{tpu_custom_call.1} parent=1 // pred_fallthru
      _
    %v21 = vld [vmem:[#allocation2] sm:$0xff]
    %v22 = vadd.f32 %v21, 1.0
    %23 = vst [vmem:[#allocation5] sm:$0xff] %v22
    // Predicated region
    $region10: #{tpu_custom_call.1} parent=1 // pred_check
      _
    $region11: #{tpu_custom_call.1} parent=1 // pred_check_branch
      %25 = sbr.rel (0) target = $region13
    $region12: #{tpu_custom_call.1} parent=1 // pred_region
      %s27 = ssub.s32 128, 128
      %28 = vsyncadd [#allocation4], %s27
      %s30 = sshll.u32 [#allocation5], 4
      %s31 = int_to_ptr.vmem [resolvable:$true] %s30
      %33 = dma.vmem_to_hbm [thread:$0]  %s31, 128, %s1, [#allocation4]
    $region13: #{tpu_custom_call.1} parent=1 // pred_fallthru
      _
    // Predicated region
    $region14: #{tpu_custom_call.1} parent=1 // pred_check
      _
    $region15: #{tpu_custom_call.1} parent=1 // pred_check_branch
      %35 = sbr.rel (0) target = $region17
    $region16: #{tpu_custom_call.1} parent=1 // pred_region
      %36 = dma.done [#allocation4], 128
    $region17: #{tpu_custom_call.1} parent=1 // pred_fallthru
      _
    %37 = vsyncpa [#allocation3], 1
    %38 = vsyncpa [#allocation4], 1

// kernel: tpu_custom_call.1
$region0: #{tpu_custom_call.1}
  #allocation0 [shape = 'u32[]', space=smem, size = 0x4, offset = 0x4, fixed_abs, tag = 'smem constant byte address 0x4 - core index']
  #allocation1 [shape = 'u32[144,128]{1,0:T(1,128)}', space=vmem, size = 0x12000, scoped, tag = 'internal scratch']
  #allocation2 [shape = 'bf16[8,32,16]{2,1,0:T(8,128)(2,1)}', space=vmem, size = 0x10000, scoped, tag = 'scratch operand']
  %s0 = inlined_call_operand.vmem [shape: f32[1,16], index: 0, kind: input, shape index: {}]
  %s1 = inlined_call_operand.vmem [shape: f32[1,16], index: 1, kind: input, shape index: {}]
  %s2 = inlined_call_operand.vmem [shape: f32[16,32,16], index: 2, kind: input, shape index: {}]
  %s3 = inlined_call_operand.vmem [shape: bf16[2,32,32], index: 3, kind: input, shape index: {}]
  %s4 = inlined_call_operand.vmem [shape: bf16[16,48], index: 4, kind: input, shape index: {}]
  %s5 = inlined_call_operand.vmem [shape: f32[1,48], index: 5, kind: input, shape index: {}]
  %s6 = inlined_call_operand.vmem [shape: bf16[16,16], index: 6, kind: input, shape index: {}]
  %s7 = inlined_call_operand.vmem [shape: f32[1,16], index: 7, kind: input, shape index: {}]
  %s8 = inlined_call_operand.vmem [shape: f32[16,32,16], index: 8, kind: output, shape index: {}]
  %s9 = sld [smem:[#allocation0]]
  $region65: #{tpu_custom_call.1} parent=0
    _
  %s11 = ssub.s32 1, %s9
  %s12 = scalar_select 0, %s11, %s9
  loop: start=0, step=1, limit=4
  $region2: #{tpu_custom_call.1} parent=0 // loop_pre_header
    _
  $region3: #{tpu_custom_call.1} parent=0 // loop_header
    %s14 = sphi 0, %s18
    %p15 = scmp.ge.s32.totalorder %s14, 4
    %s21 = sphi 0, %s33
    %s22 = sphi 0, %s29
    %s23 = sphi 0, %s21
    %s24 = sphi 0, %s22
    %s25 = sphi 0, %s23
    %s26 = sphi 0, %s24
    %s34 = sphi 0, %s34
    %s36 = sphi 0, %s34
    %s37 = sphi 0, %s36
    %s51 = sphi 0, %s37
    %s55 = sphi 0, %s55
    %s57 = sphi 0, %s55
    %s58 = sphi 0, %s57
    %s72 = sphi 0, %s58
    %s80 = sphi 0, %s82
    %s83 = sphi 0, %s80
    %s84 = sphi 0, %s83
    %s100 = sphi 0, %s84
    %s104 = sphi 0, %s104
    %s106 = sphi 0, %s104
    %s107 = sphi 0, %s106
    %s121 = sphi 0, %s107
    %s125 = sphi 0, %s125
    %s127 = sphi 0, %s125
    %s128 = sphi 0, %s127
    %s142 = sphi 0, %s128
    %s146 = sphi 0, %s146
    %s148 = sphi 0, %s146
    %s149 = sphi 0, %s148
    %s163 = sphi 0, %s149
    %s167 = sphi 0, %s167
    %s169 = sphi 0, %s167
    %s170 = sphi 0, %s169
    %s184 = sphi 0, %s170
    %s188 = sphi 0, %s188
    %s190 = sphi 0, %s188
    %s191 = sphi 0, %s190
    %s205 = sphi 0, %s191
    %s213 = sphi 0, %s215
    %s216 = sphi 0, %s213
    %s217 = sphi 0, %s216
    %s233 = sphi 0, %s217
  $region4: #{tpu_custom_call.1} parent=0 // loop_header_branch
    %17 = sbr.rel (%p15) target = $region8
  $region5: #{tpu_custom_call.1} parent=0 // loop_body
    %s19 = ssub.s32 %s14, 1
    %s20 = ssub.s32 %s14, 2
    %s27 = sadd.s32 1, %s22
    %p28 = scmp.ge.s32.totalorder %s27, 2
    %s29 = scalar_select %p28, 0, %s27
    %s30 = sadd.s32 1, %s21
    %s31 = scalar_select %p28, %s30, %s21
    %p32 = scmp.ge.s32.totalorder %s31, 1
    %s33 = scalar_select %p32, 0, %s31
    %s35 = sadd.s32 %s34, 1
    %p38 = scmp.eq.s32.totalorder %s14, 1
    %p39 = scmp.ne.s32.totalorder %s34, %s36
    %p40 = scmp.eq.s32.totalorder %s14, 0
    %p41 = por %p39, %p40
    %p42 = scmp.ne.s32.totalorder %s34, %s36
    %p43 = scmp.eq.s32.totalorder %s19, 1
    %p44 = por %p42, %p43
    %p45 = scmp.ne.s32.totalorder %s36, %s37
    %p46 = scmp.eq.s32.totalorder %s19, 0
    %p47 = por %p45, %p46
    %p48 = scmp.ne.s32.totalorder %s36, %s37
    %p49 = scmp.eq.s32.totalorder %s20, 1
    %p50 = por %p48, %p49
    %p52 = scmp.ne.s32.totalorder %s37, %s51
    %p53 = scmp.eq.s32.totalorder %s20, 0
    %p54 = por %p52, %p53
    %s56 = sadd.s32 %s55, 1
    %p59 = scmp.eq.s32.totalorder %s14, 1
    %p60 = scmp.ne.s32.totalorder %s55, %s57
    %p61 = scmp.eq.s32.totalorder %s14, 0
    %p62 = por %p60, %p61
    %p63 = scmp.ne.s32.totalorder %s55, %s57
    %p64 = scmp.eq.s32.totalorder %s19, 1
    %p65 = por %p63, %p64
    %p66 = scmp.ne.s32.totalorder %s57, %s58
    %p67 = scmp.eq.s32.totalorder %s19, 0
    %p68 = por %p66, %p67
    %p69 = scmp.ne.s32.totalorder %s57, %s58
    %p70 = scmp.eq.s32.totalorder %s20, 1
    %p71 = por %p69, %p70
    %p73 = scmp.ne.s32.totalorder %s58, %s72
    %p74 = scmp.eq.s32.totalorder %s20, 0
    %p75 = por %p73, %p74
    %s76 = sadd.s32 %s22, %s21
    %s77 = sadd.s32 %s29, %s33
    %s78 = ssub.s32 %s76, %s77
    %p79 = scmp.eq.s32.totalorder %s78, 0
    %s81 = sadd.s32 %s80, 1
    %s82 = scalar_select %p79, %s80, %s81
    %p85 = pneg %p79
    %p86 = scmp.eq.s32.totalorder %s14, 1
    %p87 = por %p85, %p86
    %p88 = scmp.ne.s32.totalorder %s80, %s83
    %p89 = scmp.eq.s32.totalorder %s14, 0
    %p90 = por %p88, %p89
    %p91 = scmp.ne.s32.totalorder %s80, %s83
    %p92 = scmp.eq.s32.totalorder %s19, 1
    %p93 = por %p91, %p92
    %p94 = scmp.ne.s32.totalorder %s83, %s84
    %p95 = scmp.eq.s32.totalorder %s19, 0
    %p96 = por %p94, %p95
    %p97 = scmp.ne.s32.totalorder %s83, %s84
    %p98 = scmp.eq.s32.totalorder %s20, 1
    %p99 = por %p97, %p98
    %p101 = scmp.ne.s32.totalorder %s84, %s100
    %p102 = scmp.eq.s32.totalorder %s20, 0
    %p103 = por %p101, %p102
    %s105 = sadd.s32 %s104, 1
    %p108 = scmp.eq.s32.totalorder %s14, 1
    %p109 = scmp.ne.s32.totalorder %s104, %s106
    %p110 = scmp.eq.s32.totalorder %s14, 0
    %p111 = por %p109, %p110
    %p112 = scmp.ne.s32.totalorder %s104, %s106
    %p113 = scmp.eq.s32.totalorder %s19, 1
    %p114 = por %p112, %p113
    %p115 = scmp.ne.s32.totalorder %s106, %s107
    %p116 = scmp.eq.s32.totalorder %s19, 0
    %p117 = por %p115, %p116
    %p118 = scmp.ne.s32.totalorder %s106, %s107
    %p119 = scmp.eq.s32.totalorder %s20, 1
    %p120 = por %p118, %p119
    %p122 = scmp.ne.s32.totalorder %s107, %s121
    %p123 = scmp.eq.s32.totalorder %s20, 0
    %p124 = por %p122, %p123
    %s126 = sadd.s32 %s125, 1
    %p129 = scmp.eq.s32.totalorder %s14, 1
    %p130 = scmp.ne.s32.totalorder %s125, %s127
    %p131 = scmp.eq.s32.totalorder %s14, 0
    %p132 = por %p130, %p131
    %p133 = scmp.ne.s32.totalorder %s125, %s127
    %p134 = scmp.eq.s32.totalorder %s19, 1
    %p135 = por %p133, %p134
    %p136 = scmp.ne.s32.totalorder %s127, %s128
    %p137 = scmp.eq.s32.totalorder %s19, 0
    %p138 = por %p136, %p137
    %p139 = scmp.ne.s32.totalorder %s127, %s128
    %p140 = scmp.eq.s32.totalorder %s20, 1
    %p141 = por %p139, %p140
    %p143 = scmp.ne.s32.totalorder %s128, %s142
    %p144 = scmp.eq.s32.totalorder %s20, 0
    %p145 = por %p143, %p144
    %s147 = sadd.s32 %s146, 1
    %p150 = scmp.eq.s32.totalorder %s14, 1
    %p151 = scmp.ne.s32.totalorder %s146, %s148
    %p152 = scmp.eq.s32.totalorder %s14, 0
    %p153 = por %p151, %p152
    %p154 = scmp.ne.s32.totalorder %s146, %s148
    %p155 = scmp.eq.s32.totalorder %s19, 1
    %p156 = por %p154, %p155
    %p157 = scmp.ne.s32.totalorder %s148, %s149
    %p158 = scmp.eq.s32.totalorder %s19, 0
    %p159 = por %p157, %p158
    %p160 = scmp.ne.s32.totalorder %s148, %s149
    %p161 = scmp.eq.s32.totalorder %s20, 1
    %p162 = por %p160, %p161
    %p164 = scmp.ne.s32.totalorder %s149, %s163
    %p165 = scmp.eq.s32.totalorder %s20, 0
    %p166 = por %p164, %p165
    %s168 = sadd.s32 %s167, 1
    %p171 = scmp.eq.s32.totalorder %s14, 1
    %p172 = scmp.ne.s32.totalorder %s167, %s169
    %p173 = scmp.eq.s32.totalorder %s14, 0
    %p174 = por %p172, %p173
    %p175 = scmp.ne.s32.totalorder %s167, %s169
    %p176 = scmp.eq.s32.totalorder %s19, 1
    %p177 = por %p175, %p176
    %p178 = scmp.ne.s32.totalorder %s169, %s170
    %p179 = scmp.eq.s32.totalorder %s19, 0
    %p180 = por %p178, %p179
    %p181 = scmp.ne.s32.totalorder %s169, %s170
    %p182 = scmp.eq.s32.totalorder %s20, 1
    %p183 = por %p181, %p182
    %p185 = scmp.ne.s32.totalorder %s170, %s184
    %p186 = scmp.eq.s32.totalorder %s20, 0
    %p187 = por %p185, %p186
    %s189 = sadd.s32 %s188, 1
    %p192 = scmp.eq.s32.totalorder %s14, 1
    %p193 = scmp.ne.s32.totalorder %s188, %s190
    %p194 = scmp.eq.s32.totalorder %s14, 0
    %p195 = por %p193, %p194
    %p196 = scmp.ne.s32.totalorder %s188, %s190
    %p197 = scmp.eq.s32.totalorder %s19, 1
    %p198 = por %p196, %p197
    %p199 = scmp.ne.s32.totalorder %s190, %s191
    %p200 = scmp.eq.s32.totalorder %s19, 0
    %p201 = por %p199, %p200
    %p202 = scmp.ne.s32.totalorder %s190, %s191
    %p203 = scmp.eq.s32.totalorder %s20, 1
    %p204 = por %p202, %p203
    %p206 = scmp.ne.s32.totalorder %s191, %s205
    %p207 = scmp.eq.s32.totalorder %s20, 0
    %p208 = por %p206, %p207
    %s209 = sadd.s32 %s22, %s21
    %s210 = sadd.s32 %s29, %s33
    %s211 = ssub.s32 %s209, %s210
    %p212 = scmp.eq.s32.totalorder %s211, 0
    %s214 = sadd.s32 %s213, 1
    %s215 = scalar_select %p212, %s213, %s214
    %p218 = pneg %p212
    %p219 = scmp.eq.s32.totalorder %s14, 1
    %p220 = por %p218, %p219
    %p221 = scmp.ne.s32.totalorder %s213, %s216
    %p222 = scmp.eq.s32.totalorder %s14, 0
    %p223 = por %p221, %p222
    %p224 = scmp.ne.s32.totalorder %s213, %s216
    %p225 = scmp.eq.s32.totalorder %s19, 1
    %p226 = por %p224, %p225
    %p227 = scmp.ne.s32.totalorder %s216, %s217
    %p228 = scmp.eq.s32.totalorder %s19, 0
    %p229 = por %p227, %p228
    %p230 = scmp.ne.s32.totalorder %s216, %s217
    %p231 = scmp.eq.s32.totalorder %s20, 1
    %p232 = por %p230, %p231
    %p234 = scmp.ne.s32.totalorder %s217, %s233
    %p235 = scmp.eq.s32.totalorder %s20, 0
    %p236 = por %p234, %p235
    %p237 = scmp.le.s32.totalorder 1, %s14
    %p238 = scmp.lt.s32.totalorder %s14, 3
    %p239 = pnand %p237, %p238
    %p240 = pneg %p239
    // Predicated region
    $region9: #{tpu_custom_call.1} parent=5 // pred_check
      _
    $region10: #{tpu_custom_call.1} parent=5 // pred_check_branch
      %242 = sbr.rel (%p239) target = $region12
    $region11: #{tpu_custom_call.1} parent=5 // pred_region
      %s243 = ssub.s32 %s14, 1
      // Predicated region
      $region13: #{tpu_custom_call.1} parent=11 // pred_check
        %p244 = pneg %p47
      $region14: #{tpu_custom_call.1} parent=11 // pred_check_branch
        %246 = sbr.rel (%p244) target = $region16
      $region15: #{tpu_custom_call.1} parent=11 // pred_region
        _
      $region16: #{tpu_custom_call.1} parent=11 // pred_fallthru
        _
      // Predicated region
      $region17: #{tpu_custom_call.1} parent=11 // pred_check
        %p247 = pneg %p68
      $region18: #{tpu_custom_call.1} parent=11 // pred_check_branch
        %249 = sbr.rel (%p247) target = $region20
      $region19: #{tpu_custom_call.1} parent=11 // pred_region
        _
      $region20: #{tpu_custom_call.1} parent=11 // pred_fallthru
        _
      // Predicated region
      $region21: #{tpu_custom_call.1} parent=11 // pred_check
        %p250 = pneg %p117
      $region22: #{tpu_custom_call.1} parent=11 // pred_check_branch
        %252 = sbr.rel (%p250) target = $region24
      $region23: #{tpu_custom_call.1} parent=11 // pred_region
        _
      $region24: #{tpu_custom_call.1} parent=11 // pred_fallthru
        _
      // Predicated region
      $region25: #{tpu_custom_call.1} parent=11 // pred_check
        %p253 = pneg %p138
      $region26: #{tpu_custom_call.1} parent=11 // pred_check_branch
        %255 = sbr.rel (%p253) target = $region28
      $region27: #{tpu_custom_call.1} parent=11 // pred_region
        _
      $region28: #{tpu_custom_call.1} parent=11 // pred_fallthru
        _
      // Predicated region
      $region29: #{tpu_custom_call.1} parent=11 // pred_check
        %p256 = pneg %p159
      $region30: #{tpu_custom_call.1} parent=11 // pred_check_branch
        %258 = sbr.rel (%p256) target = $region32
      $region31: #{tpu_custom_call.1} parent=11 // pred_region
        _
      $region32: #{tpu_custom_call.1} parent=11 // pred_fallthru
        _
      // Predicated region
      $region33: #{tpu_custom_call.1} parent=11 // pred_check
        %p259 = pneg %p180
      $region34: #{tpu_custom_call.1} parent=11 // pred_check_branch
        %261 = sbr.rel (%p259) target = $region36
      $region35: #{tpu_custom_call.1} parent=11 // pred_region
        _
      $region36: #{tpu_custom_call.1} parent=11 // pred_fallthru
        _
      // Predicated region
      $region37: #{tpu_custom_call.1} parent=11 // pred_check
        %p262 = pneg %p201
      $region38: #{tpu_custom_call.1} parent=11 // pred_check_branch
        %264 = sbr.rel (%p262) target = $region40
      $region39: #{tpu_custom_call.1} parent=11 // pred_region
        _
      $region40: #{tpu_custom_call.1} parent=11 // pred_fallthru
        _
    $region12: #{tpu_custom_call.1} parent=5 // pred_fallthru
      _
    %p265 = scmp.lt.s32.totalorder %s14, 2
    // Predicated region
    $region41: #{tpu_custom_call.1} parent=5 // pred_check
      %p266 = pneg %p265
    $region42: #{tpu_custom_call.1} parent=5 // pred_check_branch
      %268 = sbr.rel (%p266) target = $region44
    $region43: #{tpu_custom_call.1} parent=5 // pred_region
      // Predicated region
      $region45: #{tpu_custom_call.1} parent=43 // pred_check
        %p269 = pneg %p90
      $region46: #{tpu_custom_call.1} parent=43 // pred_check_branch
        %271 = sbr.rel (%p269) target = $region48
      $region47: #{tpu_custom_call.1} parent=43 // pred_region
        %s272 = sadd.s32 %s22, %s21
        %s273 = smul.u32 8, %s272
        %p274 = scmp.lt.s32.totalorder %s273, 15
        %s275 = scalar_select %p274, %s273, 15
        %s276 = smul.addr %s275, 4
        %s277 = smul.addr %s276, 8
        %s278 = scalar_lea.vmem %s2, %s277
        %s279 = sadd.s32 %s22, %s21
        %s280 = smul.u32 8, %s279
      $region48: #{tpu_custom_call.1} parent=43 // pred_fallthru
        _
    $region44: #{tpu_custom_call.1} parent=5 // pred_fallthru
      _
    %p281 = scmp.le.s32.totalorder 1, %s14
    %p282 = scmp.lt.s32.totalorder %s14, 3
    %p283 = pnand %p281, %p282
    %p284 = pneg %p283
    // Predicated region
    $region49: #{tpu_custom_call.1} parent=5 // pred_check
      _
    $region50: #{tpu_custom_call.1} parent=5 // pred_check_branch
      %286 = sbr.rel (%p283) target = $region52
    $region51: #{tpu_custom_call.1} parent=5 // pred_region
      %s287 = ssub.s32 %s14, 1
      %p288 = pneg %p47
      %p289 = pneg %p44
      %p290 = pneg %p68
      %p291 = pneg %p65
      %s292 = sadd.s32 %s24, %s23
      %s293 = smul.u32 8, %s292
      %p294 = scmp.lt.s32.totalorder %s293, 15
      %s295 = scalar_select %p294, %s293, 15
      %s296 = smul.addr %s295, 4
      %s297 = smul.addr %s296, 8
      %s298 = scalar_lea.vmem %s2, %s297
      %p299 = pneg %p96
      %p300 = pneg %p93
      %p301 = pneg %p117
      %p302 = pneg %p114
      %p303 = pneg %p138
      %p304 = pneg %p135
      %p305 = pneg %p159
      %p306 = pneg %p156
      %p307 = pneg %p180
      %p308 = pneg %p177
      %p309 = pneg %p201
      %p310 = pneg %p198
      %p311 = pneg %p229
      %p312 = pneg %p226
      %s313 = sadd.s32 %s24, %s23
      %s314 = smul.u32 8, %s313
      %p315 = scmp.lt.s32.totalorder %s314, 15
      %s316 = scalar_select %p315, %s314, 15
      %s317 = smul.addr %s316, 4
      %s318 = smul.addr %s317, 8
      %s319 = scalar_lea.vmem %s8, %s318
      %s320 = sadd.s32 %s24, %s23
      %s321 = smul.u32 8, %s320
      %p322 = scmp.lt.s32.totalorder %s321, 15
      %s323 = scalar_select %p322, %s321, 15
      %s324 = smul.addr %s323, 4
      %s325 = smul.addr %s324, 8
      %s326 = scalar_lea.vmem %s2, %s325
      %s327 = sadd.s32 %s24, %s23
      %s328 = smul.u32 8, %s327
      %s329 = sadd.s32 %s24, %s23
      %s330 = smul.u32 8, %s329
      %p331 = scmp.lt.s32.totalorder %s330, 15
      %s332 = scalar_select %p331, %s330, 15
      %s333 = smul.addr %s332, 4
      %s334 = smul.addr %s333, 8
      %s335 = scalar_lea.vmem %s8, %s334
      %s336 = sadd.s32 %s24, %s23
      %s337 = smul.u32 8, %s336
      %v339 = vld [vmem:[%s326] sm:$0xff]
      %v340 = vld [vmem:[%s326 + $0x8] sm:$0xff]
      %v341 = vld [vmem:[%s326 + $0x10] sm:$0xff]
      %v342 = vld [vmem:[%s326 + $0x18] sm:$0xff]
      %v343 = vld [vmem:[%s326 + $0x20] sm:$0xff]
      %v344 = vld [vmem:[%s326 + $0x28] sm:$0xff]
      %v345 = vld [vmem:[%s326 + $0x30] sm:$0xff]
      %v346 = vld [vmem:[%s326 + $0x38] sm:$0xff]
      %v347 = vld [vmem:[%s326 + $0x40] sm:$0xff]
      %v348 = vld [vmem:[%s326 + $0x48] sm:$0xff]
      %v349 = vld [vmem:[%s326 + $0x50] sm:$0xff]
      %v350 = vld [vmem:[%s326 + $0x58] sm:$0xff]
      %v351 = vld [vmem:[%s326 + $0x60] sm:$0xff]
      %v352 = vld [vmem:[%s326 + $0x68] sm:$0xff]
      %v353 = vld [vmem:[%s326 + $0x70] sm:$0xff]
      %v354 = vld [vmem:[%s326 + $0x78] sm:$0xff]
      %v355 = vld [vmem:[%s326 + $0x80] sm:$0xff]
      %v356 = vld [vmem:[%s326 + $0x88] sm:$0xff]
      %v357 = vld [vmem:[%s326 + $0x90] sm:$0xff]
      %v358 = vld [vmem:[%s326 + $0x98] sm:$0xff]
      %v359 = vld [vmem:[%s326 + $0xa0] sm:$0xff]
      %v360 = vld [vmem:[%s326 + $0xa8] sm:$0xff]
      %v361 = vld [vmem:[%s326 + $0xb0] sm:$0xff]
      %v362 = vld [vmem:[%s326 + $0xb8] sm:$0xff]
      %v363 = vld [vmem:[%s326 + $0xc0] sm:$0xff]
      %v364 = vld [vmem:[%s326 + $0xc8] sm:$0xff]
      %v365 = vld [vmem:[%s326 + $0xd0] sm:$0xff]
      %v366 = vld [vmem:[%s326 + $0xd8] sm:$0xff]
      %v367 = vld [vmem:[%s326 + $0xe0] sm:$0xff]
      %v368 = vld [vmem:[%s326 + $0xe8] sm:$0xff]
      %v369 = vld [vmem:[%s326 + $0xf0] sm:$0xff]
      %v370 = vld [vmem:[%s326 + $0xf8] sm:$0xff]
      %vm371 = vcmask 130048
      %v372 = vsel %vm371, %v339, 0.0
      %373 = vadd.xlane.f32.xlu0 %v372
      %v374 = vpop.xlane.xlu0 %373
      %v375 = vsel %vm371, %v340, 0.0
      %376 = vadd.xlane.f32.xlu0 %v375
      %v377 = vpop.xlane.xlu0 %376
      %v378 = vsel %vm371, %v341, 0.0
      %379 = vadd.xlane.f32.xlu0 %v378
      %v380 = vpop.xlane.xlu0 %379
      %v381 = vsel %vm371, %v342, 0.0
      %382 = vadd.xlane.f32.xlu0 %v381
      %v383 = vpop.xlane.xlu0 %382
      %v384 = vsel %vm371, %v343, 0.0
      %385 = vadd.xlane.f32.xlu0 %v384
      %v386 = vpop.xlane.xlu0 %385
      %v387 = vsel %vm371, %v344, 0.0
      %388 = vadd.xlane.f32.xlu0 %v387
      %v389 = vpop.xlane.xlu0 %388
      %v390 = vsel %vm371, %v345, 0.0
      %391 = vadd.xlane.f32.xlu0 %v390
      %v392 = vpop.xlane.xlu0 %391
      %v393 = vsel %vm371, %v346, 0.0
      %394 = vadd.xlane.f32.xlu0 %v393
      %v395 = vpop.xlane.xlu0 %394
      %v396 = vsel %vm371, %v347, 0.0
      %397 = vadd.xlane.f32.xlu0 %v396
      %v398 = vpop.xlane.xlu0 %397
      %v399 = vsel %vm371, %v348, 0.0
      %400 = vadd.xlane.f32.xlu0 %v399
      %v401 = vpop.xlane.xlu0 %400
      %v402 = vsel %vm371, %v349, 0.0
      %403 = vadd.xlane.f32.xlu0 %v402
      %v404 = vpop.xlane.xlu0 %403
      %v405 = vsel %vm371, %v350, 0.0
      %406 = vadd.xlane.f32.xlu0 %v405
      %v407 = vpop.xlane.xlu0 %406
      %v408 = vsel %vm371, %v351, 0.0
      %409 = vadd.xlane.f32.xlu0 %v408
      %v410 = vpop.xlane.xlu0 %409
      %v411 = vsel %vm371, %v352, 0.0
      %412 = vadd.xlane.f32.xlu0 %v411
      %v413 = vpop.xlane.xlu0 %412
      %v414 = vsel %vm371, %v353, 0.0
      %415 = vadd.xlane.f32.xlu0 %v414
      %v416 = vpop.xlane.xlu0 %415
      %v417 = vsel %vm371, %v354, 0.0
      %418 = vadd.xlane.f32.xlu0 %v417
      %v419 = vpop.xlane.xlu0 %418
      %v420 = vsel %vm371, %v355, 0.0
      %421 = vadd.xlane.f32.xlu0 %v420
      %v422 = vpop.xlane.xlu0 %421
      %v423 = vsel %vm371, %v356, 0.0
      %424 = vadd.xlane.f32.xlu0 %v423
      %v425 = vpop.xlane.xlu0 %424
      %v426 = vsel %vm371, %v357, 0.0
      %427 = vadd.xlane.f32.xlu0 %v426
      %v428 = vpop.xlane.xlu0 %427
      %v429 = vsel %vm371, %v358, 0.0
      %430 = vadd.xlane.f32.xlu0 %v429
      %v431 = vpop.xlane.xlu0 %430
      %v432 = vsel %vm371, %v359, 0.0
      %433 = vadd.xlane.f32.xlu0 %v432
      %v434 = vpop.xlane.xlu0 %433
      %v435 = vsel %vm371, %v360, 0.0
      %436 = vadd.xlane.f32.xlu0 %v435
      %v437 = vpop.xlane.xlu0 %436
      %v438 = vsel %vm371, %v361, 0.0
      %439 = vadd.xlane.f32.xlu0 %v438
      %v440 = vpop.xlane.xlu0 %439
      %v441 = vsel %vm371, %v362, 0.0
      %442 = vadd.xlane.f32.xlu0 %v441
      %v443 = vpop.xlane.xlu0 %442
      %v444 = vsel %vm371, %v363, 0.0
      %445 = vadd.xlane.f32.xlu0 %v444
      %v446 = vpop.xlane.xlu0 %445
      %v447 = vsel %vm371, %v364, 0.0
      %448 = vadd.xlane.f32.xlu0 %v447
      %v449 = vpop.xlane.xlu0 %448
      %v450 = vsel %vm371, %v365, 0.0
      %451 = vadd.xlane.f32.xlu0 %v450
      %v452 = vpop.xlane.xlu0 %451
      %v453 = vsel %vm371, %v366, 0.0
      %454 = vadd.xlane.f32.xlu0 %v453
      %v455 = vpop.xlane.xlu0 %454
      %v456 = vsel %vm371, %v367, 0.0
      %457 = vadd.xlane.f32.xlu0 %v456
      %v458 = vpop.xlane.xlu0 %457
      %v459 = vsel %vm371, %v368, 0.0
      %460 = vadd.xlane.f32.xlu0 %v459
      %v461 = vpop.xlane.xlu0 %460
      %v462 = vsel %vm371, %v369, 0.0
      %463 = vadd.xlane.f32.xlu0 %v462
      %v464 = vpop.xlane.xlu0 %463
      %v465 = vsel %vm371, %v370, 0.0
      %466 = vadd.xlane.f32.xlu0 %v465
      %v467 = vpop.xlane.xlu0 %466
      %v468 = vrcp.pop 16.0
      %v469 = vmul.f32 %v374, %v468
      %v470 = vmul.f32 %v377, %v468
      %v471 = vmul.f32 %v380, %v468
      %v472 = vmul.f32 %v383, %v468
      %v473 = vmul.f32 %v386, %v468
      %v474 = vmul.f32 %v389, %v468
      %v475 = vmul.f32 %v392, %v468
      %v476 = vmul.f32 %v395, %v468
      %v477 = vmul.f32 %v398, %v468
      %v478 = vmul.f32 %v401, %v468
      %v479 = vmul.f32 %v404, %v468
      %v480 = vmul.f32 %v407, %v468
      %v481 = vmul.f32 %v410, %v468
      %v482 = vmul.f32 %v413, %v468
      %v483 = vmul.f32 %v416, %v468
      %v484 = vmul.f32 %v419, %v468
      %v485 = vmul.f32 %v422, %v468
      %v486 = vmul.f32 %v425, %v468
      %v487 = vmul.f32 %v428, %v468
      %v488 = vmul.f32 %v431, %v468
      %v489 = vmul.f32 %v434, %v468
      %v490 = vmul.f32 %v437, %v468
      %v491 = vmul.f32 %v440, %v468
      %v492 = vmul.f32 %v443, %v468
      %v493 = vmul.f32 %v446, %v468
      %v494 = vmul.f32 %v449, %v468
      %v495 = vmul.f32 %v452, %v468
      %v496 = vmul.f32 %v455, %v468
      %v497 = vmul.f32 %v458, %v468
      %v498 = vmul.f32 %v461, %v468
      %v499 = vmul.f32 %v464, %v468
      %v500 = vmul.f32 %v467, %v468
      %v501 = vsub.f32 %v339, %v469
      %v502 = vsub.f32 %v340, %v470
      %v503 = vsub.f32 %v341, %v471
      %v504 = vsub.f32 %v342, %v472
      %v505 = vsub.f32 %v343, %v473
      %v506 = vsub.f32 %v344, %v474
      %v507 = vsub.f32 %v345, %v475
      %v508 = vsub.f32 %v346, %v476
      %v509 = vsub.f32 %v347, %v477
      %v510 = vsub.f32 %v348, %v478
      %v511 = vsub.f32 %v349, %v479
      %v512 = vsub.f32 %v350, %v480
      %v513 = vsub.f32 %v351, %v481
      %v514 = vsub.f32 %v352, %v482
      %v515 = vsub.f32 %v353, %v483
      %v516 = vsub.f32 %v354, %v484
      %v517 = vsub.f32 %v355, %v485
      %v518 = vsub.f32 %v356, %v486
      %v519 = vsub.f32 %v357, %v487
      %v520 = vsub.f32 %v358, %v488
      %v521 = vsub.f32 %v359, %v489
      %v522 = vsub.f32 %v360, %v490
      %v523 = vsub.f32 %v361, %v491
      %v524 = vsub.f32 %v362, %v492
      %v525 = vsub.f32 %v363, %v493
      %v526 = vsub.f32 %v364, %v494
      %v527 = vsub.f32 %v365, %v495
      %v528 = vsub.f32 %v366, %v496
      %v529 = vsub.f32 %v367, %v497
      %v530 = vsub.f32 %v368, %v498
      %v531 = vsub.f32 %v369, %v499
      %v532 = vsub.f32 %v370, %v500
      %v533 = vmul.f32 %v501, %v501
      %v534 = vmul.f32 %v502, %v502
      %v535 = vmul.f32 %v503, %v503
      %v536 = vmul.f32 %v504, %v504
      %v537 = vmul.f32 %v505, %v505
      %v538 = vmul.f32 %v506, %v506
      %v539 = vmul.f32 %v507, %v507
      %v540 = vmul.f32 %v508, %v508
      %v541 = vmul.f32 %v509, %v509
      %v542 = vmul.f32 %v510, %v510
      %v543 = vmul.f32 %v511, %v511
      %v544 = vmul.f32 %v512, %v512
      %v545 = vmul.f32 %v513, %v513
      %v546 = vmul.f32 %v514, %v514
      %v547 = vmul.f32 %v515, %v515
      %v548 = vmul.f32 %v516, %v516
      %v549 = vmul.f32 %v517, %v517
      %v550 = vmul.f32 %v518, %v518
      %v551 = vmul.f32 %v519, %v519
      %v552 = vmul.f32 %v520, %v520
      %v553 = vmul.f32 %v521, %v521
      %v554 = vmul.f32 %v522, %v522
      %v555 = vmul.f32 %v523, %v523
      %v556 = vmul.f32 %v524, %v524
      %v557 = vmul.f32 %v525, %v525
      %v558 = vmul.f32 %v526, %v526
      %v559 = vmul.f32 %v527, %v527
      %v560 = vmul.f32 %v528, %v528
      %v561 = vmul.f32 %v529, %v529
      %v562 = vmul.f32 %v530, %v530
      %v563 = vmul.f32 %v531, %v531
      %v564 = vmul.f32 %v532, %v532
      %v565 = vsel %vm371, %v533, 0.0
      %566 = vadd.xlane.f32.xlu0 %v565
      %v567 = vpop.xlane.xlu0 %566
      %v568 = vsel %vm371, %v534, 0.0
      %569 = vadd.xlane.f32.xlu0 %v568
      %v570 = vpop.xlane.xlu0 %569
      %v571 = vsel %vm371, %v535, 0.0
      %572 = vadd.xlane.f32.xlu0 %v571
      %v573 = vpop.xlane.xlu0 %572
      %v574 = vsel %vm371, %v536, 0.0
      %575 = vadd.xlane.f32.xlu0 %v574
      %v576 = vpop.xlane.xlu0 %575
      %v577 = vsel %vm371, %v537, 0.0
      %578 = vadd.xlane.f32.xlu0 %v577
      %v579 = vpop.xlane.xlu0 %578
      %v580 = vsel %vm371, %v538, 0.0
      %581 = vadd.xlane.f32.xlu0 %v580
      %v582 = vpop.xlane.xlu0 %581
      %v583 = vsel %vm371, %v539, 0.0
      %584 = vadd.xlane.f32.xlu0 %v583
      %v585 = vpop.xlane.xlu0 %584
      %v586 = vsel %vm371, %v540, 0.0
      %587 = vadd.xlane.f32.xlu0 %v586
      %v588 = vpop.xlane.xlu0 %587
      %v589 = vsel %vm371, %v541, 0.0
      %590 = vadd.xlane.f32.xlu0 %v589
      %v591 = vpop.xlane.xlu0 %590
      %v592 = vsel %vm371, %v542, 0.0
      %593 = vadd.xlane.f32.xlu0 %v592
      %v594 = vpop.xlane.xlu0 %593
      %v595 = vsel %vm371, %v543, 0.0
      %596 = vadd.xlane.f32.xlu0 %v595
      %v597 = vpop.xlane.xlu0 %596
      %v598 = vsel %vm371, %v544, 0.0
      %599 = vadd.xlane.f32.xlu0 %v598
      %v600 = vpop.xlane.xlu0 %599
      %v601 = vsel %vm371, %v545, 0.0
      %602 = vadd.xlane.f32.xlu0 %v601
      %v603 = vpop.xlane.xlu0 %602
      %v604 = vsel %vm371, %v546, 0.0
      %605 = vadd.xlane.f32.xlu0 %v604
      %v606 = vpop.xlane.xlu0 %605
      %v607 = vsel %vm371, %v547, 0.0
      %608 = vadd.xlane.f32.xlu0 %v607
      %v609 = vpop.xlane.xlu0 %608
      %v610 = vsel %vm371, %v548, 0.0
      %611 = vadd.xlane.f32.xlu0 %v610
      %v612 = vpop.xlane.xlu0 %611
      %v613 = vsel %vm371, %v549, 0.0
      %614 = vadd.xlane.f32.xlu0 %v613
      %v615 = vpop.xlane.xlu0 %614
      %v616 = vsel %vm371, %v550, 0.0
      %617 = vadd.xlane.f32.xlu0 %v616
      %v618 = vpop.xlane.xlu0 %617
      %v619 = vsel %vm371, %v551, 0.0
      %620 = vadd.xlane.f32.xlu0 %v619
      %v621 = vpop.xlane.xlu0 %620
      %v622 = vsel %vm371, %v552, 0.0
      %623 = vadd.xlane.f32.xlu0 %v622
      %v624 = vpop.xlane.xlu0 %623
      %v625 = vsel %vm371, %v553, 0.0
      %626 = vadd.xlane.f32.xlu0 %v625
      %v627 = vpop.xlane.xlu0 %626
      %v628 = vsel %vm371, %v554, 0.0
      %629 = vadd.xlane.f32.xlu0 %v628
      %v630 = vpop.xlane.xlu0 %629
      %v631 = vsel %vm371, %v555, 0.0
      %632 = vadd.xlane.f32.xlu0 %v631
      %v633 = vpop.xlane.xlu0 %632
      %v634 = vsel %vm371, %v556, 0.0
      %635 = vadd.xlane.f32.xlu0 %v634
      %v636 = vpop.xlane.xlu0 %635
      %v637 = vsel %vm371, %v557, 0.0
      %638 = vadd.xlane.f32.xlu0 %v637
      %v639 = vpop.xlane.xlu0 %638
      %v640 = vsel %vm371, %v558, 0.0
      %641 = vadd.xlane.f32.xlu0 %v640
      %v642 = vpop.xlane.xlu0 %641
      %v643 = vsel %vm371, %v559, 0.0
      %644 = vadd.xlane.f32.xlu0 %v643
      %v645 = vpop.xlane.xlu0 %644
      %v646 = vsel %vm371, %v560, 0.0
      %647 = vadd.xlane.f32.xlu0 %v646
      %v648 = vpop.xlane.xlu0 %647
      %v649 = vsel %vm371, %v561, 0.0
      %650 = vadd.xlane.f32.xlu0 %v649
      %v651 = vpop.xlane.xlu0 %650
      %v652 = vsel %vm371, %v562, 0.0
      %653 = vadd.xlane.f32.xlu0 %v652
      %v654 = vpop.xlane.xlu0 %653
      %v655 = vsel %vm371, %v563, 0.0
      %656 = vadd.xlane.f32.xlu0 %v655
      %v657 = vpop.xlane.xlu0 %656
      %v658 = vsel %vm371, %v564, 0.0
      %659 = vadd.xlane.f32.xlu0 %v658
      %v660 = vpop.xlane.xlu0 %659
      %v661 = vmul.f32 %v567, %v468
      %v662 = vmul.f32 %v570, %v468
      %v663 = vmul.f32 %v573, %v468
      %v664 = vmul.f32 %v576, %v468
      %v665 = vmul.f32 %v579, %v468
      %v666 = vmul.f32 %v582, %v468
      %v667 = vmul.f32 %v585, %v468
      %v668 = vmul.f32 %v588, %v468
      %v669 = vmul.f32 %v591, %v468
      %v670 = vmul.f32 %v594, %v468
      %v671 = vmul.f32 %v597, %v468
      %v672 = vmul.f32 %v600, %v468
      %v673 = vmul.f32 %v603, %v468
      %v674 = vmul.f32 %v606, %v468
      %v675 = vmul.f32 %v609, %v468
      %v676 = vmul.f32 %v612, %v468
      %v677 = vmul.f32 %v615, %v468
      %v678 = vmul.f32 %v618, %v468
      %v679 = vmul.f32 %v621, %v468
      %v680 = vmul.f32 %v624, %v468
      %v681 = vmul.f32 %v627, %v468
      %v682 = vmul.f32 %v630, %v468
      %v683 = vmul.f32 %v633, %v468
      %v684 = vmul.f32 %v636, %v468
      %v685 = vmul.f32 %v639, %v468
      %v686 = vmul.f32 %v642, %v468
      %v687 = vmul.f32 %v645, %v468
      %v688 = vmul.f32 %v648, %v468
      %v689 = vmul.f32 %v651, %v468
      %v690 = vmul.f32 %v654, %v468
      %v691 = vmul.f32 %v657, %v468
      %v692 = vmul.f32 %v660, %v468
      %v693 = vadd.f32 %v661, 1e-05
      %v694 = vadd.f32 %v662, 1e-05
      %v695 = vadd.f32 %v663, 1e-05
      %v696 = vadd.f32 %v664, 1e-05
      %v697 = vadd.f32 %v665, 1e-05
      %v698 = vadd.f32 %v666, 1e-05
      %v699 = vadd.f32 %v667, 1e-05
      %v700 = vadd.f32 %v668, 1e-05
      %v701 = vadd.f32 %v669, 1e-05
      %v702 = vadd.f32 %v670, 1e-05
      %v703 = vadd.f32 %v671, 1e-05
      %v704 = vadd.f32 %v672, 1e-05
      %v705 = vadd.f32 %v673, 1e-05
      %v706 = vadd.f32 %v674, 1e-05
      %v707 = vadd.f32 %v675, 1e-05
      %v708 = vadd.f32 %v676, 1e-05
      %v709 = vadd.f32 %v677, 1e-05
      %v710 = vadd.f32 %v678, 1e-05
      %v711 = vadd.f32 %v679, 1e-05
      %v712 = vadd.f32 %v680, 1e-05
      %v713 = vadd.f32 %v681, 1e-05
      %v714 = vadd.f32 %v682, 1e-05
      %v715 = vadd.f32 %v683, 1e-05
      %v716 = vadd.f32 %v684, 1e-05
      %v717 = vadd.f32 %v685, 1e-05
      %v718 = vadd.f32 %v686, 1e-05
      %v719 = vadd.f32 %v687, 1e-05
      %v720 = vadd.f32 %v688, 1e-05
      %v721 = vadd.f32 %v689, 1e-05
      %v722 = vadd.f32 %v690, 1e-05
      %v723 = vadd.f32 %v691, 1e-05
      %v724 = vadd.f32 %v692, 1e-05
      %v725 = vrsqrt.pop %v693
      %v726 = vrsqrt.pop %v694
      %v727 = vrsqrt.pop %v695
      %v728 = vrsqrt.pop %v696
      %v729 = vrsqrt.pop %v697
      %v730 = vrsqrt.pop %v698
      %v731 = vrsqrt.pop %v699
      %v732 = vrsqrt.pop %v700
      %v733 = vrsqrt.pop %v701
      %v734 = vrsqrt.pop %v702
      %v735 = vrsqrt.pop %v703
      %v736 = vrsqrt.pop %v704
      %v737 = vrsqrt.pop %v705
      %v738 = vrsqrt.pop %v706
      %v739 = vrsqrt.pop %v707
      %v740 = vrsqrt.pop %v708
      %v741 = vrsqrt.pop %v709
      %v742 = vrsqrt.pop %v710
      %v743 = vrsqrt.pop %v711
      %v744 = vrsqrt.pop %v712
      %v745 = vrsqrt.pop %v713
      %v746 = vrsqrt.pop %v714
      %v747 = vrsqrt.pop %v715
      %v748 = vrsqrt.pop %v716
      %v749 = vrsqrt.pop %v717
      %v750 = vrsqrt.pop %v718
      %v751 = vrsqrt.pop %v719
      %v752 = vrsqrt.pop %v720
      %v753 = vrsqrt.pop %v721
      %v754 = vrsqrt.pop %v722
      %v755 = vrsqrt.pop %v723
      %v756 = vrsqrt.pop %v724
      %v757 = vmul.f32 %v501, %v725
      %v758 = vmul.f32 %v502, %v726
      %v759 = vmul.f32 %v503, %v727
      %v760 = vmul.f32 %v504, %v728
      %v761 = vmul.f32 %v505, %v729
      %v762 = vmul.f32 %v506, %v730
      %v763 = vmul.f32 %v507, %v731
      %v764 = vmul.f32 %v508, %v732
      %v765 = vmul.f32 %v509, %v733
      %v766 = vmul.f32 %v510, %v734
      %v767 = vmul.f32 %v511, %v735
      %v768 = vmul.f32 %v512, %v736
      %v769 = vmul.f32 %v513, %v737
      %v770 = vmul.f32 %v514, %v738
      %v771 = vmul.f32 %v515, %v739
      %v772 = vmul.f32 %v516, %v740
      %v773 = vmul.f32 %v517, %v741
      %v774 = vmul.f32 %v518, %v742
      %v775 = vmul.f32 %v519, %v743
      %v776 = vmul.f32 %v520, %v744
      %v777 = vmul.f32 %v521, %v745
      %v778 = vmul.f32 %v522, %v746
      %v779 = vmul.f32 %v523, %v747
      %v780 = vmul.f32 %v524, %v748
      %v781 = vmul.f32 %v525, %v749
      %v782 = vmul.f32 %v526, %v750
      %v783 = vmul.f32 %v527, %v751
      %v784 = vmul.f32 %v528, %v752
      %v785 = vmul.f32 %v529, %v753
      %v786 = vmul.f32 %v530, %v754
      %v787 = vmul.f32 %v531, %v755
      %v788 = vmul.f32 %v532, %v756
      %v789 = vld [vmem:[%s0] sm:$0x1]
      %v791 = vlaneseq
      %v792 = vshrl.u32 %v791, 7
      %v793 = vsub.s32 0, %v792
      %v794 = vrot.slane %v789, %v793
      %v796 = vmul.f32 %v757, %v794
      %v797 = vmul.f32 %v758, %v794
      %v798 = vmul.f32 %v759, %v794
      %v799 = vmul.f32 %v760, %v794
      %v800 = vmul.f32 %v761, %v794
      %v801 = vmul.f32 %v762, %v794
      %v802 = vmul.f32 %v763, %v794
      %v803 = vmul.f32 %v764, %v794
      %v804 = vmul.f32 %v765, %v794
      %v805 = vmul.f32 %v766, %v794
      %v806 = vmul.f32 %v767, %v794
      %v807 = vmul.f32 %v768, %v794
      %v808 = vmul.f32 %v769, %v794
      %v809 = vmul.f32 %v770, %v794
      %v810 = vmul.f32 %v771, %v794
      %v811 = vmul.f32 %v772, %v794
      %v812 = vmul.f32 %v773, %v794
      %v813 = vmul.f32 %v774, %v794
      %v814 = vmul.f32 %v775, %v794
      %v815 = vmul.f32 %v776, %v794
      %v816 = vmul.f32 %v777, %v794
      %v817 = vmul.f32 %v778, %v794
      %v818 = vmul.f32 %v779, %v794
      %v819 = vmul.f32 %v780, %v794
      %v820 = vmul.f32 %v781, %v794
      %v821 = vmul.f32 %v782, %v794
      %v822 = vmul.f32 %v783, %v794
      %v823 = vmul.f32 %v784, %v794
      %v824 = vmul.f32 %v785, %v794
      %v825 = vmul.f32 %v786, %v794
      %v826 = vmul.f32 %v787, %v794
      %v827 = vmul.f32 %v788, %v794
      %v828 = vld [vmem:[%s1] sm:$0x1]
      %v830 = vlaneseq
      %v831 = vshrl.u32 %v830, 7
      %v832 = vsub.s32 0, %v831
      %v833 = vrot.slane %v828, %v832
      %v835 = vadd.f32 %v796, %v833
      %v836 = vadd.f32 %v797, %v833
      %v837 = vadd.f32 %v798, %v833
      %v838 = vadd.f32 %v799, %v833
      %v839 = vadd.f32 %v800, %v833
      %v840 = vadd.f32 %v801, %v833
      %v841 = vadd.f32 %v802, %v833
      %v842 = vadd.f32 %v803, %v833
      %v843 = vadd.f32 %v804, %v833
      %v844 = vadd.f32 %v805, %v833
      %v845 = vadd.f32 %v806, %v833
      %v846 = vadd.f32 %v807, %v833
      %v847 = vadd.f32 %v808, %v833
      %v848 = vadd.f32 %v809, %v833
      %v849 = vadd.f32 %v810, %v833
      %v850 = vadd.f32 %v811, %v833
      %v851 = vadd.f32 %v812, %v833
      %v852 = vadd.f32 %v813, %v833
      %v853 = vadd.f32 %v814, %v833
      %v854 = vadd.f32 %v815, %v833
      %v855 = vadd.f32 %v816, %v833
      %v856 = vadd.f32 %v817, %v833
      %v857 = vadd.f32 %v818, %v833
      %v858 = vadd.f32 %v819, %v833
      %v859 = vadd.f32 %v820, %v833
      %v860 = vadd.f32 %v821, %v833
      %v861 = vadd.f32 %v822, %v833
      %v862 = vadd.f32 %v823, %v833
      %v863 = vadd.f32 %v824, %v833
      %v864 = vadd.f32 %v825, %v833
      %v865 = vadd.f32 %v826, %v833
      %v866 = vadd.f32 %v827, %v833
      %v867 = vpack.c.bf16 %v836, %v835
      %v868 = vpack.c.bf16 %v838, %v837
      %v869 = vpack.c.bf16 %v840, %v839
      %v870 = vpack.c.bf16 %v842, %v841
      %v871 = vpack.c.bf16 %v844, %v843
      %v872 = vpack.c.bf16 %v846, %v845
      %v873 = vpack.c.bf16 %v848, %v847
      %v874 = vpack.c.bf16 %v850, %v849
      %v875 = vpack.c.bf16 %v852, %v851
      %v876 = vpack.c.bf16 %v854, %v853
      %v877 = vpack.c.bf16 %v856, %v855
      %v878 = vpack.c.bf16 %v858, %v857
      %v879 = vpack.c.bf16 %v860, %v859
      %v880 = vpack.c.bf16 %v862, %v861
      %v881 = vpack.c.bf16 %v864, %v863
      %v882 = vpack.c.bf16 %v866, %v865
      %v883 = vld [vmem:[%s4] sm:$0xf]
      %v884 = vld [vmem:[%s4 + $0x4] sm:$0xf]
      %v885 = vld [vmem:[%s5] sm:$0x1]
      %v887 = vlaneseq
      %v888 = vshrl.u32 %v887, 7
      %v889 = vsub.s32 0, %v888
      %v890 = vrot.slane %v885, %v889
      %v894 = vunpack.c.l.b16 %v883
      %v895 = vunpack.c.l.b16 %v884
      %v896 = vpack.c.b16 %v895, %v894
      %v899 = vsel %vm371, %v867, 0
      %v902 = vsel %vm371, %v868, 0
      %v905 = vsel %vm371, %v869, 0
      %v908 = vsel %vm371, %v870, 0
      %v911 = vsel %vm371, %v871, 0
      %v914 = vsel %vm371, %v872, 0
      %v917 = vsel %vm371, %v873, 0
      %v920 = vsel %vm371, %v874, 0
      %v923 = vsel %vm371, %v875, 0
      %v926 = vsel %vm371, %v876, 0
      %v929 = vsel %vm371, %v877, 0
      %v932 = vsel %vm371, %v878, 0
      %v935 = vsel %vm371, %v879, 0
      %v938 = vsel %vm371, %v880, 0
      %v941 = vsel %vm371, %v881, 0
      %v944 = vsel %vm371, %v882, 0
      %946 = vmatprep.subr.bf16.mxu0 0
      %947 = vmatpush1.bf16.msra.mxu0 0
      %948 = vmatprep.subr.bf16.mxu0 0
      %949 = vmatpush1.bf16.msra.mxu0 0
      %950 = vmatprep.subr.bf16.mxu0 0
      %951 = vmatpush1.bf16.msra.mxu0 0
      %952 = vmatprep.subr.bf16.mxu0 0
      %953 = vmatpush1.bf16.msra.mxu0 0
      %954 = vmatprep.subr.bf16.mxu0 0
      %955 = vmatpush1.bf16.msra.mxu0 0
      %956 = vmatprep.subr.bf16.mxu0 0
      %957 = vmatpush1.bf16.msra.mxu0 0
      %958 = vmatprep.subr.bf16.mxu0 0
      %959 = vmatpush1.bf16.msra.mxu0 0
      %960 = vmatprep.subr.bf16.mxu0 0
      %961 = vmatpush1.bf16.msra.mxu0 %v896
      %962 = vmatprep.subr.bf16.mxu0 0
      %963 = vmatpush2.bf16.msra.mxu0 0
      %964 = vmatprep.subr.bf16.mxu0 0
      %965 = vmatpush2.bf16.msra.mxu0 0
      %966 = vmatprep.subr.bf16.mxu0 0
      %967 = vmatpush2.bf16.msra.mxu0 0
      %968 = vmatprep.subr.bf16.mxu0 0
      %969 = vmatpush2.bf16.msra.mxu0 0
      %970 = vmatprep.subr.bf16.mxu0 0
      %971 = vmatpush2.bf16.msra.mxu0 0
      %972 = vmatprep.subr.bf16.mxu0 0
      %973 = vmatpush2.bf16.msra.mxu0 0
      %974 = vmatprep.subr.bf16.mxu0 0
      %975 = vmatpush2.bf16.msra.mxu0 0
      %976 = vmatprep.subr.bf16.mxu0 0
      %977 = vmatpush2.bf16.msra.mxu0 0
      %978 = vmatprep.mubr.bf16.mxu0 0
      %979 = vmatmul.mubr.bf16.gmra.mxu0 %v899
      %v980 = vpop.f32.mrf.mxu0
      %v981 = vadd.f32 %v890, %v980
      %v982 = vpop.f32.mrf.mxu0
      %v983 = vpop.f32.mrf.mxu0
      %v984 = vadd.f32 %v890, %v983
      %v985 = vpop.f32.mrf.mxu0
      %986 = vmatprep.mubr.bf16.mxu0 0
      %987 = vmatmul.mubr.bf16.gmra.mxu0 %v902
      %v988 = vpop.f32.mrf.mxu0
      %v989 = vadd.f32 %v890, %v988
      %v990 = vpop.f32.mrf.mxu0
      %v991 = vpop.f32.mrf.mxu0
      %v992 = vadd.f32 %v890, %v991
      %v993 = vpop.f32.mrf.mxu0
      %994 = vmatprep.mubr.bf16.mxu0 0
      %995 = vmatmul.mubr.bf16.gmra.mxu0 %v905
      %v996 = vpop.f32.mrf.mxu0
      %v997 = vadd.f32 %v890, %v996
      %v998 = vpop.f32.mrf.mxu0
      %v999 = vpop.f32.mrf.mxu0
      %v1000 = vadd.f32 %v890, %v999
      %v1001 = vpop.f32.mrf.mxu0
      %1002 = vmatprep.mubr.bf16.mxu0 0
      %1003 = vmatmul.mubr.bf16.gmra.mxu0 %v908
      %v1004 = vpop.f32.mrf.mxu0
      %v1005 = vadd.f32 %v890, %v1004
      %v1006 = vpop.f32.mrf.mxu0
      %v1007 = vpop.f32.mrf.mxu0
      %v1008 = vadd.f32 %v890, %v1007
      %v1009 = vpop.f32.mrf.mxu0
      %1010 = vmatprep.mubr.bf16.mxu0 0
      %1011 = vmatmul.mubr.bf16.gmra.mxu0 %v911
      %v1012 = vpop.f32.mrf.mxu0
      %v1013 = vadd.f32 %v890, %v1012
      %v1014 = vpop.f32.mrf.mxu0
      %v1015 = vpop.f32.mrf.mxu0
      %v1016 = vadd.f32 %v890, %v1015
      %v1017 = vpop.f32.mrf.mxu0
      %1018 = vmatprep.mubr.bf16.mxu0 0
      %1019 = vmatmul.mubr.bf16.gmra.mxu0 %v914
      %v1020 = vpop.f32.mrf.mxu0
      %v1021 = vadd.f32 %v890, %v1020
      %v1022 = vpop.f32.mrf.mxu0
      %v1023 = vpop.f32.mrf.mxu0
      %v1024 = vadd.f32 %v890, %v1023
      %v1025 = vpop.f32.mrf.mxu0
      %1026 = vmatprep.mubr.bf16.mxu0 0
      %1027 = vmatmul.mubr.bf16.gmra.mxu0 %v917
      %v1028 = vpop.f32.mrf.mxu0
      %v1029 = vadd.f32 %v890, %v1028
      %v1030 = vpop.f32.mrf.mxu0
      %v1031 = vpop.f32.mrf.mxu0
      %v1032 = vadd.f32 %v890, %v1031
      %v1033 = vpop.f32.mrf.mxu0
      %1034 = vmatprep.mubr.bf16.mxu0 0
      %1035 = vmatmul.mubr.bf16.gmra.mxu0 %v920
      %v1036 = vpop.f32.mrf.mxu0
      %v1037 = vadd.f32 %v890, %v1036
      %v1038 = vpop.f32.mrf.mxu0
      %v1039 = vpop.f32.mrf.mxu0
      %v1040 = vadd.f32 %v890, %v1039
      %v1041 = vpop.f32.mrf.mxu0
      %1042 = vmatprep.mubr.bf16.mxu0 0
      %1043 = vmatmul.mubr.bf16.gmra.mxu0 %v923
      %v1044 = vpop.f32.mrf.mxu0
      %v1045 = vadd.f32 %v890, %v1044
      %v1046 = vpop.f32.mrf.mxu0
      %v1047 = vpop.f32.mrf.mxu0
      %v1048 = vadd.f32 %v890, %v1047
      %v1049 = vpop.f32.mrf.mxu0
      %1050 = vmatprep.mubr.bf16.mxu0 0
      %1051 = vmatmul.mubr.bf16.gmra.mxu0 %v926
      %v1052 = vpop.f32.mrf.mxu0
      %v1053 = vadd.f32 %v890, %v1052
      %v1054 = vpop.f32.mrf.mxu0
      %v1055 = vpop.f32.mrf.mxu0
      %v1056 = vadd.f32 %v890, %v1055
      %v1057 = vpop.f32.mrf.mxu0
      %1058 = vmatprep.mubr.bf16.mxu0 0
      %1059 = vmatmul.mubr.bf16.gmra.mxu0 %v929
      %v1060 = vpop.f32.mrf.mxu0
      %v1061 = vadd.f32 %v890, %v1060
      %v1062 = vpop.f32.mrf.mxu0
      %v1063 = vpop.f32.mrf.mxu0
      %v1064 = vadd.f32 %v890, %v1063
      %v1065 = vpop.f32.mrf.mxu0
      %1066 = vmatprep.mubr.bf16.mxu0 0
      %1067 = vmatmul.mubr.bf16.gmra.mxu0 %v932
      %v1068 = vpop.f32.mrf.mxu0
      %v1069 = vadd.f32 %v890, %v1068
      %v1070 = vpop.f32.mrf.mxu0
      %v1071 = vpop.f32.mrf.mxu0
      %v1072 = vadd.f32 %v890, %v1071
      %v1073 = vpop.f32.mrf.mxu0
      %1074 = vmatprep.mubr.bf16.mxu0 0
      %1075 = vmatmul.mubr.bf16.gmra.mxu0 %v935
      %v1076 = vpop.f32.mrf.mxu0
      %v1077 = vadd.f32 %v890, %v1076
      %v1078 = vpop.f32.mrf.mxu0
      %v1079 = vpop.f32.mrf.mxu0
      %v1080 = vadd.f32 %v890, %v1079
      %v1081 = vpop.f32.mrf.mxu0
      %1082 = vmatprep.mubr.bf16.mxu0 0
      %1083 = vmatmul.mubr.bf16.gmra.mxu0 %v938
      %v1084 = vpop.f32.mrf.mxu0
      %v1085 = vadd.f32 %v890, %v1084
      %v1086 = vpop.f32.mrf.mxu0
      %v1087 = vpop.f32.mrf.mxu0
      %v1088 = vadd.f32 %v890, %v1087
      %v1089 = vpop.f32.mrf.mxu0
      %1090 = vmatprep.mubr.bf16.mxu0 0
      %1091 = vmatmul.mubr.bf16.gmra.mxu0 %v941
      %v1092 = vpop.f32.mrf.mxu0
      %v1093 = vadd.f32 %v890, %v1092
      %v1094 = vpop.f32.mrf.mxu0
      %v1095 = vpop.f32.mrf.mxu0
      %v1096 = vadd.f32 %v890, %v1095
      %v1097 = vpop.f32.mrf.mxu0
      %1098 = vmatprep.mubr.bf16.mxu0 0
      %1099 = vmatmul.mubr.bf16.gmra.mxu0 %v944
      %v1100 = vpop.f32.mrf.mxu0
      %v1101 = vadd.f32 %v890, %v1100
      %v1102 = vpop.f32.mrf.mxu0
      %v1103 = vpop.f32.mrf.mxu0
      %v1104 = vadd.f32 %v890, %v1103
      %v1105 = vpop.f32.mrf.mxu0
      %1106 = vdwg.mxu0
      %v1107 = vpack.c.bf16 %v984, %v981
      %v1108 = vpack.c.bf16 %v992, %v989
      %v1109 = vpack.c.bf16 %v1000, %v997
      %v1110 = vpack.c.bf16 %v1008, %v1005
      %v1111 = vpack.c.bf16 %v1016, %v1013
      %v1112 = vpack.c.bf16 %v1024, %v1021
      %v1113 = vpack.c.bf16 %v1032, %v1029
      %v1114 = vpack.c.bf16 %v1040, %v1037
      %v1115 = vpack.c.bf16 %v1048, %v1045
      %v1116 = vpack.c.bf16 %v1056, %v1053
      %v1117 = vpack.c.bf16 %v1064, %v1061
      %v1118 = vpack.c.bf16 %v1072, %v1069
      %v1119 = vpack.c.bf16 %v1080, %v1077
      %v1120 = vpack.c.bf16 %v1088, %v1085
      %v1121 = vpack.c.bf16 %v1096, %v1093
      %v1122 = vpack.c.bf16 %v1104, %v1101
      %v1123 = vld [vmem:[%s3] sm:$0xf]
      %v1124 = vld [vmem:[%s3 + $0x4] sm:$0xf]
      %v1125 = vld [vmem:[%s3 + $0x8] sm:$0xf]
      %v1126 = vld [vmem:[%s3 + $0xc] sm:$0xf]
      %v1127 = vunpack.c.l.bf16 %v1123
      %v1128 = vunpack.c.l.bf16 %v1124
      %v1129 = vunpack.c.l.bf16 %v1125
      %v1130 = vunpack.c.l.bf16 %v1126
      %1133 = vrot.lane.b32.xlu0 %v1107, 112
      %v1134 = vpop.permute.xlu0 %1133
      %1135 = vrot.lane.b32.xlu0 %v1108, 112
      %v1136 = vpop.permute.xlu0 %1135
      %vm1137 = vcmask 64512
      %v1139 = vsel %vm1137, %v1107, 0
      %v1142 = vsel %vm1137, %v1108, 0
      %v1145 = vsel %vm1137, %v1134, 0
      %v1148 = vsel %vm1137, %v1136, 0
      %1150 = vmatprep.subr.bf16.mxu0 0
      %1151 = vmatpush1.bf16.xpose.msra.mxu0 0
      %1152 = vmatprep.subr.bf16.mxu0 0
      %1153 = vmatpush1.bf16.xpose.msra.mxu0 0
      %1154 = vmatprep.subr.bf16.mxu0 0
      %1155 = vmatpush1.bf16.xpose.msra.mxu0 0
      %1156 = vmatprep.subr.bf16.mxu0 0
      %1157 = vmatpush1.bf16.xpose.msra.mxu0 0
      %1158 = vmatprep.subr.bf16.mxu0 0
      %1159 = vmatpush1.bf16.xpose.msra.mxu0 0
      %1160 = vmatprep.subr.bf16.mxu0 0
      %1161 = vmatpush1.bf16.xpose.msra.mxu0 0
      %1162 = vmatprep.subr.bf16.mxu0 0
      %1163 = vmatpush1.bf16.xpose.msra.mxu0 %v1148
      %1164 = vmatprep.subr.bf16.mxu0 0
      %1165 = vmatpush1.bf16.xpose.msra.mxu0 %v1145
      %1166 = vmatprep.subr.bf16.mxu0 0
      %1167 = vmatpush2.bf16.xpose.msra.mxu0 0
      %1168 = vmatprep.subr.bf16.mxu0 0
      %1169 = vmatpush2.bf16.xpose.msra.mxu0 0
      %1170 = vmatprep.subr.bf16.mxu0 0
      %1171 = vmatpush2.bf16.xpose.msra.mxu0 0
      %1172 = vmatprep.subr.bf16.mxu0 0
      %1173 = vmatpush2.bf16.xpose.msra.mxu0 0
      %1174 = vmatprep.subr.bf16.mxu0 0
      %1175 = vmatpush2.bf16.xpose.msra.mxu0 0
      %1176 = vmatprep.subr.bf16.mxu0 0
      %1177 = vmatpush2.bf16.xpose.msra.mxu0 0
      %1178 = vmatprep.subr.bf16.mxu0 0
      %1179 = vmatpush2.bf16.xpose.msra.mxu0 0
      %1180 = vmatprep.subr.bf16.mxu0 0
      %1181 = vmatpush2.bf16.xpose.msra.mxu0 0
      %1182 = vmatprep.mubr.bf16.mxu0 0
      %1183 = vmatmul.mubr.bf16.gmra.mxu0 %v1139
      %v1184 = vpop.f32.mrf.mxu0
      %v1185 = vadd.f32 %v1127, %v1184
      %v1186 = vpop.f32.mrf.mxu0
      %v1187 = vpop.f32.mrf.mxu0
      %v1188 = vadd.f32 %v1128, %v1187
      %v1189 = vpop.f32.mrf.mxu0
      %1190 = vmatprep.mubr.bf16.mxu0 0
      %1191 = vmatmul.mubr.bf16.gmra.mxu0 %v1142
      %v1192 = vpop.f32.mrf.mxu0
      %v1193 = vadd.f32 %v1129, %v1192
      %v1194 = vpop.f32.mrf.mxu0
      %v1195 = vpop.f32.mrf.mxu0
      %v1196 = vadd.f32 %v1130, %v1195
      %v1197 = vpop.f32.mrf.mxu0
      %1198 = vdwg.mxu0
      %1201 = vrot.lane.b32.xlu0 %v1109, 112
      %v1202 = vpop.permute.xlu0 %1201
      %1203 = vrot.lane.b32.xlu0 %v1110, 112
      %v1204 = vpop.permute.xlu0 %1203
      %v1206 = vsel %vm1137, %v1109, 0
      %v1209 = vsel %vm1137, %v1110, 0
      %v1212 = vsel %vm1137, %v1202, 0
      %v1215 = vsel %vm1137, %v1204, 0
      %1217 = vmatprep.subr.bf16.mxu0 0
      %1218 = vmatpush1.bf16.xpose.msra.mxu0 0
      %1219 = vmatprep.subr.bf16.mxu0 0
      %1220 = vmatpush1.bf16.xpose.msra.mxu0 0
      %1221 = vmatprep.subr.bf16.mxu0 0
      %1222 = vmatpush1.bf16.xpose.msra.mxu0 0
      %1223 = vmatprep.subr.bf16.mxu0 0
      %1224 = vmatpush1.bf16.xpose.msra.mxu0 0
      %1225 = vmatprep.subr.bf16.mxu0 0
      %1226 = vmatpush1.bf16.xpose.msra.mxu0 0
      %1227 = vmatprep.subr.bf16.mxu0 0
      %1228 = vmatpush1.bf16.xpose.msra.mxu0 0
      %1229 = vmatprep.subr.bf16.mxu0 0
      %1230 = vmatpush1.bf16.xpose.msra.mxu0 %v1215
      %1231 = vmatprep.subr.bf16.mxu0 0
      %1232 = vmatpush1.bf16.xpose.msra.mxu0 %v1212
      %1233 = vmatprep.subr.bf16.mxu0 0
      %1234 = vmatpush2.bf16.xpose.msra.mxu0 0
      %1235 = vmatprep.subr.bf16.mxu0 0
      %1236 = vmatpush2.bf16.xpose.msra.mxu0 0
      %1237 = vmatprep.subr.bf16.mxu0 0
      %1238 = vmatpush2.bf16.xpose.msra.mxu0 0
      %1239 = vmatprep.subr.bf16.mxu0 0
      %1240 = vmatpush2.bf16.xpose.msra.mxu0 0
      %1241 = vmatprep.subr.bf16.mxu0 0
      %1242 = vmatpush2.bf16.xpose.msra.mxu0 0
      %1243 = vmatprep.subr.bf16.mxu0 0
      %1244 = vmatpush2.bf16.xpose.msra.mxu0 0
      %1245 = vmatprep.subr.bf16.mxu0 0
      %1246 = vmatpush2.bf16.xpose.msra.mxu0 0
      %1247 = vmatprep.subr.bf16.mxu0 0
      %1248 = vmatpush2.bf16.xpose.msra.mxu0 0
      %1249 = vmatprep.mubr.bf16.mxu0 0
      %1250 = vmatmul.mubr.bf16.gmra.mxu0 %v1206
      %v1251 = vpop.f32.mrf.mxu0
      %v1252 = vadd.f32 %v1127, %v1251
      %v1253 = vpop.f32.mrf.mxu0
      %v1254 = vpop.f32.mrf.mxu0
      %v1255 = vadd.f32 %v1128, %v1254
      %v1256 = vpop.f32.mrf.mxu0
      %1257 = vmatprep.mubr.bf16.mxu0 0
      %1258 = vmatmul.mubr.bf16.gmra.mxu0 %v1209
      %v1259 = vpop.f32.mrf.mxu0
      %v1260 = vadd.f32 %v1129, %v1259
      %v1261 = vpop.f32.mrf.mxu0
      %v1262 = vpop.f32.mrf.mxu0
      %v1263 = vadd.f32 %v1130, %v1262
      %v1264 = vpop.f32.mrf.mxu0
      %1265 = vdwg.mxu0
      %1268 = vrot.lane.b32.xlu0 %v1111, 112
      %v1269 = vpop.permute.xlu0 %1268
      %1270 = vrot.lane.b32.xlu0 %v1112, 112
      %v1271 = vpop.permute.xlu0 %1270
      %v1273 = vsel %vm1137, %v1111, 0
      %v1276 = vsel %vm1137, %v1112, 0
      %v1279 = vsel %vm1137, %v1269, 0
      %v1282 = vsel %vm1137, %v1271, 0
      %1284 = vmatprep.subr.bf16.mxu0 0
      %1285 = vmatpush1.bf16.xpose.msra.mxu0 0
      %1286 = vmatprep.subr.bf16.mxu0 0
      %1287 = vmatpush1.bf16.xpose.msra.mxu0 0
      %1288 = vmatprep.subr.bf16.mxu0 0
      %1289 = vmatpush1.bf16.xpose.msra.mxu0 0
      %1290 = vmatprep.subr.bf16.mxu0 0
      %1291 = vmatpush1.bf16.xpose.msra.mxu0 0
      %1292 = vmatprep.subr.bf16.mxu0 0
      %1293 = vmatpush1.bf16.xpose.msra.mxu0 0
      %1294 = vmatprep.subr.bf16.mxu0 0
      %1295 = vmatpush1.bf16.xpose.msra.mxu0 0
      %1296 = vmatprep.subr.bf16.mxu0 0
      %1297 = vmatpush1.bf16.xpose.msra.mxu0 %v1282
      %1298 = vmatprep.subr.bf16.mxu0 0
      %1299 = vmatpush1.bf16.xpose.msra.mxu0 %v1279
      %1300 = vmatprep.subr.bf16.mxu0 0
      %1301 = vmatpush2.bf16.xpose.msra.mxu0 0
      %1302 = vmatprep.subr.bf16.mxu0 0
      %1303 = vmatpush2.bf16.xpose.msra.mxu0 0
      %1304 = vmatprep.subr.bf16.mxu0 0
      %1305 = vmatpush2.bf16.xpose.msra.mxu0 0
      %1306 = vmatprep.subr.bf16.mxu0 0
      %1307 = vmatpush2.bf16.xpose.msra.mxu0 0
      %1308 = vmatprep.subr.bf16.mxu0 0
      %1309 = vmatpush2.bf16.xpose.msra.mxu0 0
      %1310 = vmatprep.subr.bf16.mxu0 0
      %1311 = vmatpush2.bf16.xpose.msra.mxu0 0
      %1312 = vmatprep.subr.bf16.mxu0 0
      %1313 = vmatpush2.bf16.xpose.msra.mxu0 0
      %1314 = vmatprep.subr.bf16.mxu0 0
      %1315 = vmatpush2.bf16.xpose.msra.mxu0 0
      %1316 = vmatprep.mubr.bf16.mxu0 0
      %1317 = vmatmul.mubr.bf16.gmra.mxu0 %v1273
      %v1318 = vpop.f32.mrf.mxu0
      %v1319 = vadd.f32 %v1127, %v1318
      %v1320 = vpop.f32.mrf.mxu0
      %v1321 = vpop.f32.mrf.mxu0
      %v1322 = vadd.f32 %v1128, %v1321
      %v1323 = vpop.f32.mrf.mxu0
      %1324 = vmatprep.mubr.bf16.mxu0 0
      %1325 = vmatmul.mubr.bf16.gmra.mxu0 %v1276
      %v1326 = vpop.f32.mrf.mxu0
      %v1327 = vadd.f32 %v1129, %v1326
      %v1328 = vpop.f32.mrf.mxu0
      %v1329 = vpop.f32.mrf.mxu0
      %v1330 = vadd.f32 %v1130, %v1329
      %v1331 = vpop.f32.mrf.mxu0
      %1332 = vdwg.mxu0
      %1335 = vrot.lane.b32.xlu0 %v1113, 112
      %v1336 = vpop.permute.xlu0 %1335
      %1337 = vrot.lane.b32.xlu0 %v1114, 112
      %v1338 = vpop.permute.xlu0 %1337
      %v1340 = vsel %vm1137, %v1113, 0
      %v1343 = vsel %vm1137, %v1114, 0
      %v1346 = vsel %vm1137, %v1336, 0
      %v1349 = vsel %vm1137, %v1338, 0
      %1351 = vmatprep.subr.bf16.mxu0 0
      %1352 = vmatpush1.bf16.xpose.msra.mxu0 0
      %1353 = vmatprep.subr.bf16.mxu0 0
      %1354 = vmatpush1.bf16.xpose.msra.mxu0 0
      %1355 = vmatprep.subr.bf16.mxu0 0
      %1356 = vmatpush1.bf16.xpose.msra.mxu0 0
      %1357 = vmatprep.subr.bf16.mxu0 0
      %1358 = vmatpush1.bf16.xpose.msra.mxu0 0
      %1359 = vmatprep.subr.bf16.mxu0 0
      %1360 = vmatpush1.bf16.xpose.msra.mxu0 0
      %1361 = vmatprep.subr.bf16.mxu0 0
      %1362 = vmatpush1.bf16.xpose.msra.mxu0 0
      %1363 = vmatprep.subr.bf16.mxu0 0
      %1364 = vmatpush1.bf16.xpose.msra.mxu0 %v1349
      %1365 = vmatprep.subr.bf16.mxu0 0
      %1366 = vmatpush1.bf16.xpose.msra.mxu0 %v1346
      %1367 = vmatprep.subr.bf16.mxu0 0
      %1368 = vmatpush2.bf16.xpose.msra.mxu0 0
      %1369 = vmatprep.subr.bf16.mxu0 0
      %1370 = vmatpush2.bf16.xpose.msra.mxu0 0
      %1371 = vmatprep.subr.bf16.mxu0 0
      %1372 = vmatpush2.bf16.xpose.msra.mxu0 0
      %1373 = vmatprep.subr.bf16.mxu0 0
      %1374 = vmatpush2.bf16.xpose.msra.mxu0 0
      %1375 = vmatprep.subr.bf16.mxu0 0
      %1376 = vmatpush2.bf16.xpose.msra.mxu0 0
      %1377 = vmatprep.subr.bf16.mxu0 0
      %1378 = vmatpush2.bf16.xpose.msra.mxu0 0
      %1379 = vmatprep.subr.bf16.mxu0 0
      %1380 = vmatpush2.bf16.xpose.msra.mxu0 0
      %1381 = vmatprep.subr.bf16.mxu0 0
      %1382 = vmatpush2.bf16.xpose.msra.mxu0 0
      %1383 = vmatprep.mubr.bf16.mxu0 0
      %1384 = vmatmul.mubr.bf16.gmra.mxu0 %v1340
      %v1385 = vpop.f32.mrf.mxu0
      %v1386 = vadd.f32 %v1127, %v1385
      %v1387 = vpop.f32.mrf.mxu0
      %v1388 = vpop.f32.mrf.mxu0
      %v1389 = vadd.f32 %v1128, %v1388
      %v1390 = vpop.f32.mrf.mxu0
      %1391 = vmatprep.mubr.bf16.mxu0 0
      %1392 = vmatmul.mubr.bf16.gmra.mxu0 %v1343
      %v1393 = vpop.f32.mrf.mxu0
      %v1394 = vadd.f32 %v1129, %v1393
      %v1395 = vpop.f32.mrf.mxu0
      %v1396 = vpop.f32.mrf.mxu0
      %v1397 = vadd.f32 %v1130, %v1396
      %v1398 = vpop.f32.mrf.mxu0
      %1399 = vdwg.mxu0
      %1402 = vrot.lane.b32.xlu0 %v1115, 112
      %v1403 = vpop.permute.xlu0 %1402
      %1404 = vrot.lane.b32.xlu0 %v1116, 112
      %v1405 = vpop.permute.xlu0 %1404
      %v1407 = vsel %vm1137, %v1115, 0
      %v1410 = vsel %vm1137, %v1116, 0
      %v1413 = vsel %vm1137, %v1403, 0
      %v1416 = vsel %vm1137, %v1405, 0
      %1418 = vmatprep.subr.bf16.mxu0 0
      %1419 = vmatpush1.bf16.xpose.msra.mxu0 0
      %1420 = vmatprep.subr.bf16.mxu0 0
      %1421 = vmatpush1.bf16.xpose.msra.mxu0 0
      %1422 = vmatprep.subr.bf16.mxu0 0
      %1423 = vmatpush1.bf16.xpose.msra.mxu0 0
      %1424 = vmatprep.subr.bf16.mxu0 0
      %1425 = vmatpush1.bf16.xpose.msra.mxu0 0
      %1426 = vmatprep.subr.bf16.mxu0 0
      %1427 = vmatpush1.bf16.xpose.msra.mxu0 0
      %1428 = vmatprep.subr.bf16.mxu0 0
      %1429 = vmatpush1.bf16.xpose.msra.mxu0 0
      %1430 = vmatprep.subr.bf16.mxu0 0
      %1431 = vmatpush1.bf16.xpose.msra.mxu0 %v1416
      %1432 = vmatprep.subr.bf16.mxu0 0
      %1433 = vmatpush1.bf16.xpose.msra.mxu0 %v1413
      %1434 = vmatprep.subr.bf16.mxu0 0
      %1435 = vmatpush2.bf16.xpose.msra.mxu0 0
      %1436 = vmatprep.subr.bf16.mxu0 0
      %1437 = vmatpush2.bf16.xpose.msra.mxu0 0
      %1438 = vmatprep.subr.bf16.mxu0 0
      %1439 = vmatpush2.bf16.xpose.msra.mxu0 0
      %1440 = vmatprep.subr.bf16.mxu0 0
      %1441 = vmatpush2.bf16.xpose.msra.mxu0 0
      %1442 = vmatprep.subr.bf16.mxu0 0
      %1443 = vmatpush2.bf16.xpose.msra.mxu0 0
      %1444 = vmatprep.subr.bf16.mxu0 0
      %1445 = vmatpush2.bf16.xpose.msra.mxu0 0
      %1446 = vmatprep.subr.bf16.mxu0 0
      %1447 = vmatpush2.bf16.xpose.msra.mxu0 0
      %1448 = vmatprep.subr.bf16.mxu0 0
      %1449 = vmatpush2.bf16.xpose.msra.mxu0 0
      %1450 = vmatprep.mubr.bf16.mxu0 0
      %1451 = vmatmul.mubr.bf16.gmra.mxu0 %v1407
      %v1452 = vpop.f32.mrf.mxu0
      %v1453 = vadd.f32 %v1127, %v1452
      %v1454 = vpop.f32.mrf.mxu0
      %v1455 = vpop.f32.mrf.mxu0
      %v1456 = vadd.f32 %v1128, %v1455
      %v1457 = vpop.f32.mrf.mxu0
      %1458 = vmatprep.mubr.bf16.mxu0 0
      %1459 = vmatmul.mubr.bf16.gmra.mxu0 %v1410
      %v1460 = vpop.f32.mrf.mxu0
      %v1461 = vadd.f32 %v1129, %v1460
      %v1462 = vpop.f32.mrf.mxu0
      %v1463 = vpop.f32.mrf.mxu0
      %v1464 = vadd.f32 %v1130, %v1463
      %v1465 = vpop.f32.mrf.mxu0
      %1466 = vdwg.mxu0
      %1469 = vrot.lane.b32.xlu0 %v1117, 112
      %v1470 = vpop.permute.xlu0 %1469
      %1471 = vrot.lane.b32.xlu0 %v1118, 112
      %v1472 = vpop.permute.xlu0 %1471
      %v1474 = vsel %vm1137, %v1117, 0
      %v1477 = vsel %vm1137, %v1118, 0
      %v1480 = vsel %vm1137, %v1470, 0
      %v1483 = vsel %vm1137, %v1472, 0
      %1485 = vmatprep.subr.bf16.mxu0 0
      %1486 = vmatpush1.bf16.xpose.msra.mxu0 0
      %1487 = vmatprep.subr.bf16.mxu0 0
      %1488 = vmatpush1.bf16.xpose.msra.mxu0 0
      %1489 = vmatprep.subr.bf16.mxu0 0
      %1490 = vmatpush1.bf16.xpose.msra.mxu0 0
      %1491 = vmatprep.subr.bf16.mxu0 0
      %1492 = vmatpush1.bf16.xpose.msra.mxu0 0
      %1493 = vmatprep.subr.bf16.mxu0 0
      %1494 = vmatpush1.bf16.xpose.msra.mxu0 0
      %1495 = vmatprep.subr.bf16.mxu0 0
      %1496 = vmatpush1.bf16.xpose.msra.mxu0 0
      %1497 = vmatprep.subr.bf16.mxu0 0
      %1498 = vmatpush1.bf16.xpose.msra.mxu0 %v1483
      %1499 = vmatprep.subr.bf16.mxu0 0
      %1500 = vmatpush1.bf16.xpose.msra.mxu0 %v1480
      %1501 = vmatprep.subr.bf16.mxu0 0
      %1502 = vmatpush2.bf16.xpose.msra.mxu0 0
      %1503 = vmatprep.subr.bf16.mxu0 0
      %1504 = vmatpush2.bf16.xpose.msra.mxu0 0
      %1505 = vmatprep.subr.bf16.mxu0 0
      %1506 = vmatpush2.bf16.xpose.msra.mxu0 0
      %1507 = vmatprep.subr.bf16.mxu0 0
      %1508 = vmatpush2.bf16.xpose.msra.mxu0 0
      %1509 = vmatprep.subr.bf16.mxu0 0
      %1510 = vmatpush2.bf16.xpose.msra.mxu0 0
      %1511 = vmatprep.subr.bf16.mxu0 0
      %1512 = vmatpush2.bf16.xpose.msra.mxu0 0
      %1513 = vmatprep.subr.bf16.mxu0 0
      %1514 = vmatpush2.bf16.xpose.msra.mxu0 0
      %1515 = vmatprep.subr.bf16.mxu0 0
      %1516 = vmatpush2.bf16.xpose.msra.mxu0 0
      %1517 = vmatprep.mubr.bf16.mxu0 0
      %1518 = vmatmul.mubr.bf16.gmra.mxu0 %v1474
      %v1519 = vpop.f32.mrf.mxu0
      %v1520 = vadd.f32 %v1127, %v1519
      %v1521 = vpop.f32.mrf.mxu0
      %v1522 = vpop.f32.mrf.mxu0
      %v1523 = vadd.f32 %v1128, %v1522
      %v1524 = vpop.f32.mrf.mxu0
      %1525 = vmatprep.mubr.bf16.mxu0 0
      %1526 = vmatmul.mubr.bf16.gmra.mxu0 %v1477
      %v1527 = vpop.f32.mrf.mxu0
      %v1528 = vadd.f32 %v1129, %v1527
      %v1529 = vpop.f32.mrf.mxu0
      %v1530 = vpop.f32.mrf.mxu0
      %v1531 = vadd.f32 %v1130, %v1530
      %v1532 = vpop.f32.mrf.mxu0
      %1533 = vdwg.mxu0
      %1536 = vrot.lane.b32.xlu0 %v1119, 112
      %v1537 = vpop.permute.xlu0 %1536
      %1538 = vrot.lane.b32.xlu0 %v1120, 112
      %v1539 = vpop.permute.xlu0 %1538
      %v1541 = vsel %vm1137, %v1119, 0
      %v1544 = vsel %vm1137, %v1120, 0
      %v1547 = vsel %vm1137, %v1537, 0
      %v1550 = vsel %vm1137, %v1539, 0
      %1552 = vmatprep.subr.bf16.mxu0 0
      %1553 = vmatpush1.bf16.xpose.msra.mxu0 0
      %1554 = vmatprep.subr.bf16.mxu0 0
      %1555 = vmatpush1.bf16.xpose.msra.mxu0 0
      %1556 = vmatprep.subr.bf16.mxu0 0
      %1557 = vmatpush1.bf16.xpose.msra.mxu0 0
      %1558 = vmatprep.subr.bf16.mxu0 0
      %1559 = vmatpush1.bf16.xpose.msra.mxu0 0
      %1560 = vmatprep.subr.bf16.mxu0 0
      %1561 = vmatpush1.bf16.xpose.msra.mxu0 0
      %1562 = vmatprep.subr.bf16.mxu0 0
      %1563 = vmatpush1.bf16.xpose.msra.mxu0 0
      %1564 = vmatprep.subr.bf16.mxu0 0
      %1565 = vmatpush1.bf16.xpose.msra.mxu0 %v1550
      %1566 = vmatprep.subr.bf16.mxu0 0
      %1567 = vmatpush1.bf16.xpose.msra.mxu0 %v1547
      %1568 = vmatprep.subr.bf16.mxu0 0
      %1569 = vmatpush2.bf16.xpose.msra.mxu0 0
      %1570 = vmatprep.subr.bf16.mxu0 0
      %1571 = vmatpush2.bf16.xpose.msra.mxu0 0
      %1572 = vmatprep.subr.bf16.mxu0 0
      %1573 = vmatpush2.bf16.xpose.msra.mxu0 0
      %1574 = vmatprep.subr.bf16.mxu0 0
      %1575 = vmatpush2.bf16.xpose.msra.mxu0 0
      %1576 = vmatprep.subr.bf16.mxu0 0
      %1577 = vmatpush2.bf16.xpose.msra.mxu0 0
      %1578 = vmatprep.subr.bf16.mxu0 0
      %1579 = vmatpush2.bf16.xpose.msra.mxu0 0
      %1580 = vmatprep.subr.bf16.mxu0 0
      %1581 = vmatpush2.bf16.xpose.msra.mxu0 0
      %1582 = vmatprep.subr.bf16.mxu0 0
      %1583 = vmatpush2.bf16.xpose.msra.mxu0 0
      %1584 = vmatprep.mubr.bf16.mxu0 0
      %1585 = vmatmul.mubr.bf16.gmra.mxu0 %v1541
      %v1586 = vpop.f32.mrf.mxu0
      %v1587 = vadd.f32 %v1127, %v1586
      %v1588 = vpop.f32.mrf.mxu0
      %v1589 = vpop.f32.mrf.mxu0
      %v1590 = vadd.f32 %v1128, %v1589
      %v1591 = vpop.f32.mrf.mxu0
      %1592 = vmatprep.mubr.bf16.mxu0 0
      %1593 = vmatmul.mubr.bf16.gmra.mxu0 %v1544
      %v1594 = vpop.f32.mrf.mxu0
      %v1595 = vadd.f32 %v1129, %v1594
      %v1596 = vpop.f32.mrf.mxu0
      %v1597 = vpop.f32.mrf.mxu0
      %v1598 = vadd.f32 %v1130, %v1597
      %v1599 = vpop.f32.mrf.mxu0
      %1600 = vdwg.mxu0
      %1603 = vrot.lane.b32.xlu0 %v1121, 112
      %v1604 = vpop.permute.xlu0 %1603
      %1605 = vrot.lane.b32.xlu0 %v1122, 112
      %v1606 = vpop.permute.xlu0 %1605
      %v1608 = vsel %vm1137, %v1121, 0
      %v1611 = vsel %vm1137, %v1122, 0
      %v1614 = vsel %vm1137, %v1604, 0
      %v1617 = vsel %vm1137, %v1606, 0
      %1619 = vmatprep.subr.bf16.mxu0 0
      %1620 = vmatpush1.bf16.xpose.msra.mxu0 0
      %1621 = vmatprep.subr.bf16.mxu0 0
      %1622 = vmatpush1.bf16.xpose.msra.mxu0 0
      %1623 = vmatprep.subr.bf16.mxu0 0
      %1624 = vmatpush1.bf16.xpose.msra.mxu0 0
      %1625 = vmatprep.subr.bf16.mxu0 0
      %1626 = vmatpush1.bf16.xpose.msra.mxu0 0
      %1627 = vmatprep.subr.bf16.mxu0 0
      %1628 = vmatpush1.bf16.xpose.msra.mxu0 0
      %1629 = vmatprep.subr.bf16.mxu0 0
      %1630 = vmatpush1.bf16.xpose.msra.mxu0 0
      %1631 = vmatprep.subr.bf16.mxu0 0
      %1632 = vmatpush1.bf16.xpose.msra.mxu0 %v1617
      %1633 = vmatprep.subr.bf16.mxu0 0
      %1634 = vmatpush1.bf16.xpose.msra.mxu0 %v1614
      %1635 = vmatprep.subr.bf16.mxu0 0
      %1636 = vmatpush2.bf16.xpose.msra.mxu0 0
      %1637 = vmatprep.subr.bf16.mxu0 0
      %1638 = vmatpush2.bf16.xpose.msra.mxu0 0
      %1639 = vmatprep.subr.bf16.mxu0 0
      %1640 = vmatpush2.bf16.xpose.msra.mxu0 0
      %1641 = vmatprep.subr.bf16.mxu0 0
      %1642 = vmatpush2.bf16.xpose.msra.mxu0 0
      %1643 = vmatprep.subr.bf16.mxu0 0
      %1644 = vmatpush2.bf16.xpose.msra.mxu0 0
      %1645 = vmatprep.subr.bf16.mxu0 0
      %1646 = vmatpush2.bf16.xpose.msra.mxu0 0
      %1647 = vmatprep.subr.bf16.mxu0 0
      %1648 = vmatpush2.bf16.xpose.msra.mxu0 0
      %1649 = vmatprep.subr.bf16.mxu0 0
      %1650 = vmatpush2.bf16.xpose.msra.mxu0 0
      %1651 = vmatprep.mubr.bf16.mxu0 0
      %1652 = vmatmul.mubr.bf16.gmra.mxu0 %v1608
      %v1653 = vpop.f32.mrf.mxu0
      %v1654 = vadd.f32 %v1127, %v1653
      %v1655 = vpop.f32.mrf.mxu0
      %v1656 = vpop.f32.mrf.mxu0
      %v1657 = vadd.f32 %v1128, %v1656
      %v1658 = vpop.f32.mrf.mxu0
      %1659 = vmatprep.mubr.bf16.mxu0 0
      %1660 = vmatmul.mubr.bf16.gmra.mxu0 %v1611
      %v1661 = vpop.f32.mrf.mxu0
      %v1662 = vadd.f32 %v1129, %v1661
      %v1663 = vpop.f32.mrf.mxu0
      %v1664 = vpop.f32.mrf.mxu0
      %v1665 = vadd.f32 %v1130, %v1664
      %v1666 = vpop.f32.mrf.mxu0
      %1667 = vdwg.mxu0
      %vm1668 = vcmask 261120
      %v1669 = vsel %vm1668, %v1185, -inf
      %1670 = vmax.xlane.f32.xlu0 %v1669
      %v1671 = vpop.xlane.xlu0 %1670
      %v1672 = vsel %vm1668, %v1188, -inf
      %1673 = vmax.xlane.f32.xlu0 %v1672
      %v1674 = vpop.xlane.xlu0 %1673
      %v1675 = vsel %vm1668, %v1193, -inf
      %1676 = vmax.xlane.f32.xlu0 %v1675
      %v1677 = vpop.xlane.xlu0 %1676
      %v1678 = vsel %vm1668, %v1196, -inf
      %1679 = vmax.xlane.f32.xlu0 %v1678
      %v1680 = vpop.xlane.xlu0 %1679
      %v1681 = vsel %vm1668, %v1252, -inf
      %1682 = vmax.xlane.f32.xlu0 %v1681
      %v1683 = vpop.xlane.xlu0 %1682
      %v1684 = vsel %vm1668, %v1255, -inf
      %1685 = vmax.xlane.f32.xlu0 %v1684
      %v1686 = vpop.xlane.xlu0 %1685
      %v1687 = vsel %vm1668, %v1260, -inf
      %1688 = vmax.xlane.f32.xlu0 %v1687
      %v1689 = vpop.xlane.xlu0 %1688
      %v1690 = vsel %vm1668, %v1263, -inf
      %1691 = vmax.xlane.f32.xlu0 %v1690
      %v1692 = vpop.xlane.xlu0 %1691
      %v1693 = vsel %vm1668, %v1319, -inf
      %1694 = vmax.xlane.f32.xlu0 %v1693
      %v1695 = vpop.xlane.xlu0 %1694
      %v1696 = vsel %vm1668, %v1322, -inf
      %1697 = vmax.xlane.f32.xlu0 %v1696
      %v1698 = vpop.xlane.xlu0 %1697
      %v1699 = vsel %vm1668, %v1327, -inf
      %1700 = vmax.xlane.f32.xlu0 %v1699
      %v1701 = vpop.xlane.xlu0 %1700
      %v1702 = vsel %vm1668, %v1330, -inf
      %1703 = vmax.xlane.f32.xlu0 %v1702
      %v1704 = vpop.xlane.xlu0 %1703
      %v1705 = vsel %vm1668, %v1386, -inf
      %1706 = vmax.xlane.f32.xlu0 %v1705
      %v1707 = vpop.xlane.xlu0 %1706
      %v1708 = vsel %vm1668, %v1389, -inf
      %1709 = vmax.xlane.f32.xlu0 %v1708
      %v1710 = vpop.xlane.xlu0 %1709
      %v1711 = vsel %vm1668, %v1394, -inf
      %1712 = vmax.xlane.f32.xlu0 %v1711
      %v1713 = vpop.xlane.xlu0 %1712
      %v1714 = vsel %vm1668, %v1397, -inf
      %1715 = vmax.xlane.f32.xlu0 %v1714
      %v1716 = vpop.xlane.xlu0 %1715
      %v1717 = vsel %vm1668, %v1453, -inf
      %1718 = vmax.xlane.f32.xlu0 %v1717
      %v1719 = vpop.xlane.xlu0 %1718
      %v1720 = vsel %vm1668, %v1456, -inf
      %1721 = vmax.xlane.f32.xlu0 %v1720
      %v1722 = vpop.xlane.xlu0 %1721
      %v1723 = vsel %vm1668, %v1461, -inf
      %1724 = vmax.xlane.f32.xlu0 %v1723
      %v1725 = vpop.xlane.xlu0 %1724
      %v1726 = vsel %vm1668, %v1464, -inf
      %1727 = vmax.xlane.f32.xlu0 %v1726
      %v1728 = vpop.xlane.xlu0 %1727
      %v1729 = vsel %vm1668, %v1520, -inf
      %1730 = vmax.xlane.f32.xlu0 %v1729
      %v1731 = vpop.xlane.xlu0 %1730
      %v1732 = vsel %vm1668, %v1523, -inf
      %1733 = vmax.xlane.f32.xlu0 %v1732
      %v1734 = vpop.xlane.xlu0 %1733
      %v1735 = vsel %vm1668, %v1528, -inf
      %1736 = vmax.xlane.f32.xlu0 %v1735
      %v1737 = vpop.xlane.xlu0 %1736
      %v1738 = vsel %vm1668, %v1531, -inf
      %1739 = vmax.xlane.f32.xlu0 %v1738
      %v1740 = vpop.xlane.xlu0 %1739
      %v1741 = vsel %vm1668, %v1587, -inf
      %1742 = vmax.xlane.f32.xlu0 %v1741
      %v1743 = vpop.xlane.xlu0 %1742
      %v1744 = vsel %vm1668, %v1590, -inf
      %1745 = vmax.xlane.f32.xlu0 %v1744
      %v1746 = vpop.xlane.xlu0 %1745
      %v1747 = vsel %vm1668, %v1595, -inf
      %1748 = vmax.xlane.f32.xlu0 %v1747
      %v1749 = vpop.xlane.xlu0 %1748
      %v1750 = vsel %vm1668, %v1598, -inf
      %1751 = vmax.xlane.f32.xlu0 %v1750
      %v1752 = vpop.xlane.xlu0 %1751
      %v1753 = vsel %vm1668, %v1654, -inf
      %1754 = vmax.xlane.f32.xlu0 %v1753
      %v1755 = vpop.xlane.xlu0 %1754
      %v1756 = vsel %vm1668, %v1657, -inf
      %1757 = vmax.xlane.f32.xlu0 %v1756
      %v1758 = vpop.xlane.xlu0 %1757
      %v1759 = vsel %vm1668, %v1662, -inf
      %1760 = vmax.xlane.f32.xlu0 %v1759
      %v1761 = vpop.xlane.xlu0 %1760
      %v1762 = vsel %vm1668, %v1665, -inf
      %1763 = vmax.xlane.f32.xlu0 %v1762
      %v1764 = vpop.xlane.xlu0 %1763
      %v1765 = vsub.f32 %v1185, %v1671
      %v1766 = vsub.f32 %v1188, %v1674
      %v1767 = vsub.f32 %v1193, %v1677
      %v1768 = vsub.f32 %v1196, %v1680
      %v1769 = vsub.f32 %v1252, %v1683
      %v1770 = vsub.f32 %v1255, %v1686
      %v1771 = vsub.f32 %v1260, %v1689
      %v1772 = vsub.f32 %v1263, %v1692
      %v1773 = vsub.f32 %v1319, %v1695
      %v1774 = vsub.f32 %v1322, %v1698
      %v1775 = vsub.f32 %v1327, %v1701
      %v1776 = vsub.f32 %v1330, %v1704
      %v1777 = vsub.f32 %v1386, %v1707
      %v1778 = vsub.f32 %v1389, %v1710
      %v1779 = vsub.f32 %v1394, %v1713
      %v1780 = vsub.f32 %v1397, %v1716
      %v1781 = vsub.f32 %v1453, %v1719
      %v1782 = vsub.f32 %v1456, %v1722
      %v1783 = vsub.f32 %v1461, %v1725
      %v1784 = vsub.f32 %v1464, %v1728
      %v1785 = vsub.f32 %v1520, %v1731
      %v1786 = vsub.f32 %v1523, %v1734
      %v1787 = vsub.f32 %v1528, %v1737
      %v1788 = vsub.f32 %v1531, %v1740
      %v1789 = vsub.f32 %v1587, %v1743
      %v1790 = vsub.f32 %v1590, %v1746
      %v1791 = vsub.f32 %v1595, %v1749
      %v1792 = vsub.f32 %v1598, %v1752
      %v1793 = vsub.f32 %v1654, %v1755
      %v1794 = vsub.f32 %v1657, %v1758
      %v1795 = vsub.f32 %v1662, %v1761
      %v1796 = vsub.f32 %v1665, %v1764
      %v1797 = vmul.f32 %v1765, 1.442695
      %v1798 = vpow.pop %v1797
      %v1799 = vmul.f32 %v1766, 1.442695
      %v1800 = vpow.pop %v1799
      %v1801 = vmul.f32 %v1767, 1.442695
      %v1802 = vpow.pop %v1801
      %v1803 = vmul.f32 %v1768, 1.442695
      %v1804 = vpow.pop %v1803
      %v1805 = vmul.f32 %v1769, 1.442695
      %v1806 = vpow.pop %v1805
      %v1807 = vmul.f32 %v1770, 1.442695
      %v1808 = vpow.pop %v1807
      %v1809 = vmul.f32 %v1771, 1.442695
      %v1810 = vpow.pop %v1809
      %v1811 = vmul.f32 %v1772, 1.442695
      %v1812 = vpow.pop %v1811
      %v1813 = vmul.f32 %v1773, 1.442695
      %v1814 = vpow.pop %v1813
      %v1815 = vmul.f32 %v1774, 1.442695
      %v1816 = vpow.pop %v1815
      %v1817 = vmul.f32 %v1775, 1.442695
      %v1818 = vpow.pop %v1817
      %v1819 = vmul.f32 %v1776, 1.442695
      %v1820 = vpow.pop %v1819
      %v1821 = vmul.f32 %v1777, 1.442695
      %v1822 = vpow.pop %v1821
      %v1823 = vmul.f32 %v1778, 1.442695
      %v1824 = vpow.pop %v1823
      %v1825 = vmul.f32 %v1779, 1.442695
      %v1826 = vpow.pop %v1825
      %v1827 = vmul.f32 %v1780, 1.442695
      %v1828 = vpow.pop %v1827
      %v1829 = vmul.f32 %v1781, 1.442695
      %v1830 = vpow.pop %v1829
      %v1831 = vmul.f32 %v1782, 1.442695
      %v1832 = vpow.pop %v1831
      %v1833 = vmul.f32 %v1783, 1.442695
      %v1834 = vpow.pop %v1833
      %v1835 = vmul.f32 %v1784, 1.442695
      %v1836 = vpow.pop %v1835
      %v1837 = vmul.f32 %v1785, 1.442695
      %v1838 = vpow.pop %v1837
      %v1839 = vmul.f32 %v1786, 1.442695
      %v1840 = vpow.pop %v1839
      %v1841 = vmul.f32 %v1787, 1.442695
      %v1842 = vpow.pop %v1841
      %v1843 = vmul.f32 %v1788, 1.442695
      %v1844 = vpow.pop %v1843
      %v1845 = vmul.f32 %v1789, 1.442695
      %v1846 = vpow.pop %v1845
      %v1847 = vmul.f32 %v1790, 1.442695
      %v1848 = vpow.pop %v1847
      %v1849 = vmul.f32 %v1791, 1.442695
      %v1850 = vpow.pop %v1849
      %v1851 = vmul.f32 %v1792, 1.442695
      %v1852 = vpow.pop %v1851
      %v1853 = vmul.f32 %v1793, 1.442695
      %v1854 = vpow.pop %v1853
      %v1855 = vmul.f32 %v1794, 1.442695
      %v1856 = vpow.pop %v1855
      %v1857 = vmul.f32 %v1795, 1.442695
      %v1858 = vpow.pop %v1857
      %v1859 = vmul.f32 %v1796, 1.442695
      %v1860 = vpow.pop %v1859
      %v1861 = vsel %vm1668, %v1798, 0.0
      %1862 = vadd.xlane.f32.xlu0 %v1861
      %v1863 = vpop.xlane.xlu0 %1862
      %v1864 = vsel %vm1668, %v1800, 0.0
      %1865 = vadd.xlane.f32.xlu0 %v1864
      %v1866 = vpop.xlane.xlu0 %1865
      %v1867 = vsel %vm1668, %v1802, 0.0
      %1868 = vadd.xlane.f32.xlu0 %v1867
      %v1869 = vpop.xlane.xlu0 %1868
      %v1870 = vsel %vm1668, %v1804, 0.0
      %1871 = vadd.xlane.f32.xlu0 %v1870
      %v1872 = vpop.xlane.xlu0 %1871
      %v1873 = vsel %vm1668, %v1806, 0.0
      %1874 = vadd.xlane.f32.xlu0 %v1873
      %v1875 = vpop.xlane.xlu0 %1874
      %v1876 = vsel %vm1668, %v1808, 0.0
      %1877 = vadd.xlane.f32.xlu0 %v1876
      %v1878 = vpop.xlane.xlu0 %1877
      %v1879 = vsel %vm1668, %v1810, 0.0
      %1880 = vadd.xlane.f32.xlu0 %v1879
      %v1881 = vpop.xlane.xlu0 %1880
      %v1882 = vsel %vm1668, %v1812, 0.0
      %1883 = vadd.xlane.f32.xlu0 %v1882
      %v1884 = vpop.xlane.xlu0 %1883
      %v1885 = vsel %vm1668, %v1814, 0.0
      %1886 = vadd.xlane.f32.xlu0 %v1885
      %v1887 = vpop.xlane.xlu0 %1886
      %v1888 = vsel %vm1668, %v1816, 0.0
      %1889 = vadd.xlane.f32.xlu0 %v1888
      %v1890 = vpop.xlane.xlu0 %1889
      %v1891 = vsel %vm1668, %v1818, 0.0
      %1892 = vadd.xlane.f32.xlu0 %v1891
      %v1893 = vpop.xlane.xlu0 %1892
      %v1894 = vsel %vm1668, %v1820, 0.0
      %1895 = vadd.xlane.f32.xlu0 %v1894
      %v1896 = vpop.xlane.xlu0 %1895
      %v1897 = vsel %vm1668, %v1822, 0.0
      %1898 = vadd.xlane.f32.xlu0 %v1897
      %v1899 = vpop.xlane.xlu0 %1898
      %v1900 = vsel %vm1668, %v1824, 0.0
      %1901 = vadd.xlane.f32.xlu0 %v1900
      %v1902 = vpop.xlane.xlu0 %1901
      %v1903 = vsel %vm1668, %v1826, 0.0
      %1904 = vadd.xlane.f32.xlu0 %v1903
      %v1905 = vpop.xlane.xlu0 %1904
      %v1906 = vsel %vm1668, %v1828, 0.0
      %1907 = vadd.xlane.f32.xlu0 %v1906
      %v1908 = vpop.xlane.xlu0 %1907
      %v1909 = vsel %vm1668, %v1830, 0.0
      %1910 = vadd.xlane.f32.xlu0 %v1909
      %v1911 = vpop.xlane.xlu0 %1910
      %v1912 = vsel %vm1668, %v1832, 0.0
      %1913 = vadd.xlane.f32.xlu0 %v1912
      %v1914 = vpop.xlane.xlu0 %1913
      %v1915 = vsel %vm1668, %v1834, 0.0
      %1916 = vadd.xlane.f32.xlu0 %v1915
      %v1917 = vpop.xlane.xlu0 %1916
      %v1918 = vsel %vm1668, %v1836, 0.0
      %1919 = vadd.xlane.f32.xlu0 %v1918
      %v1920 = vpop.xlane.xlu0 %1919
      %v1921 = vsel %vm1668, %v1838, 0.0
      %1922 = vadd.xlane.f32.xlu0 %v1921
      %v1923 = vpop.xlane.xlu0 %1922
      %v1924 = vsel %vm1668, %v1840, 0.0
      %1925 = vadd.xlane.f32.xlu0 %v1924
      %v1926 = vpop.xlane.xlu0 %1925
      %v1927 = vsel %vm1668, %v1842, 0.0
      %1928 = vadd.xlane.f32.xlu0 %v1927
      %v1929 = vpop.xlane.xlu0 %1928
      %v1930 = vsel %vm1668, %v1844, 0.0
      %1931 = vadd.xlane.f32.xlu0 %v1930
      %v1932 = vpop.xlane.xlu0 %1931
      %v1933 = vsel %vm1668, %v1846, 0.0
      %1934 = vadd.xlane.f32.xlu0 %v1933
      %v1935 = vpop.xlane.xlu0 %1934
      %v1936 = vsel %vm1668, %v1848, 0.0
      %1937 = vadd.xlane.f32.xlu0 %v1936
      %v1938 = vpop.xlane.xlu0 %1937
      %v1939 = vsel %vm1668, %v1850, 0.0
      %1940 = vadd.xlane.f32.xlu0 %v1939
      %v1941 = vpop.xlane.xlu0 %1940
      %v1942 = vsel %vm1668, %v1852, 0.0
      %1943 = vadd.xlane.f32.xlu0 %v1942
      %v1944 = vpop.xlane.xlu0 %1943
      %v1945 = vsel %vm1668, %v1854, 0.0
      %1946 = vadd.xlane.f32.xlu0 %v1945
      %v1947 = vpop.xlane.xlu0 %1946
      %v1948 = vsel %vm1668, %v1856, 0.0
      %1949 = vadd.xlane.f32.xlu0 %v1948
      %v1950 = vpop.xlane.xlu0 %1949
      %v1951 = vsel %vm1668, %v1858, 0.0
      %1952 = vadd.xlane.f32.xlu0 %v1951
      %v1953 = vpop.xlane.xlu0 %1952
      %v1954 = vsel %vm1668, %v1860, 0.0
      %1955 = vadd.xlane.f32.xlu0 %v1954
      %v1956 = vpop.xlane.xlu0 %1955
      %v1957 = vrcp.pop %v1863
      %v1958 = vrcp.pop %v1866
      %v1959 = vrcp.pop %v1869
      %v1960 = vrcp.pop %v1872
      %v1961 = vrcp.pop %v1875
      %v1962 = vrcp.pop %v1878
      %v1963 = vrcp.pop %v1881
      %v1964 = vrcp.pop %v1884
      %v1965 = vrcp.pop %v1887
      %v1966 = vrcp.pop %v1890
      %v1967 = vrcp.pop %v1893
      %v1968 = vrcp.pop %v1896
      %v1969 = vrcp.pop %v1899
      %v1970 = vrcp.pop %v1902
      %v1971 = vrcp.pop %v1905
      %v1972 = vrcp.pop %v1908
      %v1973 = vrcp.pop %v1911
      %v1974 = vrcp.pop %v1914
      %v1975 = vrcp.pop %v1917
      %v1976 = vrcp.pop %v1920
      %v1977 = vrcp.pop %v1923
      %v1978 = vrcp.pop %v1926
      %v1979 = vrcp.pop %v1929
      %v1980 = vrcp.pop %v1932
      %v1981 = vrcp.pop %v1935
      %v1982 = vrcp.pop %v1938
      %v1983 = vrcp.pop %v1941
      %v1984 = vrcp.pop %v1944
      %v1985 = vrcp.pop %v1947
      %v1986 = vrcp.pop %v1950
      %v1987 = vrcp.pop %v1953
      %v1988 = vrcp.pop %v1956
      %v1989 = vmul.f32 %v1798, %v1957
      %v1990 = vmul.f32 %v1800, %v1958
      %v1991 = vmul.f32 %v1802, %v1959
      %v1992 = vmul.f32 %v1804, %v1960
      %v1993 = vmul.f32 %v1806, %v1961
      %v1994 = vmul.f32 %v1808, %v1962
      %v1995 = vmul.f32 %v1810, %v1963
      %v1996 = vmul.f32 %v1812, %v1964
      %v1997 = vmul.f32 %v1814, %v1965
      %v1998 = vmul.f32 %v1816, %v1966
      %v1999 = vmul.f32 %v1818, %v1967
      %v2000 = vmul.f32 %v1820, %v1968
      %v2001 = vmul.f32 %v1822, %v1969
      %v2002 = vmul.f32 %v1824, %v1970
      %v2003 = vmul.f32 %v1826, %v1971
      %v2004 = vmul.f32 %v1828, %v1972
      %v2005 = vmul.f32 %v1830, %v1973
      %v2006 = vmul.f32 %v1832, %v1974
      %v2007 = vmul.f32 %v1834, %v1975
      %v2008 = vmul.f32 %v1836, %v1976
      %v2009 = vmul.f32 %v1838, %v1977
      %v2010 = vmul.f32 %v1840, %v1978
      %v2011 = vmul.f32 %v1842, %v1979
      %v2012 = vmul.f32 %v1844, %v1980
      %v2013 = vmul.f32 %v1846, %v1981
      %v2014 = vmul.f32 %v1848, %v1982
      %v2015 = vmul.f32 %v1850, %v1983
      %v2016 = vmul.f32 %v1852, %v1984
      %v2017 = vmul.f32 %v1854, %v1985
      %v2018 = vmul.f32 %v1856, %v1986
      %v2019 = vmul.f32 %v1858, %v1987
      %v2020 = vmul.f32 %v1860, %v1988
      %v2021 = vpack.c.bf16 %v1990, %v1989
      %v2022 = vpack.c.bf16 %v1992, %v1991
      %v2023 = vpack.c.bf16 %v1994, %v1993
      %v2024 = vpack.c.bf16 %v1996, %v1995
      %v2025 = vpack.c.bf16 %v1998, %v1997
      %v2026 = vpack.c.bf16 %v2000, %v1999
      %v2027 = vpack.c.bf16 %v2002, %v2001
      %v2028 = vpack.c.bf16 %v2004, %v2003
      %v2029 = vpack.c.bf16 %v2006, %v2005
      %v2030 = vpack.c.bf16 %v2008, %v2007
      %v2031 = vpack.c.bf16 %v2010, %v2009
      %v2032 = vpack.c.bf16 %v2012, %v2011
      %v2033 = vpack.c.bf16 %v2014, %v2013
      %v2034 = vpack.c.bf16 %v2016, %v2015
      %v2035 = vpack.c.bf16 %v2018, %v2017
      %v2036 = vpack.c.bf16 %v2020, %v2019
      %2037 = vrot.lane.b32.xlu0 %v1107, 96
      %v2038 = vpop.permute.xlu0 %2037
      %2039 = vrot.lane.b32.xlu0 %v1108, 96
      %v2040 = vpop.permute.xlu0 %2039
      %v2044 = vsel %vm1668, %v2021, 0
      %v2047 = vsel %vm1668, %v2022, 0
      %2049 = vmatprep.subr.bf16.mxu0 0
      %2050 = vmatpush1.bf16.msra.mxu0 0
      %2051 = vmatprep.subr.bf16.mxu0 0
      %2052 = vmatpush1.bf16.msra.mxu0 0
      %2053 = vmatprep.subr.bf16.mxu0 0
      %2054 = vmatpush1.bf16.msra.mxu0 0
      %2055 = vmatprep.subr.bf16.mxu0 0
      %2056 = vmatpush1.bf16.msra.mxu0 0
      %2057 = vmatprep.subr.bf16.mxu0 0
      %2058 = vmatpush1.bf16.msra.mxu0 0
      %2059 = vmatprep.subr.bf16.mxu0 0
      %2060 = vmatpush1.bf16.msra.mxu0 0
      %2061 = vmatprep.subr.bf16.mxu0 0
      %2062 = vmatpush1.bf16.msra.mxu0 %v2040
      %2063 = vmatprep.subr.bf16.mxu0 0
      %2064 = vmatpush1.bf16.msra.mxu0 %v2038
      %2065 = vmatprep.subr.bf16.mxu0 0
      %2066 = vmatpush2.bf16.msra.mxu0 0
      %2067 = vmatprep.subr.bf16.mxu0 0
      %2068 = vmatpush2.bf16.msra.mxu0 0
      %2069 = vmatprep.subr.bf16.mxu0 0
      %2070 = vmatpush2.bf16.msra.mxu0 0
      %2071 = vmatprep.subr.bf16.mxu0 0
      %2072 = vmatpush2.bf16.msra.mxu0 0
      %2073 = vmatprep.subr.bf16.mxu0 0
      %2074 = vmatpush2.bf16.msra.mxu0 0
      %2075 = vmatprep.subr.bf16.mxu0 0
      %2076 = vmatpush2.bf16.msra.mxu0 0
      %2077 = vmatprep.subr.bf16.mxu0 0
      %2078 = vmatpush2.bf16.msra.mxu0 0
      %2079 = vmatprep.subr.bf16.mxu0 0
      %2080 = vmatpush2.bf16.msra.mxu0 0
      %2081 = vmatprep.mubr.bf16.mxu0 0
      %2082 = vmatmul.mubr.bf16.gmra.mxu0 %v2044
      %v2083 = vpop.f32.mrf.mxu0
      %v2084 = vadd.f32 0.0, %v2083
      %v2085 = vpop.f32.mrf.mxu0
      %v2086 = vpop.f32.mrf.mxu0
      %v2087 = vadd.f32 0.0, %v2086
      %v2088 = vpop.f32.mrf.mxu0
      %2089 = vmatprep.mubr.bf16.mxu0 0
      %2090 = vmatmul.mubr.bf16.gmra.mxu0 %v2047
      %v2091 = vpop.f32.mrf.mxu0
      %v2092 = vadd.f32 0.0, %v2091
      %v2093 = vpop.f32.mrf.mxu0
      %v2094 = vpop.f32.mrf.mxu0
      %v2095 = vadd.f32 0.0, %v2094
      %v2096 = vpop.f32.mrf.mxu0
      %2097 = vdwg.mxu0
      %2098 = vrot.lane.b32.xlu0 %v1109, 96
      %v2099 = vpop.permute.xlu0 %2098
      %2100 = vrot.lane.b32.xlu0 %v1110, 96
      %v2101 = vpop.permute.xlu0 %2100
      %v2105 = vsel %vm1668, %v2023, 0
      %v2108 = vsel %vm1668, %v2024, 0
      %2110 = vmatprep.subr.bf16.mxu0 0
      %2111 = vmatpush1.bf16.msra.mxu0 0
      %2112 = vmatprep.subr.bf16.mxu0 0
      %2113 = vmatpush1.bf16.msra.mxu0 0
      %2114 = vmatprep.subr.bf16.mxu0 0
      %2115 = vmatpush1.bf16.msra.mxu0 0
      %2116 = vmatprep.subr.bf16.mxu0 0
      %2117 = vmatpush1.bf16.msra.mxu0 0
      %2118 = vmatprep.subr.bf16.mxu0 0
      %2119 = vmatpush1.bf16.msra.mxu0 0
      %2120 = vmatprep.subr.bf16.mxu0 0
      %2121 = vmatpush1.bf16.msra.mxu0 0
      %2122 = vmatprep.subr.bf16.mxu0 0
      %2123 = vmatpush1.bf16.msra.mxu0 %v2101
      %2124 = vmatprep.subr.bf16.mxu0 0
      %2125 = vmatpush1.bf16.msra.mxu0 %v2099
      %2126 = vmatprep.subr.bf16.mxu0 0
      %2127 = vmatpush2.bf16.msra.mxu0 0
      %2128 = vmatprep.subr.bf16.mxu0 0
      %2129 = vmatpush2.bf16.msra.mxu0 0
      %2130 = vmatprep.subr.bf16.mxu0 0
      %2131 = vmatpush2.bf16.msra.mxu0 0
      %2132 = vmatprep.subr.bf16.mxu0 0
      %2133 = vmatpush2.bf16.msra.mxu0 0
      %2134 = vmatprep.subr.bf16.mxu0 0
      %2135 = vmatpush2.bf16.msra.mxu0 0
      %2136 = vmatprep.subr.bf16.mxu0 0
      %2137 = vmatpush2.bf16.msra.mxu0 0
      %2138 = vmatprep.subr.bf16.mxu0 0
      %2139 = vmatpush2.bf16.msra.mxu0 0
      %2140 = vmatprep.subr.bf16.mxu0 0
      %2141 = vmatpush2.bf16.msra.mxu0 0
      %2142 = vmatprep.mubr.bf16.mxu0 0
      %2143 = vmatmul.mubr.bf16.gmra.mxu0 %v2105
      %v2144 = vpop.f32.mrf.mxu0
      %v2145 = vadd.f32 0.0, %v2144
      %v2146 = vpop.f32.mrf.mxu0
      %v2147 = vpop.f32.mrf.mxu0
      %v2148 = vadd.f32 0.0, %v2147
      %v2149 = vpop.f32.mrf.mxu0
      %2150 = vmatprep.mubr.bf16.mxu0 0
      %2151 = vmatmul.mubr.bf16.gmra.mxu0 %v2108
      %v2152 = vpop.f32.mrf.mxu0
      %v2153 = vadd.f32 0.0, %v2152
      %v2154 = vpop.f32.mrf.mxu0
      %v2155 = vpop.f32.mrf.mxu0
      %v2156 = vadd.f32 0.0, %v2155
      %v2157 = vpop.f32.mrf.mxu0
      %2158 = vdwg.mxu0
      %2159 = vrot.lane.b32.xlu0 %v1111, 96
      %v2160 = vpop.permute.xlu0 %2159
      %2161 = vrot.lane.b32.xlu0 %v1112, 96
      %v2162 = vpop.permute.xlu0 %2161
      %v2166 = vsel %vm1668, %v2025, 0
      %v2169 = vsel %vm1668, %v2026, 0
      %2171 = vmatprep.subr.bf16.mxu0 0
      %2172 = vmatpush1.bf16.msra.mxu0 0
      %2173 = vmatprep.subr.bf16.mxu0 0
      %2174 = vmatpush1.bf16.msra.mxu0 0
      %2175 = vmatprep.subr.bf16.mxu0 0
      %2176 = vmatpush1.bf16.msra.mxu0 0
      %2177 = vmatprep.subr.bf16.mxu0 0
      %2178 = vmatpush1.bf16.msra.mxu0 0
      %2179 = vmatprep.subr.bf16.mxu0 0
      %2180 = vmatpush1.bf16.msra.mxu0 0
      %2181 = vmatprep.subr.bf16.mxu0 0
      %2182 = vmatpush1.bf16.msra.mxu0 0
      %2183 = vmatprep.subr.bf16.mxu0 0
      %2184 = vmatpush1.bf16.msra.mxu0 %v2162
      %2185 = vmatprep.subr.bf16.mxu0 0
      %2186 = vmatpush1.bf16.msra.mxu0 %v2160
      %2187 = vmatprep.subr.bf16.mxu0 0
      %2188 = vmatpush2.bf16.msra.mxu0 0
      %2189 = vmatprep.subr.bf16.mxu0 0
      %2190 = vmatpush2.bf16.msra.mxu0 0
      %2191 = vmatprep.subr.bf16.mxu0 0
      %2192 = vmatpush2.bf16.msra.mxu0 0
      %2193 = vmatprep.subr.bf16.mxu0 0
      %2194 = vmatpush2.bf16.msra.mxu0 0
      %2195 = vmatprep.subr.bf16.mxu0 0
      %2196 = vmatpush2.bf16.msra.mxu0 0
      %2197 = vmatprep.subr.bf16.mxu0 0
      %2198 = vmatpush2.bf16.msra.mxu0 0
      %2199 = vmatprep.subr.bf16.mxu0 0
      %2200 = vmatpush2.bf16.msra.mxu0 0
      %2201 = vmatprep.subr.bf16.mxu0 0
      %2202 = vmatpush2.bf16.msra.mxu0 0
      %2203 = vmatprep.mubr.bf16.mxu0 0
      %2204 = vmatmul.mubr.bf16.gmra.mxu0 %v2166
      %v2205 = vpop.f32.mrf.mxu0
      %v2206 = vadd.f32 0.0, %v2205
      %v2207 = vpop.f32.mrf.mxu0
      %v2208 = vpop.f32.mrf.mxu0
      %v2209 = vadd.f32 0.0, %v2208
      %v2210 = vpop.f32.mrf.mxu0
      %2211 = vmatprep.mubr.bf16.mxu0 0
      %2212 = vmatmul.mubr.bf16.gmra.mxu0 %v2169
      %v2213 = vpop.f32.mrf.mxu0
      %v2214 = vadd.f32 0.0, %v2213
      %v2215 = vpop.f32.mrf.mxu0
      %v2216 = vpop.f32.mrf.mxu0
      %v2217 = vadd.f32 0.0, %v2216
      %v2218 = vpop.f32.mrf.mxu0
      %2219 = vdwg.mxu0
      %2220 = vrot.lane.b32.xlu0 %v1113, 96
      %v2221 = vpop.permute.xlu0 %2220
      %2222 = vrot.lane.b32.xlu0 %v1114, 96
      %v2223 = vpop.permute.xlu0 %2222
      %v2227 = vsel %vm1668, %v2027, 0
      %v2230 = vsel %vm1668, %v2028, 0
      %2232 = vmatprep.subr.bf16.mxu0 0
      %2233 = vmatpush1.bf16.msra.mxu0 0
      %2234 = vmatprep.subr.bf16.mxu0 0
      %2235 = vmatpush1.bf16.msra.mxu0 0
      %2236 = vmatprep.subr.bf16.mxu0 0
      %2237 = vmatpush1.bf16.msra.mxu0 0
      %2238 = vmatprep.subr.bf16.mxu0 0
      %2239 = vmatpush1.bf16.msra.mxu0 0
      %2240 = vmatprep.subr.bf16.mxu0 0
      %2241 = vmatpush1.bf16.msra.mxu0 0
      %2242 = vmatprep.subr.bf16.mxu0 0
      %2243 = vmatpush1.bf16.msra.mxu0 0
      %2244 = vmatprep.subr.bf16.mxu0 0
      %2245 = vmatpush1.bf16.msra.mxu0 %v2223
      %2246 = vmatprep.subr.bf16.mxu0 0
      %2247 = vmatpush1.bf16.msra.mxu0 %v2221
      %2248 = vmatprep.subr.bf16.mxu0 0
      %2249 = vmatpush2.bf16.msra.mxu0 0
      %2250 = vmatprep.subr.bf16.mxu0 0
      %2251 = vmatpush2.bf16.msra.mxu0 0
      %2252 = vmatprep.subr.bf16.mxu0 0
      %2253 = vmatpush2.bf16.msra.mxu0 0
      %2254 = vmatprep.subr.bf16.mxu0 0
      %2255 = vmatpush2.bf16.msra.mxu0 0
      %2256 = vmatprep.subr.bf16.mxu0 0
      %2257 = vmatpush2.bf16.msra.mxu0 0
      %2258 = vmatprep.subr.bf16.mxu0 0
      %2259 = vmatpush2.bf16.msra.mxu0 0
      %2260 = vmatprep.subr.bf16.mxu0 0
      %2261 = vmatpush2.bf16.msra.mxu0 0
      %2262 = vmatprep.subr.bf16.mxu0 0
      %2263 = vmatpush2.bf16.msra.mxu0 0
      %2264 = vmatprep.mubr.bf16.mxu0 0
      %2265 = vmatmul.mubr.bf16.gmra.mxu0 %v2227
      %v2266 = vpop.f32.mrf.mxu0
      %v2267 = vadd.f32 0.0, %v2266
      %v2268 = vpop.f32.mrf.mxu0
      %v2269 = vpop.f32.mrf.mxu0
      %v2270 = vadd.f32 0.0, %v2269
      %v2271 = vpop.f32.mrf.mxu0
      %2272 = vmatprep.mubr.bf16.mxu0 0
      %2273 = vmatmul.mubr.bf16.gmra.mxu0 %v2230
      %v2274 = vpop.f32.mrf.mxu0
      %v2275 = vadd.f32 0.0, %v2274
      %v2276 = vpop.f32.mrf.mxu0
      %v2277 = vpop.f32.mrf.mxu0
      %v2278 = vadd.f32 0.0, %v2277
      %v2279 = vpop.f32.mrf.mxu0
      %2280 = vdwg.mxu0
      %2281 = vrot.lane.b32.xlu0 %v1115, 96
      %v2282 = vpop.permute.xlu0 %2281
      %2283 = vrot.lane.b32.xlu0 %v1116, 96
      %v2284 = vpop.permute.xlu0 %2283
      %v2288 = vsel %vm1668, %v2029, 0
      %v2291 = vsel %vm1668, %v2030, 0
      %2293 = vmatprep.subr.bf16.mxu0 0
      %2294 = vmatpush1.bf16.msra.mxu0 0
      %2295 = vmatprep.subr.bf16.mxu0 0
      %2296 = vmatpush1.bf16.msra.mxu0 0
      %2297 = vmatprep.subr.bf16.mxu0 0
      %2298 = vmatpush1.bf16.msra.mxu0 0
      %2299 = vmatprep.subr.bf16.mxu0 0
      %2300 = vmatpush1.bf16.msra.mxu0 0
      %2301 = vmatprep.subr.bf16.mxu0 0
      %2302 = vmatpush1.bf16.msra.mxu0 0
      %2303 = vmatprep.subr.bf16.mxu0 0
      %2304 = vmatpush1.bf16.msra.mxu0 0
      %2305 = vmatprep.subr.bf16.mxu0 0
      %2306 = vmatpush1.bf16.msra.mxu0 %v2284
      %2307 = vmatprep.subr.bf16.mxu0 0
      %2308 = vmatpush1.bf16.msra.mxu0 %v2282
      %2309 = vmatprep.subr.bf16.mxu0 0
      %2310 = vmatpush2.bf16.msra.mxu0 0
      %2311 = vmatprep.subr.bf16.mxu0 0
      %2312 = vmatpush2.bf16.msra.mxu0 0
      %2313 = vmatprep.subr.bf16.mxu0 0
      %2314 = vmatpush2.bf16.msra.mxu0 0
      %2315 = vmatprep.subr.bf16.mxu0 0
      %2316 = vmatpush2.bf16.msra.mxu0 0
      %2317 = vmatprep.subr.bf16.mxu0 0
      %2318 = vmatpush2.bf16.msra.mxu0 0
      %2319 = vmatprep.subr.bf16.mxu0 0
      %2320 = vmatpush2.bf16.msra.mxu0 0
      %2321 = vmatprep.subr.bf16.mxu0 0
      %2322 = vmatpush2.bf16.msra.mxu0 0
      %2323 = vmatprep.subr.bf16.mxu0 0
      %2324 = vmatpush2.bf16.msra.mxu0 0
      %2325 = vmatprep.mubr.bf16.mxu0 0
      %2326 = vmatmul.mubr.bf16.gmra.mxu0 %v2288
      %v2327 = vpop.f32.mrf.mxu0
      %v2328 = vadd.f32 0.0, %v2327
      %v2329 = vpop.f32.mrf.mxu0
      %v2330 = vpop.f32.mrf.mxu0
      %v2331 = vadd.f32 0.0, %v2330
      %v2332 = vpop.f32.mrf.mxu0
      %2333 = vmatprep.mubr.bf16.mxu0 0
      %2334 = vmatmul.mubr.bf16.gmra.mxu0 %v2291
      %v2335 = vpop.f32.mrf.mxu0
      %v2336 = vadd.f32 0.0, %v2335
      %v2337 = vpop.f32.mrf.mxu0
      %v2338 = vpop.f32.mrf.mxu0
      %v2339 = vadd.f32 0.0, %v2338
      %v2340 = vpop.f32.mrf.mxu0
      %2341 = vdwg.mxu0
      %2342 = vrot.lane.b32.xlu0 %v1117, 96
      %v2343 = vpop.permute.xlu0 %2342
      %2344 = vrot.lane.b32.xlu0 %v1118, 96
      %v2345 = vpop.permute.xlu0 %2344
      %v2349 = vsel %vm1668, %v2031, 0
      %v2352 = vsel %vm1668, %v2032, 0
      %2354 = vmatprep.subr.bf16.mxu0 0
      %2355 = vmatpush1.bf16.msra.mxu0 0
      %2356 = vmatprep.subr.bf16.mxu0 0
      %2357 = vmatpush1.bf16.msra.mxu0 0
      %2358 = vmatprep.subr.bf16.mxu0 0
      %2359 = vmatpush1.bf16.msra.mxu0 0
      %2360 = vmatprep.subr.bf16.mxu0 0
      %2361 = vmatpush1.bf16.msra.mxu0 0
      %2362 = vmatprep.subr.bf16.mxu0 0
      %2363 = vmatpush1.bf16.msra.mxu0 0
      %2364 = vmatprep.subr.bf16.mxu0 0
      %2365 = vmatpush1.bf16.msra.mxu0 0
      %2366 = vmatprep.subr.bf16.mxu0 0
      %2367 = vmatpush1.bf16.msra.mxu0 %v2345
      %2368 = vmatprep.subr.bf16.mxu0 0
      %2369 = vmatpush1.bf16.msra.mxu0 %v2343
      %2370 = vmatprep.subr.bf16.mxu0 0
      %2371 = vmatpush2.bf16.msra.mxu0 0
      %2372 = vmatprep.subr.bf16.mxu0 0
      %2373 = vmatpush2.bf16.msra.mxu0 0
      %2374 = vmatprep.subr.bf16.mxu0 0
      %2375 = vmatpush2.bf16.msra.mxu0 0
      %2376 = vmatprep.subr.bf16.mxu0 0
      %2377 = vmatpush2.bf16.msra.mxu0 0
      %2378 = vmatprep.subr.bf16.mxu0 0
      %2379 = vmatpush2.bf16.msra.mxu0 0
      %2380 = vmatprep.subr.bf16.mxu0 0
      %2381 = vmatpush2.bf16.msra.mxu0 0
      %2382 = vmatprep.subr.bf16.mxu0 0
      %2383 = vmatpush2.bf16.msra.mxu0 0
      %2384 = vmatprep.subr.bf16.mxu0 0
      %2385 = vmatpush2.bf16.msra.mxu0 0
      %2386 = vmatprep.mubr.bf16.mxu0 0
      %2387 = vmatmul.mubr.bf16.gmra.mxu0 %v2349
      %v2388 = vpop.f32.mrf.mxu0
      %v2389 = vadd.f32 0.0, %v2388
      %v2390 = vpop.f32.mrf.mxu0
      %v2391 = vpop.f32.mrf.mxu0
      %v2392 = vadd.f32 0.0, %v2391
      %v2393 = vpop.f32.mrf.mxu0
      %2394 = vmatprep.mubr.bf16.mxu0 0
      %2395 = vmatmul.mubr.bf16.gmra.mxu0 %v2352
      %v2396 = vpop.f32.mrf.mxu0
      %v2397 = vadd.f32 0.0, %v2396
      %v2398 = vpop.f32.mrf.mxu0
      %v2399 = vpop.f32.mrf.mxu0
      %v2400 = vadd.f32 0.0, %v2399
      %v2401 = vpop.f32.mrf.mxu0
      %2402 = vdwg.mxu0
      %2403 = vrot.lane.b32.xlu0 %v1119, 96
      %v2404 = vpop.permute.xlu0 %2403
      %2405 = vrot.lane.b32.xlu0 %v1120, 96
      %v2406 = vpop.permute.xlu0 %2405
      %v2410 = vsel %vm1668, %v2033, 0
      %v2413 = vsel %vm1668, %v2034, 0
      %2415 = vmatprep.subr.bf16.mxu0 0
      %2416 = vmatpush1.bf16.msra.mxu0 0
      %2417 = vmatprep.subr.bf16.mxu0 0
      %2418 = vmatpush1.bf16.msra.mxu0 0
      %2419 = vmatprep.subr.bf16.mxu0 0
      %2420 = vmatpush1.bf16.msra.mxu0 0
      %2421 = vmatprep.subr.bf16.mxu0 0
      %2422 = vmatpush1.bf16.msra.mxu0 0
      %2423 = vmatprep.subr.bf16.mxu0 0
      %2424 = vmatpush1.bf16.msra.mxu0 0
      %2425 = vmatprep.subr.bf16.mxu0 0
      %2426 = vmatpush1.bf16.msra.mxu0 0
      %2427 = vmatprep.subr.bf16.mxu0 0
      %2428 = vmatpush1.bf16.msra.mxu0 %v2406
      %2429 = vmatprep.subr.bf16.mxu0 0
      %2430 = vmatpush1.bf16.msra.mxu0 %v2404
      %2431 = vmatprep.subr.bf16.mxu0 0
      %2432 = vmatpush2.bf16.msra.mxu0 0
      %2433 = vmatprep.subr.bf16.mxu0 0
      %2434 = vmatpush2.bf16.msra.mxu0 0
      %2435 = vmatprep.subr.bf16.mxu0 0
      %2436 = vmatpush2.bf16.msra.mxu0 0
      %2437 = vmatprep.subr.bf16.mxu0 0
      %2438 = vmatpush2.bf16.msra.mxu0 0
      %2439 = vmatprep.subr.bf16.mxu0 0
      %2440 = vmatpush2.bf16.msra.mxu0 0
      %2441 = vmatprep.subr.bf16.mxu0 0
      %2442 = vmatpush2.bf16.msra.mxu0 0
      %2443 = vmatprep.subr.bf16.mxu0 0
      %2444 = vmatpush2.bf16.msra.mxu0 0
      %2445 = vmatprep.subr.bf16.mxu0 0
      %2446 = vmatpush2.bf16.msra.mxu0 0
      %2447 = vmatprep.mubr.bf16.mxu0 0
      %2448 = vmatmul.mubr.bf16.gmra.mxu0 %v2410
      %v2449 = vpop.f32.mrf.mxu0
      %v2450 = vadd.f32 0.0, %v2449
      %v2451 = vpop.f32.mrf.mxu0
      %v2452 = vpop.f32.mrf.mxu0
      %v2453 = vadd.f32 0.0, %v2452
      %v2454 = vpop.f32.mrf.mxu0
      %2455 = vmatprep.mubr.bf16.mxu0 0
      %2456 = vmatmul.mubr.bf16.gmra.mxu0 %v2413
      %v2457 = vpop.f32.mrf.mxu0
      %v2458 = vadd.f32 0.0, %v2457
      %v2459 = vpop.f32.mrf.mxu0
      %v2460 = vpop.f32.mrf.mxu0
      %v2461 = vadd.f32 0.0, %v2460
      %v2462 = vpop.f32.mrf.mxu0
      %2463 = vdwg.mxu0
      %2464 = vrot.lane.b32.xlu0 %v1121, 96
      %v2465 = vpop.permute.xlu0 %2464
      %2466 = vrot.lane.b32.xlu0 %v1122, 96
      %v2467 = vpop.permute.xlu0 %2466
      %v2471 = vsel %vm1668, %v2035, 0
      %v2474 = vsel %vm1668, %v2036, 0
      %2476 = vmatprep.subr.bf16.mxu0 0
      %2477 = vmatpush1.bf16.msra.mxu0 0
      %2478 = vmatprep.subr.bf16.mxu0 0
      %2479 = vmatpush1.bf16.msra.mxu0 0
      %2480 = vmatprep.subr.bf16.mxu0 0
      %2481 = vmatpush1.bf16.msra.mxu0 0
      %2482 = vmatprep.subr.bf16.mxu0 0
      %2483 = vmatpush1.bf16.msra.mxu0 0
      %2484 = vmatprep.subr.bf16.mxu0 0
      %2485 = vmatpush1.bf16.msra.mxu0 0
      %2486 = vmatprep.subr.bf16.mxu0 0
      %2487 = vmatpush1.bf16.msra.mxu0 0
      %2488 = vmatprep.subr.bf16.mxu0 0
      %2489 = vmatpush1.bf16.msra.mxu0 %v2467
      %2490 = vmatprep.subr.bf16.mxu0 0
      %2491 = vmatpush1.bf16.msra.mxu0 %v2465
      %2492 = vmatprep.subr.bf16.mxu0 0
      %2493 = vmatpush2.bf16.msra.mxu0 0
      %2494 = vmatprep.subr.bf16.mxu0 0
      %2495 = vmatpush2.bf16.msra.mxu0 0
      %2496 = vmatprep.subr.bf16.mxu0 0
      %2497 = vmatpush2.bf16.msra.mxu0 0
      %2498 = vmatprep.subr.bf16.mxu0 0
      %2499 = vmatpush2.bf16.msra.mxu0 0
      %2500 = vmatprep.subr.bf16.mxu0 0
      %2501 = vmatpush2.bf16.msra.mxu0 0
      %2502 = vmatprep.subr.bf16.mxu0 0
      %2503 = vmatpush2.bf16.msra.mxu0 0
      %2504 = vmatprep.subr.bf16.mxu0 0
      %2505 = vmatpush2.bf16.msra.mxu0 0
      %2506 = vmatprep.subr.bf16.mxu0 0
      %2507 = vmatpush2.bf16.msra.mxu0 0
      %2508 = vmatprep.mubr.bf16.mxu0 0
      %2509 = vmatmul.mubr.bf16.gmra.mxu0 %v2471
      %v2510 = vpop.f32.mrf.mxu0
      %v2511 = vadd.f32 0.0, %v2510
      %v2512 = vpop.f32.mrf.mxu0
      %v2513 = vpop.f32.mrf.mxu0
      %v2514 = vadd.f32 0.0, %v2513
      %v2515 = vpop.f32.mrf.mxu0
      %2516 = vmatprep.mubr.bf16.mxu0 0
      %2517 = vmatmul.mubr.bf16.gmra.mxu0 %v2474
      %v2518 = vpop.f32.mrf.mxu0
      %v2519 = vadd.f32 0.0, %v2518
      %v2520 = vpop.f32.mrf.mxu0
      %v2521 = vpop.f32.mrf.mxu0
      %v2522 = vadd.f32 0.0, %v2521
      %v2523 = vpop.f32.mrf.mxu0
      %2524 = vdwg.mxu0
      %v2525 = vpack.c.bf16 %v2087, %v2084
      %v2526 = vpack.c.bf16 %v2095, %v2092
      %v2527 = vpack.c.bf16 %v2148, %v2145
      %v2528 = vpack.c.bf16 %v2156, %v2153
      %v2529 = vpack.c.bf16 %v2209, %v2206
      %v2530 = vpack.c.bf16 %v2217, %v2214
      %v2531 = vpack.c.bf16 %v2270, %v2267
      %v2532 = vpack.c.bf16 %v2278, %v2275
      %v2533 = vpack.c.bf16 %v2331, %v2328
      %v2534 = vpack.c.bf16 %v2339, %v2336
      %v2535 = vpack.c.bf16 %v2392, %v2389
      %v2536 = vpack.c.bf16 %v2400, %v2397
      %v2537 = vpack.c.bf16 %v2453, %v2450
      %v2538 = vpack.c.bf16 %v2461, %v2458
      %v2539 = vpack.c.bf16 %v2514, %v2511
      %v2540 = vpack.c.bf16 %v2522, %v2519
      %v2557 = vunpack.c.l.b16 %v2525
      %v2558 = vunpack.c.h.b16 %v2525
      %v2559 = vunpack.c.l.b16 %v2526
      %v2560 = vunpack.c.h.b16 %v2526
      %v2561 = vunpack.c.l.b16 %v2527
      %v2562 = vunpack.c.h.b16 %v2527
      %v2563 = vunpack.c.l.b16 %v2528
      %v2564 = vunpack.c.h.b16 %v2528
      %v2565 = vunpack.c.l.b16 %v2529
      %v2566 = vunpack.c.h.b16 %v2529
      %v2567 = vunpack.c.l.b16 %v2530
      %v2568 = vunpack.c.h.b16 %v2530
      %v2569 = vunpack.c.l.b16 %v2531
      %v2570 = vunpack.c.h.b16 %v2531
      %v2571 = vunpack.c.l.b16 %v2532
      %v2572 = vunpack.c.h.b16 %v2532
      %v2573 = vunpack.c.l.b16 %v2533
      %v2574 = vunpack.c.h.b16 %v2533
      %v2575 = vunpack.c.l.b16 %v2534
      %v2576 = vunpack.c.h.b16 %v2534
      %v2577 = vunpack.c.l.b16 %v2535
      %v2578 = vunpack.c.h.b16 %v2535
      %v2579 = vunpack.c.l.b16 %v2536
      %v2580 = vunpack.c.h.b16 %v2536
      %v2581 = vunpack.c.l.b16 %v2537
      %v2582 = vunpack.c.h.b16 %v2537
      %v2583 = vunpack.c.l.b16 %v2538
      %v2584 = vunpack.c.h.b16 %v2538
      %v2585 = vunpack.c.l.b16 %v2539
      %v2586 = vunpack.c.h.b16 %v2539
      %v2587 = vunpack.c.l.b16 %v2540
      %v2588 = vunpack.c.h.b16 %v2540
      %v2589 = vpack.c.b16 %v2557, %v2557
      %v2590 = vpack.c.b16 %v2558, %v2558
      %v2591 = vpack.c.b16 %v2559, %v2559
      %v2592 = vpack.c.b16 %v2560, %v2560
      %v2593 = vpack.c.b16 %v2561, %v2561
      %v2594 = vpack.c.b16 %v2562, %v2562
      %v2595 = vpack.c.b16 %v2563, %v2563
      %v2596 = vpack.c.b16 %v2564, %v2564
      %v2597 = vpack.c.b16 %v2565, %v2565
      %v2598 = vpack.c.b16 %v2566, %v2566
      %v2599 = vpack.c.b16 %v2567, %v2567
      %v2600 = vpack.c.b16 %v2568, %v2568
      %v2601 = vpack.c.b16 %v2569, %v2569
      %v2602 = vpack.c.b16 %v2570, %v2570
      %v2603 = vpack.c.b16 %v2571, %v2571
      %v2604 = vpack.c.b16 %v2572, %v2572
      %v2605 = vpack.c.b16 %v2573, %v2573
      %v2606 = vpack.c.b16 %v2574, %v2574
      %v2607 = vpack.c.b16 %v2575, %v2575
      %v2608 = vpack.c.b16 %v2576, %v2576
      %v2609 = vpack.c.b16 %v2577, %v2577
      %v2610 = vpack.c.b16 %v2578, %v2578
      %v2611 = vpack.c.b16 %v2579, %v2579
      %v2612 = vpack.c.b16 %v2580, %v2580
      %v2613 = vpack.c.b16 %v2581, %v2581
      %v2614 = vpack.c.b16 %v2582, %v2582
      %v2615 = vpack.c.b16 %v2583, %v2583
      %v2616 = vpack.c.b16 %v2584, %v2584
      %v2617 = vpack.c.b16 %v2585, %v2585
      %v2618 = vpack.c.b16 %v2586, %v2586
      %v2619 = vpack.c.b16 %v2587, %v2587
      %v2620 = vpack.c.b16 %v2588, %v2588
      %vm2653 = vcmask 60416
      %2654 = vst.msk [vmem:[#allocation2] sm:$0xf] %vm2653, %v2589
      %2655 = vst.msk [vmem:[#allocation2 + $0x4] sm:$0xf] %vm2653, %v2590
      %2656 = vst.msk [vmem:[#allocation2 + $0x8] sm:$0xf] %vm2653, %v2591
      %2657 = vst.msk [vmem:[#allocation2 + $0xc] sm:$0xf] %vm2653, %v2592
      %2658 = vst.msk [vmem:[#allocation2 + $0x10] sm:$0xf] %vm2653, %v2593
      %2659 = vst.msk [vmem:[#allocation2 + $0x14] sm:$0xf] %vm2653, %v2594
      %2660 = vst.msk [vmem:[#allocation2 + $0x18] sm:$0xf] %vm2653, %v2595
      %2661 = vst.msk [vmem:[#allocation2 + $0x1c] sm:$0xf] %vm2653, %v2596
      %2662 = vst.msk [vmem:[#allocation2 + $0x20] sm:$0xf] %vm2653, %v2597
      %2663 = vst.msk [vmem:[#allocation2 + $0x24] sm:$0xf] %vm2653, %v2598
      %2664 = vst.msk [vmem:[#allocation2 + $0x28] sm:$0xf] %vm2653, %v2599
      %2665 = vst.msk [vmem:[#allocation2 + $0x2c] sm:$0xf] %vm2653, %v2600
      %2666 = vst.msk [vmem:[#allocation2 + $0x30] sm:$0xf] %vm2653, %v2601
      %2667 = vst.msk [vmem:[#allocation2 + $0x34] sm:$0xf] %vm2653, %v2602
      %2668 = vst.msk [vmem:[#allocation2 + $0x38] sm:$0xf] %vm2653, %v2603
      %2669 = vst.msk [vmem:[#allocation2 + $0x3c] sm:$0xf] %vm2653, %v2604
      %2670 = vst.msk [vmem:[#allocation2 + $0x40] sm:$0xf] %vm2653, %v2605
      %2671 = vst.msk [vmem:[#allocation2 + $0x44] sm:$0xf] %vm2653, %v2606
      %2672 = vst.msk [vmem:[#allocation2 + $0x48] sm:$0xf] %vm2653, %v2607
      %2673 = vst.msk [vmem:[#allocation2 + $0x4c] sm:$0xf] %vm2653, %v2608
      %2674 = vst.msk [vmem:[#allocation2 + $0x50] sm:$0xf] %vm2653, %v2609
      %2675 = vst.msk [vmem:[#allocation2 + $0x54] sm:$0xf] %vm2653, %v2610
      %2676 = vst.msk [vmem:[#allocation2 + $0x58] sm:$0xf] %vm2653, %v2611
      %2677 = vst.msk [vmem:[#allocation2 + $0x5c] sm:$0xf] %vm2653, %v2612
      %2678 = vst.msk [vmem:[#allocation2 + $0x60] sm:$0xf] %vm2653, %v2613
      %2679 = vst.msk [vmem:[#allocation2 + $0x64] sm:$0xf] %vm2653, %v2614
      %2680 = vst.msk [vmem:[#allocation2 + $0x68] sm:$0xf] %vm2653, %v2615
      %2681 = vst.msk [vmem:[#allocation2 + $0x6c] sm:$0xf] %vm2653, %v2616
      %2682 = vst.msk [vmem:[#allocation2 + $0x70] sm:$0xf] %vm2653, %v2617
      %2683 = vst.msk [vmem:[#allocation2 + $0x74] sm:$0xf] %vm2653, %v2618
      %2684 = vst.msk [vmem:[#allocation2 + $0x78] sm:$0xf] %vm2653, %v2619
      %2685 = vst.msk [vmem:[#allocation2 + $0x7c] sm:$0xf] %vm2653, %v2620
      %s2686 = scalar_lea.vmem %s3, 16
      %v2687 = vld [vmem:[%s2686] sm:$0xf]
      %v2688 = vld [vmem:[%s2686 + $0x4] sm:$0xf]
      %v2689 = vld [vmem:[%s2686 + $0x8] sm:$0xf]
      %v2690 = vld [vmem:[%s2686 + $0xc] sm:$0xf]
      %v2691 = vunpack.c.l.bf16 %v2687
      %v2692 = vunpack.c.l.bf16 %v2688
      %v2693 = vunpack.c.l.bf16 %v2689
      %v2694 = vunpack.c.l.bf16 %v2690
      %2695 = vrot.lane.b32.xlu0 %v1107, 120
      %v2696 = vpop.permute.xlu0 %2695
      %2697 = vrot.lane.b32.xlu0 %v1108, 120
      %v2698 = vpop.permute.xlu0 %2697
      %2699 = vrot.lane.b32.xlu0 %v1107, 104
      %v2700 = vpop.permute.xlu0 %2699
      %2701 = vrot.lane.b32.xlu0 %v1108, 104
      %v2702 = vpop.permute.xlu0 %2701
      %v2704 = vsel %vm1137, %v2696, 0
      %v2707 = vsel %vm1137, %v2698, 0
      %v2710 = vsel %vm1137, %v2700, 0
      %v2713 = vsel %vm1137, %v2702, 0
      %2715 = vmatprep.subr.bf16.mxu0 0
      %2716 = vmatpush1.bf16.xpose.msra.mxu0 0
      %2717 = vmatprep.subr.bf16.mxu0 0
      %2718 = vmatpush1.bf16.xpose.msra.mxu0 0
      %2719 = vmatprep.subr.bf16.mxu0 0
      %2720 = vmatpush1.bf16.xpose.msra.mxu0 0
      %2721 = vmatprep.subr.bf16.mxu0 0
      %2722 = vmatpush1.bf16.xpose.msra.mxu0 0
      %2723 = vmatprep.subr.bf16.mxu0 0
      %2724 = vmatpush1.bf16.xpose.msra.mxu0 0
      %2725 = vmatprep.subr.bf16.mxu0 0
      %2726 = vmatpush1.bf16.xpose.msra.mxu0 0
      %2727 = vmatprep.subr.bf16.mxu0 0
      %2728 = vmatpush1.bf16.xpose.msra.mxu0 %v2713
      %2729 = vmatprep.subr.bf16.mxu0 0
      %2730 = vmatpush1.bf16.xpose.msra.mxu0 %v2710
      %2731 = vmatprep.subr.bf16.mxu0 0
      %2732 = vmatpush2.bf16.xpose.msra.mxu0 0
      %2733 = vmatprep.subr.bf16.mxu0 0
      %2734 = vmatpush2.bf16.xpose.msra.mxu0 0
      %2735 = vmatprep.subr.bf16.mxu0 0
      %2736 = vmatpush2.bf16.xpose.msra.mxu0 0
      %2737 = vmatprep.subr.bf16.mxu0 0
      %2738 = vmatpush2.bf16.xpose.msra.mxu0 0
      %2739 = vmatprep.subr.bf16.mxu0 0
      %2740 = vmatpush2.bf16.xpose.msra.mxu0 0
      %2741 = vmatprep.subr.bf16.mxu0 0
      %2742 = vmatpush2.bf16.xpose.msra.mxu0 0
      %2743 = vmatprep.subr.bf16.mxu0 0
      %2744 = vmatpush2.bf16.xpose.msra.mxu0 0
      %2745 = vmatprep.subr.bf16.mxu0 0
      %2746 = vmatpush2.bf16.xpose.msra.mxu0 0
      %2747 = vmatprep.mubr.bf16.mxu0 0
      %2748 = vmatmul.mubr.bf16.gmra.mxu0 %v2704
      %v2749 = vpop.f32.mrf.mxu0
      %v2750 = vadd.f32 %v2691, %v2749
      %v2751 = vpop.f32.mrf.mxu0
      %v2752 = vpop.f32.mrf.mxu0
      %v2753 = vadd.f32 %v2692, %v2752
      %v2754 = vpop.f32.mrf.mxu0
      %2755 = vmatprep.mubr.bf16.mxu0 0
      %2756 = vmatmul.mubr.bf16.gmra.mxu0 %v2707
      %v2757 = vpop.f32.mrf.mxu0
      %v2758 = vadd.f32 %v2693, %v2757
      %v2759 = vpop.f32.mrf.mxu0
      %v2760 = vpop.f32.mrf.mxu0
      %v2761 = vadd.f32 %v2694, %v2760
      %v2762 = vpop.f32.mrf.mxu0
      %2763 = vdwg.mxu0
      %2764 = vrot.lane.b32.xlu0 %v1109, 120
      %v2765 = vpop.permute.xlu0 %2764
      %2766 = vrot.lane.b32.xlu0 %v1110, 120
      %v2767 = vpop.permute.xlu0 %2766
      %2768 = vrot.lane.b32.xlu0 %v1109, 104
      %v2769 = vpop.permute.xlu0 %2768
      %2770 = vrot.lane.b32.xlu0 %v1110, 104
      %v2771 = vpop.permute.xlu0 %2770
      %v2773 = vsel %vm1137, %v2765, 0
      %v2776 = vsel %vm1137, %v2767, 0
      %v2779 = vsel %vm1137, %v2769, 0
      %v2782 = vsel %vm1137, %v2771, 0
      %2784 = vmatprep.subr.bf16.mxu0 0
      %2785 = vmatpush1.bf16.xpose.msra.mxu0 0
      %2786 = vmatprep.subr.bf16.mxu0 0
      %2787 = vmatpush1.bf16.xpose.msra.mxu0 0
      %2788 = vmatprep.subr.bf16.mxu0 0
      %2789 = vmatpush1.bf16.xpose.msra.mxu0 0
      %2790 = vmatprep.subr.bf16.mxu0 0
      %2791 = vmatpush1.bf16.xpose.msra.mxu0 0
      %2792 = vmatprep.subr.bf16.mxu0 0
      %2793 = vmatpush1.bf16.xpose.msra.mxu0 0
      %2794 = vmatprep.subr.bf16.mxu0 0
      %2795 = vmatpush1.bf16.xpose.msra.mxu0 0
      %2796 = vmatprep.subr.bf16.mxu0 0
      %2797 = vmatpush1.bf16.xpose.msra.mxu0 %v2782
      %2798 = vmatprep.subr.bf16.mxu0 0
      %2799 = vmatpush1.bf16.xpose.msra.mxu0 %v2779
      %2800 = vmatprep.subr.bf16.mxu0 0
      %2801 = vmatpush2.bf16.xpose.msra.mxu0 0
      %2802 = vmatprep.subr.bf16.mxu0 0
      %2803 = vmatpush2.bf16.xpose.msra.mxu0 0
      %2804 = vmatprep.subr.bf16.mxu0 0
      %2805 = vmatpush2.bf16.xpose.msra.mxu0 0
      %2806 = vmatprep.subr.bf16.mxu0 0
      %2807 = vmatpush2.bf16.xpose.msra.mxu0 0
      %2808 = vmatprep.subr.bf16.mxu0 0
      %2809 = vmatpush2.bf16.xpose.msra.mxu0 0
      %2810 = vmatprep.subr.bf16.mxu0 0
      %2811 = vmatpush2.bf16.xpose.msra.mxu0 0
      %2812 = vmatprep.subr.bf16.mxu0 0
      %2813 = vmatpush2.bf16.xpose.msra.mxu0 0
      %2814 = vmatprep.subr.bf16.mxu0 0
      %2815 = vmatpush2.bf16.xpose.msra.mxu0 0
      %2816 = vmatprep.mubr.bf16.mxu0 0
      %2817 = vmatmul.mubr.bf16.gmra.mxu0 %v2773
      %v2818 = vpop.f32.mrf.mxu0
      %v2819 = vadd.f32 %v2691, %v2818
      %v2820 = vpop.f32.mrf.mxu0
      %v2821 = vpop.f32.mrf.mxu0
      %v2822 = vadd.f32 %v2692, %v2821
      %v2823 = vpop.f32.mrf.mxu0
      %2824 = vmatprep.mubr.bf16.mxu0 0
      %2825 = vmatmul.mubr.bf16.gmra.mxu0 %v2776
      %v2826 = vpop.f32.mrf.mxu0
      %v2827 = vadd.f32 %v2693, %v2826
      %v2828 = vpop.f32.mrf.mxu0
      %v2829 = vpop.f32.mrf.mxu0
      %v2830 = vadd.f32 %v2694, %v2829
      %v2831 = vpop.f32.mrf.mxu0
      %2832 = vdwg.mxu0
      %2833 = vrot.lane.b32.xlu0 %v1111, 120
      %v2834 = vpop.permute.xlu0 %2833
      %2835 = vrot.lane.b32.xlu0 %v1112, 120
      %v2836 = vpop.permute.xlu0 %2835
      %2837 = vrot.lane.b32.xlu0 %v1111, 104
      %v2838 = vpop.permute.xlu0 %2837
      %2839 = vrot.lane.b32.xlu0 %v1112, 104
      %v2840 = vpop.permute.xlu0 %2839
      %v2842 = vsel %vm1137, %v2834, 0
      %v2845 = vsel %vm1137, %v2836, 0
      %v2848 = vsel %vm1137, %v2838, 0
      %v2851 = vsel %vm1137, %v2840, 0
      %2853 = vmatprep.subr.bf16.mxu0 0
      %2854 = vmatpush1.bf16.xpose.msra.mxu0 0
      %2855 = vmatprep.subr.bf16.mxu0 0
      %2856 = vmatpush1.bf16.xpose.msra.mxu0 0
      %2857 = vmatprep.subr.bf16.mxu0 0
      %2858 = vmatpush1.bf16.xpose.msra.mxu0 0
      %2859 = vmatprep.subr.bf16.mxu0 0
      %2860 = vmatpush1.bf16.xpose.msra.mxu0 0
      %2861 = vmatprep.subr.bf16.mxu0 0
      %2862 = vmatpush1.bf16.xpose.msra.mxu0 0
      %2863 = vmatprep.subr.bf16.mxu0 0
      %2864 = vmatpush1.bf16.xpose.msra.mxu0 0
      %2865 = vmatprep.subr.bf16.mxu0 0
      %2866 = vmatpush1.bf16.xpose.msra.mxu0 %v2851
      %2867 = vmatprep.subr.bf16.mxu0 0
      %2868 = vmatpush1.bf16.xpose.msra.mxu0 %v2848
      %2869 = vmatprep.subr.bf16.mxu0 0
      %2870 = vmatpush2.bf16.xpose.msra.mxu0 0
      %2871 = vmatprep.subr.bf16.mxu0 0
      %2872 = vmatpush2.bf16.xpose.msra.mxu0 0
      %2873 = vmatprep.subr.bf16.mxu0 0
      %2874 = vmatpush2.bf16.xpose.msra.mxu0 0
      %2875 = vmatprep.subr.bf16.mxu0 0
      %2876 = vmatpush2.bf16.xpose.msra.mxu0 0
      %2877 = vmatprep.subr.bf16.mxu0 0
      %2878 = vmatpush2.bf16.xpose.msra.mxu0 0
      %2879 = vmatprep.subr.bf16.mxu0 0
      %2880 = vmatpush2.bf16.xpose.msra.mxu0 0
      %2881 = vmatprep.subr.bf16.mxu0 0
      %2882 = vmatpush2.bf16.xpose.msra.mxu0 0
      %2883 = vmatprep.subr.bf16.mxu0 0
      %2884 = vmatpush2.bf16.xpose.msra.mxu0 0
      %2885 = vmatprep.mubr.bf16.mxu0 0
      %2886 = vmatmul.mubr.bf16.gmra.mxu0 %v2842
      %v2887 = vpop.f32.mrf.mxu0
      %v2888 = vadd.f32 %v2691, %v2887
      %v2889 = vpop.f32.mrf.mxu0
      %v2890 = vpop.f32.mrf.mxu0
      %v2891 = vadd.f32 %v2692, %v2890
      %v2892 = vpop.f32.mrf.mxu0
      %2893 = vmatprep.mubr.bf16.mxu0 0
      %2894 = vmatmul.mubr.bf16.gmra.mxu0 %v2845
      %v2895 = vpop.f32.mrf.mxu0
      %v2896 = vadd.f32 %v2693, %v2895
      %v2897 = vpop.f32.mrf.mxu0
      %v2898 = vpop.f32.mrf.mxu0
      %v2899 = vadd.f32 %v2694, %v2898
      %v2900 = vpop.f32.mrf.mxu0
      %2901 = vdwg.mxu0
      %2902 = vrot.lane.b32.xlu0 %v1113, 120
      %v2903 = vpop.permute.xlu0 %2902
      %2904 = vrot.lane.b32.xlu0 %v1114, 120
      %v2905 = vpop.permute.xlu0 %2904
      %2906 = vrot.lane.b32.xlu0 %v1113, 104
      %v2907 = vpop.permute.xlu0 %2906
      %2908 = vrot.lane.b32.xlu0 %v1114, 104
      %v2909 = vpop.permute.xlu0 %2908
      %v2911 = vsel %vm1137, %v2903, 0
      %v2914 = vsel %vm1137, %v2905, 0
      %v2917 = vsel %vm1137, %v2907, 0
      %v2920 = vsel %vm1137, %v2909, 0
      %2922 = vmatprep.subr.bf16.mxu0 0
      %2923 = vmatpush1.bf16.xpose.msra.mxu0 0
      %2924 = vmatprep.subr.bf16.mxu0 0
      %2925 = vmatpush1.bf16.xpose.msra.mxu0 0
      %2926 = vmatprep.subr.bf16.mxu0 0
      %2927 = vmatpush1.bf16.xpose.msra.mxu0 0
      %2928 = vmatprep.subr.bf16.mxu0 0
      %2929 = vmatpush1.bf16.xpose.msra.mxu0 0
      %2930 = vmatprep.subr.bf16.mxu0 0
      %2931 = vmatpush1.bf16.xpose.msra.mxu0 0
      %2932 = vmatprep.subr.bf16.mxu0 0
      %2933 = vmatpush1.bf16.xpose.msra.mxu0 0
      %2934 = vmatprep.subr.bf16.mxu0 0
      %2935 = vmatpush1.bf16.xpose.msra.mxu0 %v2920
      %2936 = vmatprep.subr.bf16.mxu0 0
      %2937 = vmatpush1.bf16.xpose.msra.mxu0 %v2917
      %2938 = vmatprep.subr.bf16.mxu0 0
      %2939 = vmatpush2.bf16.xpose.msra.mxu0 0
      %2940 = vmatprep.subr.bf16.mxu0 0
      %2941 = vmatpush2.bf16.xpose.msra.mxu0 0
      %2942 = vmatprep.subr.bf16.mxu0 0
      %2943 = vmatpush2.bf16.xpose.msra.mxu0 0
      %2944 = vmatprep.subr.bf16.mxu0 0
      %2945 = vmatpush2.bf16.xpose.msra.mxu0 0
      %2946 = vmatprep.subr.bf16.mxu0 0
      %2947 = vmatpush2.bf16.xpose.msra.mxu0 0
      %2948 = vmatprep.subr.bf16.mxu0 0
      %2949 = vmatpush2.bf16.xpose.msra.mxu0 0
      %2950 = vmatprep.subr.bf16.mxu0 0
      %2951 = vmatpush2.bf16.xpose.msra.mxu0 0
      %2952 = vmatprep.subr.bf16.mxu0 0
      %2953 = vmatpush2.bf16.xpose.msra.mxu0 0
      %2954 = vmatprep.mubr.bf16.mxu0 0
      %2955 = vmatmul.mubr.bf16.gmra.mxu0 %v2911
      %v2956 = vpop.f32.mrf.mxu0
      %v2957 = vadd.f32 %v2691, %v2956
      %v2958 = vpop.f32.mrf.mxu0
      %v2959 = vpop.f32.mrf.mxu0
      %v2960 = vadd.f32 %v2692, %v2959
      %v2961 = vpop.f32.mrf.mxu0
      %2962 = vmatprep.mubr.bf16.mxu0 0
      %2963 = vmatmul.mubr.bf16.gmra.mxu0 %v2914
      %v2964 = vpop.f32.mrf.mxu0
      %v2965 = vadd.f32 %v2693, %v2964
      %v2966 = vpop.f32.mrf.mxu0
      %v2967 = vpop.f32.mrf.mxu0
      %v2968 = vadd.f32 %v2694, %v2967
      %v2969 = vpop.f32.mrf.mxu0
      %2970 = vdwg.mxu0
      %2971 = vrot.lane.b32.xlu0 %v1115, 120
      %v2972 = vpop.permute.xlu0 %2971
      %2973 = vrot.lane.b32.xlu0 %v1116, 120
      %v2974 = vpop.permute.xlu0 %2973
      %2975 = vrot.lane.b32.xlu0 %v1115, 104
      %v2976 = vpop.permute.xlu0 %2975
      %2977 = vrot.lane.b32.xlu0 %v1116, 104
      %v2978 = vpop.permute.xlu0 %2977
      %v2980 = vsel %vm1137, %v2972, 0
      %v2983 = vsel %vm1137, %v2974, 0
      %v2986 = vsel %vm1137, %v2976, 0
      %v2989 = vsel %vm1137, %v2978, 0
      %2991 = vmatprep.subr.bf16.mxu0 0
      %2992 = vmatpush1.bf16.xpose.msra.mxu0 0
      %2993 = vmatprep.subr.bf16.mxu0 0
      %2994 = vmatpush1.bf16.xpose.msra.mxu0 0
      %2995 = vmatprep.subr.bf16.mxu0 0
      %2996 = vmatpush1.bf16.xpose.msra.mxu0 0
      %2997 = vmatprep.subr.bf16.mxu0 0
      %2998 = vmatpush1.bf16.xpose.msra.mxu0 0
      %2999 = vmatprep.subr.bf16.mxu0 0
      %3000 = vmatpush1.bf16.xpose.msra.mxu0 0
      %3001 = vmatprep.subr.bf16.mxu0 0
      %3002 = vmatpush1.bf16.xpose.msra.mxu0 0
      %3003 = vmatprep.subr.bf16.mxu0 0
      %3004 = vmatpush1.bf16.xpose.msra.mxu0 %v2989
      %3005 = vmatprep.subr.bf16.mxu0 0
      %3006 = vmatpush1.bf16.xpose.msra.mxu0 %v2986
      %3007 = vmatprep.subr.bf16.mxu0 0
      %3008 = vmatpush2.bf16.xpose.msra.mxu0 0
      %3009 = vmatprep.subr.bf16.mxu0 0
      %3010 = vmatpush2.bf16.xpose.msra.mxu0 0
      %3011 = vmatprep.subr.bf16.mxu0 0
      %3012 = vmatpush2.bf16.xpose.msra.mxu0 0
      %3013 = vmatprep.subr.bf16.mxu0 0
      %3014 = vmatpush2.bf16.xpose.msra.mxu0 0
      %3015 = vmatprep.subr.bf16.mxu0 0
      %3016 = vmatpush2.bf16.xpose.msra.mxu0 0
      %3017 = vmatprep.subr.bf16.mxu0 0
      %3018 = vmatpush2.bf16.xpose.msra.mxu0 0
      %3019 = vmatprep.subr.bf16.mxu0 0
      %3020 = vmatpush2.bf16.xpose.msra.mxu0 0
      %3021 = vmatprep.subr.bf16.mxu0 0
      %3022 = vmatpush2.bf16.xpose.msra.mxu0 0
      %3023 = vmatprep.mubr.bf16.mxu0 0
      %3024 = vmatmul.mubr.bf16.gmra.mxu0 %v2980
      %v3025 = vpop.f32.mrf.mxu0
      %v3026 = vadd.f32 %v2691, %v3025
      %v3027 = vpop.f32.mrf.mxu0
      %v3028 = vpop.f32.mrf.mxu0
      %v3029 = vadd.f32 %v2692, %v3028
      %v3030 = vpop.f32.mrf.mxu0
      %3031 = vmatprep.mubr.bf16.mxu0 0
      %3032 = vmatmul.mubr.bf16.gmra.mxu0 %v2983
      %v3033 = vpop.f32.mrf.mxu0
      %v3034 = vadd.f32 %v2693, %v3033
      %v3035 = vpop.f32.mrf.mxu0
      %v3036 = vpop.f32.mrf.mxu0
      %v3037 = vadd.f32 %v2694, %v3036
      %v3038 = vpop.f32.mrf.mxu0
      %3039 = vdwg.mxu0
      %3040 = vrot.lane.b32.xlu0 %v1117, 120
      %v3041 = vpop.permute.xlu0 %3040
      %3042 = vrot.lane.b32.xlu0 %v1118, 120
      %v3043 = vpop.permute.xlu0 %3042
      %3044 = vrot.lane.b32.xlu0 %v1117, 104
      %v3045 = vpop.permute.xlu0 %3044
      %3046 = vrot.lane.b32.xlu0 %v1118, 104
      %v3047 = vpop.permute.xlu0 %3046
      %v3049 = vsel %vm1137, %v3041, 0
      %v3052 = vsel %vm1137, %v3043, 0
      %v3055 = vsel %vm1137, %v3045, 0
      %v3058 = vsel %vm1137, %v3047, 0
      %3060 = vmatprep.subr.bf16.mxu0 0
      %3061 = vmatpush1.bf16.xpose.msra.mxu0 0
      %3062 = vmatprep.subr.bf16.mxu0 0
      %3063 = vmatpush1.bf16.xpose.msra.mxu0 0
      %3064 = vmatprep.subr.bf16.mxu0 0
      %3065 = vmatpush1.bf16.xpose.msra.mxu0 0
      %3066 = vmatprep.subr.bf16.mxu0 0
      %3067 = vmatpush1.bf16.xpose.msra.mxu0 0
      %3068 = vmatprep.subr.bf16.mxu0 0
      %3069 = vmatpush1.bf16.xpose.msra.mxu0 0
      %3070 = vmatprep.subr.bf16.mxu0 0
      %3071 = vmatpush1.bf16.xpose.msra.mxu0 0
      %3072 = vmatprep.subr.bf16.mxu0 0
      %3073 = vmatpush1.bf16.xpose.msra.mxu0 %v3058
      %3074 = vmatprep.subr.bf16.mxu0 0
      %3075 = vmatpush1.bf16.xpose.msra.mxu0 %v3055
      %3076 = vmatprep.subr.bf16.mxu0 0
      %3077 = vmatpush2.bf16.xpose.msra.mxu0 0
      %3078 = vmatprep.subr.bf16.mxu0 0
      %3079 = vmatpush2.bf16.xpose.msra.mxu0 0
      %3080 = vmatprep.subr.bf16.mxu0 0
      %3081 = vmatpush2.bf16.xpose.msra.mxu0 0
      %3082 = vmatprep.subr.bf16.mxu0 0
      %3083 = vmatpush2.bf16.xpose.msra.mxu0 0
      %3084 = vmatprep.subr.bf16.mxu0 0
      %3085 = vmatpush2.bf16.xpose.msra.mxu0 0
      %3086 = vmatprep.subr.bf16.mxu0 0
      %3087 = vmatpush2.bf16.xpose.msra.mxu0 0
      %3088 = vmatprep.subr.bf16.mxu0 0
      %3089 = vmatpush2.bf16.xpose.msra.mxu0 0
      %3090 = vmatprep.subr.bf16.mxu0 0
      %3091 = vmatpush2.bf16.xpose.msra.mxu0 0
      %3092 = vmatprep.mubr.bf16.mxu0 0
      %3093 = vmatmul.mubr.bf16.gmra.mxu0 %v3049
      %v3094 = vpop.f32.mrf.mxu0
      %v3095 = vadd.f32 %v2691, %v3094
      %v3096 = vpop.f32.mrf.mxu0
      %v3097 = vpop.f32.mrf.mxu0
      %v3098 = vadd.f32 %v2692, %v3097
      %v3099 = vpop.f32.mrf.mxu0
      %3100 = vmatprep.mubr.bf16.mxu0 0
      %3101 = vmatmul.mubr.bf16.gmra.mxu0 %v3052
      %v3102 = vpop.f32.mrf.mxu0
      %v3103 = vadd.f32 %v2693, %v3102
      %v3104 = vpop.f32.mrf.mxu0
      %v3105 = vpop.f32.mrf.mxu0
      %v3106 = vadd.f32 %v2694, %v3105
      %v3107 = vpop.f32.mrf.mxu0
      %3108 = vdwg.mxu0
      %3109 = vrot.lane.b32.xlu0 %v1119, 120
      %v3110 = vpop.permute.xlu0 %3109
      %3111 = vrot.lane.b32.xlu0 %v1120, 120
      %v3112 = vpop.permute.xlu0 %3111
      %3113 = vrot.lane.b32.xlu0 %v1119, 104
      %v3114 = vpop.permute.xlu0 %3113
      %3115 = vrot.lane.b32.xlu0 %v1120, 104
      %v3116 = vpop.permute.xlu0 %3115
      %v3118 = vsel %vm1137, %v3110, 0
      %v3121 = vsel %vm1137, %v3112, 0
      %v3124 = vsel %vm1137, %v3114, 0
      %v3127 = vsel %vm1137, %v3116, 0
      %3129 = vmatprep.subr.bf16.mxu0 0
      %3130 = vmatpush1.bf16.xpose.msra.mxu0 0
      %3131 = vmatprep.subr.bf16.mxu0 0
      %3132 = vmatpush1.bf16.xpose.msra.mxu0 0
      %3133 = vmatprep.subr.bf16.mxu0 0
      %3134 = vmatpush1.bf16.xpose.msra.mxu0 0
      %3135 = vmatprep.subr.bf16.mxu0 0
      %3136 = vmatpush1.bf16.xpose.msra.mxu0 0
      %3137 = vmatprep.subr.bf16.mxu0 0
      %3138 = vmatpush1.bf16.xpose.msra.mxu0 0
      %3139 = vmatprep.subr.bf16.mxu0 0
      %3140 = vmatpush1.bf16.xpose.msra.mxu0 0
      %3141 = vmatprep.subr.bf16.mxu0 0
      %3142 = vmatpush1.bf16.xpose.msra.mxu0 %v3127
      %3143 = vmatprep.subr.bf16.mxu0 0
      %3144 = vmatpush1.bf16.xpose.msra.mxu0 %v3124
      %3145 = vmatprep.subr.bf16.mxu0 0
      %3146 = vmatpush2.bf16.xpose.msra.mxu0 0
      %3147 = vmatprep.subr.bf16.mxu0 0
      %3148 = vmatpush2.bf16.xpose.msra.mxu0 0
      %3149 = vmatprep.subr.bf16.mxu0 0
      %3150 = vmatpush2.bf16.xpose.msra.mxu0 0
      %3151 = vmatprep.subr.bf16.mxu0 0
      %3152 = vmatpush2.bf16.xpose.msra.mxu0 0
      %3153 = vmatprep.subr.bf16.mxu0 0
      %3154 = vmatpush2.bf16.xpose.msra.mxu0 0
      %3155 = vmatprep.subr.bf16.mxu0 0
      %3156 = vmatpush2.bf16.xpose.msra.mxu0 0
      %3157 = vmatprep.subr.bf16.mxu0 0
      %3158 = vmatpush2.bf16.xpose.msra.mxu0 0
      %3159 = vmatprep.subr.bf16.mxu0 0
      %3160 = vmatpush2.bf16.xpose.msra.mxu0 0
      %3161 = vmatprep.mubr.bf16.mxu0 0
      %3162 = vmatmul.mubr.bf16.gmra.mxu0 %v3118
      %v3163 = vpop.f32.mrf.mxu0
      %v3164 = vadd.f32 %v2691, %v3163
      %v3165 = vpop.f32.mrf.mxu0
      %v3166 = vpop.f32.mrf.mxu0
      %v3167 = vadd.f32 %v2692, %v3166
      %v3168 = vpop.f32.mrf.mxu0
      %3169 = vmatprep.mubr.bf16.mxu0 0
      %3170 = vmatmul.mubr.bf16.gmra.mxu0 %v3121
      %v3171 = vpop.f32.mrf.mxu0
      %v3172 = vadd.f32 %v2693, %v3171
      %v3173 = vpop.f32.mrf.mxu0
      %v3174 = vpop.f32.mrf.mxu0
      %v3175 = vadd.f32 %v2694, %v3174
      %v3176 = vpop.f32.mrf.mxu0
      %3177 = vdwg.mxu0
      %3178 = vrot.lane.b32.xlu0 %v1121, 120
      %v3179 = vpop.permute.xlu0 %3178
      %3180 = vrot.lane.b32.xlu0 %v1122, 120
      %v3181 = vpop.permute.xlu0 %3180
      %3182 = vrot.lane.b32.xlu0 %v1121, 104
      %v3183 = vpop.permute.xlu0 %3182
      %3184 = vrot.lane.b32.xlu0 %v1122, 104
      %v3185 = vpop.permute.xlu0 %3184
      %v3187 = vsel %vm1137, %v3179, 0
      %v3190 = vsel %vm1137, %v3181, 0
      %v3193 = vsel %vm1137, %v3183, 0
      %v3196 = vsel %vm1137, %v3185, 0
      %3198 = vmatprep.subr.bf16.mxu0 0
      %3199 = vmatpush1.bf16.xpose.msra.mxu0 0
      %3200 = vmatprep.subr.bf16.mxu0 0
      %3201 = vmatpush1.bf16.xpose.msra.mxu0 0
      %3202 = vmatprep.subr.bf16.mxu0 0
      %3203 = vmatpush1.bf16.xpose.msra.mxu0 0
      %3204 = vmatprep.subr.bf16.mxu0 0
      %3205 = vmatpush1.bf16.xpose.msra.mxu0 0
      %3206 = vmatprep.subr.bf16.mxu0 0
      %3207 = vmatpush1.bf16.xpose.msra.mxu0 0
      %3208 = vmatprep.subr.bf16.mxu0 0
      %3209 = vmatpush1.bf16.xpose.msra.mxu0 0
      %3210 = vmatprep.subr.bf16.mxu0 0
      %3211 = vmatpush1.bf16.xpose.msra.mxu0 %v3196
      %3212 = vmatprep.subr.bf16.mxu0 0
      %3213 = vmatpush1.bf16.xpose.msra.mxu0 %v3193
      %3214 = vmatprep.subr.bf16.mxu0 0
      %3215 = vmatpush2.bf16.xpose.msra.mxu0 0
      %3216 = vmatprep.subr.bf16.mxu0 0
      %3217 = vmatpush2.bf16.xpose.msra.mxu0 0
      %3218 = vmatprep.subr.bf16.mxu0 0
      %3219 = vmatpush2.bf16.xpose.msra.mxu0 0
      %3220 = vmatprep.subr.bf16.mxu0 0
      %3221 = vmatpush2.bf16.xpose.msra.mxu0 0
      %3222 = vmatprep.subr.bf16.mxu0 0
      %3223 = vmatpush2.bf16.xpose.msra.mxu0 0
      %3224 = vmatprep.subr.bf16.mxu0 0
      %3225 = vmatpush2.bf16.xpose.msra.mxu0 0
      %3226 = vmatprep.subr.bf16.mxu0 0
      %3227 = vmatpush2.bf16.xpose.msra.mxu0 0
      %3228 = vmatprep.subr.bf16.mxu0 0
      %3229 = vmatpush2.bf16.xpose.msra.mxu0 0
      %3230 = vmatprep.mubr.bf16.mxu0 0
      %3231 = vmatmul.mubr.bf16.gmra.mxu0 %v3187
      %v3232 = vpop.f32.mrf.mxu0
      %v3233 = vadd.f32 %v2691, %v3232
      %v3234 = vpop.f32.mrf.mxu0
      %v3235 = vpop.f32.mrf.mxu0
      %v3236 = vadd.f32 %v2692, %v3235
      %v3237 = vpop.f32.mrf.mxu0
      %3238 = vmatprep.mubr.bf16.mxu0 0
      %3239 = vmatmul.mubr.bf16.gmra.mxu0 %v3190
      %v3240 = vpop.f32.mrf.mxu0
      %v3241 = vadd.f32 %v2693, %v3240
      %v3242 = vpop.f32.mrf.mxu0
      %v3243 = vpop.f32.mrf.mxu0
      %v3244 = vadd.f32 %v2694, %v3243
      %v3245 = vpop.f32.mrf.mxu0
      %3246 = vdwg.mxu0
      %v3247 = vsel %vm1668, %v2750, -inf
      %3248 = vmax.xlane.f32.xlu0 %v3247
      %v3249 = vpop.xlane.xlu0 %3248
      %v3250 = vsel %vm1668, %v2753, -inf
      %3251 = vmax.xlane.f32.xlu0 %v3250
      %v3252 = vpop.xlane.xlu0 %3251
      %v3253 = vsel %vm1668, %v2758, -inf
      %3254 = vmax.xlane.f32.xlu0 %v3253
      %v3255 = vpop.xlane.xlu0 %3254
      %v3256 = vsel %vm1668, %v2761, -inf
      %3257 = vmax.xlane.f32.xlu0 %v3256
      %v3258 = vpop.xlane.xlu0 %3257
      %v3259 = vsel %vm1668, %v2819, -inf
      %3260 = vmax.xlane.f32.xlu0 %v3259
      %v3261 = vpop.xlane.xlu0 %3260
      %v3262 = vsel %vm1668, %v2822, -inf
      %3263 = vmax.xlane.f32.xlu0 %v3262
      %v3264 = vpop.xlane.xlu0 %3263
      %v3265 = vsel %vm1668, %v2827, -inf
      %3266 = vmax.xlane.f32.xlu0 %v3265
      %v3267 = vpop.xlane.xlu0 %3266
      %v3268 = vsel %vm1668, %v2830, -inf
      %3269 = vmax.xlane.f32.xlu0 %v3268
      %v3270 = vpop.xlane.xlu0 %3269
      %v3271 = vsel %vm1668, %v2888, -inf
      %3272 = vmax.xlane.f32.xlu0 %v3271
      %v3273 = vpop.xlane.xlu0 %3272
      %v3274 = vsel %vm1668, %v2891, -inf
      %3275 = vmax.xlane.f32.xlu0 %v3274
      %v3276 = vpop.xlane.xlu0 %3275
      %v3277 = vsel %vm1668, %v2896, -inf
      %3278 = vmax.xlane.f32.xlu0 %v3277
      %v3279 = vpop.xlane.xlu0 %3278
      %v3280 = vsel %vm1668, %v2899, -inf
      %3281 = vmax.xlane.f32.xlu0 %v3280
      %v3282 = vpop.xlane.xlu0 %3281
      %v3283 = vsel %vm1668, %v2957, -inf
      %3284 = vmax.xlane.f32.xlu0 %v3283
      %v3285 = vpop.xlane.xlu0 %3284
      %v3286 = vsel %vm1668, %v2960, -inf
      %3287 = vmax.xlane.f32.xlu0 %v3286
      %v3288 = vpop.xlane.xlu0 %3287
      %v3289 = vsel %vm1668, %v2965, -inf
      %3290 = vmax.xlane.f32.xlu0 %v3289
      %v3291 = vpop.xlane.xlu0 %3290
      %v3292 = vsel %vm1668, %v2968, -inf
      %3293 = vmax.xlane.f32.xlu0 %v3292
      %v3294 = vpop.xlane.xlu0 %3293
      %v3295 = vsel %vm1668, %v3026, -inf
      %3296 = vmax.xlane.f32.xlu0 %v3295
      %v3297 = vpop.xlane.xlu0 %3296
      %v3298 = vsel %vm1668, %v3029, -inf
      %3299 = vmax.xlane.f32.xlu0 %v3298
      %v3300 = vpop.xlane.xlu0 %3299
      %v3301 = vsel %vm1668, %v3034, -inf
      %3302 = vmax.xlane.f32.xlu0 %v3301
      %v3303 = vpop.xlane.xlu0 %3302
      %v3304 = vsel %vm1668, %v3037, -inf
      %3305 = vmax.xlane.f32.xlu0 %v3304
      %v3306 = vpop.xlane.xlu0 %3305
      %v3307 = vsel %vm1668, %v3095, -inf
      %3308 = vmax.xlane.f32.xlu0 %v3307
      %v3309 = vpop.xlane.xlu0 %3308
      %v3310 = vsel %vm1668, %v3098, -inf
      %3311 = vmax.xlane.f32.xlu0 %v3310
      %v3312 = vpop.xlane.xlu0 %3311
      %v3313 = vsel %vm1668, %v3103, -inf
      %3314 = vmax.xlane.f32.xlu0 %v3313
      %v3315 = vpop.xlane.xlu0 %3314
      %v3316 = vsel %vm1668, %v3106, -inf
      %3317 = vmax.xlane.f32.xlu0 %v3316
      %v3318 = vpop.xlane.xlu0 %3317
      %v3319 = vsel %vm1668, %v3164, -inf
      %3320 = vmax.xlane.f32.xlu0 %v3319
      %v3321 = vpop.xlane.xlu0 %3320
      %v3322 = vsel %vm1668, %v3167, -inf
      %3323 = vmax.xlane.f32.xlu0 %v3322
      %v3324 = vpop.xlane.xlu0 %3323
      %v3325 = vsel %vm1668, %v3172, -inf
      %3326 = vmax.xlane.f32.xlu0 %v3325
      %v3327 = vpop.xlane.xlu0 %3326
      %v3328 = vsel %vm1668, %v3175, -inf
      %3329 = vmax.xlane.f32.xlu0 %v3328
      %v3330 = vpop.xlane.xlu0 %3329
      %v3331 = vsel %vm1668, %v3233, -inf
      %3332 = vmax.xlane.f32.xlu0 %v3331
      %v3333 = vpop.xlane.xlu0 %3332
      %v3334 = vsel %vm1668, %v3236, -inf
      %3335 = vmax.xlane.f32.xlu0 %v3334
      %v3336 = vpop.xlane.xlu0 %3335
      %v3337 = vsel %vm1668, %v3241, -inf
      %3338 = vmax.xlane.f32.xlu0 %v3337
      %v3339 = vpop.xlane.xlu0 %3338
      %v3340 = vsel %vm1668, %v3244, -inf
      %3341 = vmax.xlane.f32.xlu0 %v3340
      %v3342 = vpop.xlane.xlu0 %3341
      %v3343 = vsub.f32 %v2750, %v3249
      %v3344 = vsub.f32 %v2753, %v3252
      %v3345 = vsub.f32 %v2758, %v3255
      %v3346 = vsub.f32 %v2761, %v3258
      %v3347 = vsub.f32 %v2819, %v3261
      %v3348 = vsub.f32 %v2822, %v3264
      %v3349 = vsub.f32 %v2827, %v3267
      %v3350 = vsub.f32 %v2830, %v3270
      %v3351 = vsub.f32 %v2888, %v3273
      %v3352 = vsub.f32 %v2891, %v3276
      %v3353 = vsub.f32 %v2896, %v3279
      %v3354 = vsub.f32 %v2899, %v3282
      %v3355 = vsub.f32 %v2957, %v3285
      %v3356 = vsub.f32 %v2960, %v3288
      %v3357 = vsub.f32 %v2965, %v3291
      %v3358 = vsub.f32 %v2968, %v3294
      %v3359 = vsub.f32 %v3026, %v3297
      %v3360 = vsub.f32 %v3029, %v3300
      %v3361 = vsub.f32 %v3034, %v3303
      %v3362 = vsub.f32 %v3037, %v3306
      %v3363 = vsub.f32 %v3095, %v3309
      %v3364 = vsub.f32 %v3098, %v3312
      %v3365 = vsub.f32 %v3103, %v3315
      %v3366 = vsub.f32 %v3106, %v3318
      %v3367 = vsub.f32 %v3164, %v3321
      %v3368 = vsub.f32 %v3167, %v3324
      %v3369 = vsub.f32 %v3172, %v3327
      %v3370 = vsub.f32 %v3175, %v3330
      %v3371 = vsub.f32 %v3233, %v3333
      %v3372 = vsub.f32 %v3236, %v3336
      %v3373 = vsub.f32 %v3241, %v3339
      %v3374 = vsub.f32 %v3244, %v3342
      %v3375 = vmul.f32 %v3343, 1.442695
      %v3376 = vpow.pop %v3375
      %v3377 = vmul.f32 %v3344, 1.442695
      %v3378 = vpow.pop %v3377
      %v3379 = vmul.f32 %v3345, 1.442695
      %v3380 = vpow.pop %v3379
      %v3381 = vmul.f32 %v3346, 1.442695
      %v3382 = vpow.pop %v3381
      %v3383 = vmul.f32 %v3347, 1.442695
      %v3384 = vpow.pop %v3383
      %v3385 = vmul.f32 %v3348, 1.442695
      %v3386 = vpow.pop %v3385
      %v3387 = vmul.f32 %v3349, 1.442695
      %v3388 = vpow.pop %v3387
      %v3389 = vmul.f32 %v3350, 1.442695
      %v3390 = vpow.pop %v3389
      %v3391 = vmul.f32 %v3351, 1.442695
      %v3392 = vpow.pop %v3391
      %v3393 = vmul.f32 %v3352, 1.442695
      %v3394 = vpow.pop %v3393
      %v3395 = vmul.f32 %v3353, 1.442695
      %v3396 = vpow.pop %v3395
      %v3397 = vmul.f32 %v3354, 1.442695
      %v3398 = vpow.pop %v3397
      %v3399 = vmul.f32 %v3355, 1.442695
      %v3400 = vpow.pop %v3399
      %v3401 = vmul.f32 %v3356, 1.442695
      %v3402 = vpow.pop %v3401
      %v3403 = vmul.f32 %v3357, 1.442695
      %v3404 = vpow.pop %v3403
      %v3405 = vmul.f32 %v3358, 1.442695
      %v3406 = vpow.pop %v3405
      %v3407 = vmul.f32 %v3359, 1.442695
      %v3408 = vpow.pop %v3407
      %v3409 = vmul.f32 %v3360, 1.442695
      %v3410 = vpow.pop %v3409
      %v3411 = vmul.f32 %v3361, 1.442695
      %v3412 = vpow.pop %v3411
      %v3413 = vmul.f32 %v3362, 1.442695
      %v3414 = vpow.pop %v3413
      %v3415 = vmul.f32 %v3363, 1.442695
      %v3416 = vpow.pop %v3415
      %v3417 = vmul.f32 %v3364, 1.442695
      %v3418 = vpow.pop %v3417
      %v3419 = vmul.f32 %v3365, 1.442695
      %v3420 = vpow.pop %v3419
      %v3421 = vmul.f32 %v3366, 1.442695
      %v3422 = vpow.pop %v3421
      %v3423 = vmul.f32 %v3367, 1.442695
      %v3424 = vpow.pop %v3423
      %v3425 = vmul.f32 %v3368, 1.442695
      %v3426 = vpow.pop %v3425
      %v3427 = vmul.f32 %v3369, 1.442695
      %v3428 = vpow.pop %v3427
      %v3429 = vmul.f32 %v3370, 1.442695
      %v3430 = vpow.pop %v3429
      %v3431 = vmul.f32 %v3371, 1.442695
      %v3432 = vpow.pop %v3431
      %v3433 = vmul.f32 %v3372, 1.442695
      %v3434 = vpow.pop %v3433
      %v3435 = vmul.f32 %v3373, 1.442695
      %v3436 = vpow.pop %v3435
      %v3437 = vmul.f32 %v3374, 1.442695
      %v3438 = vpow.pop %v3437
      %v3439 = vsel %vm1668, %v3376, 0.0
      %3440 = vadd.xlane.f32.xlu0 %v3439
      %v3441 = vpop.xlane.xlu0 %3440
      %v3442 = vsel %vm1668, %v3378, 0.0
      %3443 = vadd.xlane.f32.xlu0 %v3442
      %v3444 = vpop.xlane.xlu0 %3443
      %v3445 = vsel %vm1668, %v3380, 0.0
      %3446 = vadd.xlane.f32.xlu0 %v3445
      %v3447 = vpop.xlane.xlu0 %3446
      %v3448 = vsel %vm1668, %v3382, 0.0
      %3449 = vadd.xlane.f32.xlu0 %v3448
      %v3450 = vpop.xlane.xlu0 %3449
      %v3451 = vsel %vm1668, %v3384, 0.0
      %3452 = vadd.xlane.f32.xlu0 %v3451
      %v3453 = vpop.xlane.xlu0 %3452
      %v3454 = vsel %vm1668, %v3386, 0.0
      %3455 = vadd.xlane.f32.xlu0 %v3454
      %v3456 = vpop.xlane.xlu0 %3455
      %v3457 = vsel %vm1668, %v3388, 0.0
      %3458 = vadd.xlane.f32.xlu0 %v3457
      %v3459 = vpop.xlane.xlu0 %3458
      %v3460 = vsel %vm1668, %v3390, 0.0
      %3461 = vadd.xlane.f32.xlu0 %v3460
      %v3462 = vpop.xlane.xlu0 %3461
      %v3463 = vsel %vm1668, %v3392, 0.0
      %3464 = vadd.xlane.f32.xlu0 %v3463
      %v3465 = vpop.xlane.xlu0 %3464
      %v3466 = vsel %vm1668, %v3394, 0.0
      %3467 = vadd.xlane.f32.xlu0 %v3466
      %v3468 = vpop.xlane.xlu0 %3467
      %v3469 = vsel %vm1668, %v3396, 0.0
      %3470 = vadd.xlane.f32.xlu0 %v3469
      %v3471 = vpop.xlane.xlu0 %3470
      %v3472 = vsel %vm1668, %v3398, 0.0
      %3473 = vadd.xlane.f32.xlu0 %v3472
      %v3474 = vpop.xlane.xlu0 %3473
      %v3475 = vsel %vm1668, %v3400, 0.0
      %3476 = vadd.xlane.f32.xlu0 %v3475
      %v3477 = vpop.xlane.xlu0 %3476
      %v3478 = vsel %vm1668, %v3402, 0.0
      %3479 = vadd.xlane.f32.xlu0 %v3478
      %v3480 = vpop.xlane.xlu0 %3479
      %v3481 = vsel %vm1668, %v3404, 0.0
      %3482 = vadd.xlane.f32.xlu0 %v3481
      %v3483 = vpop.xlane.xlu0 %3482
      %v3484 = vsel %vm1668, %v3406, 0.0
      %3485 = vadd.xlane.f32.xlu0 %v3484
      %v3486 = vpop.xlane.xlu0 %3485
      %v3487 = vsel %vm1668, %v3408, 0.0
      %3488 = vadd.xlane.f32.xlu0 %v3487
      %v3489 = vpop.xlane.xlu0 %3488
      %v3490 = vsel %vm1668, %v3410, 0.0
      %3491 = vadd.xlane.f32.xlu0 %v3490
      %v3492 = vpop.xlane.xlu0 %3491
      %v3493 = vsel %vm1668, %v3412, 0.0
      %3494 = vadd.xlane.f32.xlu0 %v3493
      %v3495 = vpop.xlane.xlu0 %3494
      %v3496 = vsel %vm1668, %v3414, 0.0
      %3497 = vadd.xlane.f32.xlu0 %v3496
      %v3498 = vpop.xlane.xlu0 %3497
      %v3499 = vsel %vm1668, %v3416, 0.0
      %3500 = vadd.xlane.f32.xlu0 %v3499
      %v3501 = vpop.xlane.xlu0 %3500
      %v3502 = vsel %vm1668, %v3418, 0.0
      %3503 = vadd.xlane.f32.xlu0 %v3502
      %v3504 = vpop.xlane.xlu0 %3503
      %v3505 = vsel %vm1668, %v3420, 0.0
      %3506 = vadd.xlane.f32.xlu0 %v3505
      %v3507 = vpop.xlane.xlu0 %3506
      %v3508 = vsel %vm1668, %v3422, 0.0
      %3509 = vadd.xlane.f32.xlu0 %v3508
      %v3510 = vpop.xlane.xlu0 %3509
      %v3511 = vsel %vm1668, %v3424, 0.0
      %3512 = vadd.xlane.f32.xlu0 %v3511
      %v3513 = vpop.xlane.xlu0 %3512
      %v3514 = vsel %vm1668, %v3426, 0.0
      %3515 = vadd.xlane.f32.xlu0 %v3514
      %v3516 = vpop.xlane.xlu0 %3515
      %v3517 = vsel %vm1668, %v3428, 0.0
      %3518 = vadd.xlane.f32.xlu0 %v3517
      %v3519 = vpop.xlane.xlu0 %3518
      %v3520 = vsel %vm1668, %v3430, 0.0
      %3521 = vadd.xlane.f32.xlu0 %v3520
      %v3522 = vpop.xlane.xlu0 %3521
      %v3523 = vsel %vm1668, %v3432, 0.0
      %3524 = vadd.xlane.f32.xlu0 %v3523
      %v3525 = vpop.xlane.xlu0 %3524
      %v3526 = vsel %vm1668, %v3434, 0.0
      %3527 = vadd.xlane.f32.xlu0 %v3526
      %v3528 = vpop.xlane.xlu0 %3527
      %v3529 = vsel %vm1668, %v3436, 0.0
      %3530 = vadd.xlane.f32.xlu0 %v3529
      %v3531 = vpop.xlane.xlu0 %3530
      %v3532 = vsel %vm1668, %v3438, 0.0
      %3533 = vadd.xlane.f32.xlu0 %v3532
      %v3534 = vpop.xlane.xlu0 %3533
      %v3535 = vrcp.pop %v3441
      %v3536 = vrcp.pop %v3444
      %v3537 = vrcp.pop %v3447
      %v3538 = vrcp.pop %v3450
      %v3539 = vrcp.pop %v3453
      %v3540 = vrcp.pop %v3456
      %v3541 = vrcp.pop %v3459
      %v3542 = vrcp.pop %v3462
      %v3543 = vrcp.pop %v3465
      %v3544 = vrcp.pop %v3468
      %v3545 = vrcp.pop %v3471
      %v3546 = vrcp.pop %v3474
      %v3547 = vrcp.pop %v3477
      %v3548 = vrcp.pop %v3480
      %v3549 = vrcp.pop %v3483
      %v3550 = vrcp.pop %v3486
      %v3551 = vrcp.pop %v3489
      %v3552 = vrcp.pop %v3492
      %v3553 = vrcp.pop %v3495
      %v3554 = vrcp.pop %v3498
      %v3555 = vrcp.pop %v3501
      %v3556 = vrcp.pop %v3504
      %v3557 = vrcp.pop %v3507
      %v3558 = vrcp.pop %v3510
      %v3559 = vrcp.pop %v3513
      %v3560 = vrcp.pop %v3516
      %v3561 = vrcp.pop %v3519
      %v3562 = vrcp.pop %v3522
      %v3563 = vrcp.pop %v3525
      %v3564 = vrcp.pop %v3528
      %v3565 = vrcp.pop %v3531
      %v3566 = vrcp.pop %v3534
      %v3567 = vmul.f32 %v3376, %v3535
      %v3568 = vmul.f32 %v3378, %v3536
      %v3569 = vmul.f32 %v3380, %v3537
      %v3570 = vmul.f32 %v3382, %v3538
      %v3571 = vmul.f32 %v3384, %v3539
      %v3572 = vmul.f32 %v3386, %v3540
      %v3573 = vmul.f32 %v3388, %v3541
      %v3574 = vmul.f32 %v3390, %v3542
      %v3575 = vmul.f32 %v3392, %v3543
      %v3576 = vmul.f32 %v3394, %v3544
      %v3577 = vmul.f32 %v3396, %v3545
      %v3578 = vmul.f32 %v3398, %v3546
      %v3579 = vmul.f32 %v3400, %v3547
      %v3580 = vmul.f32 %v3402, %v3548
      %v3581 = vmul.f32 %v3404, %v3549
      %v3582 = vmul.f32 %v3406, %v3550
      %v3583 = vmul.f32 %v3408, %v3551
      %v3584 = vmul.f32 %v3410, %v3552
      %v3585 = vmul.f32 %v3412, %v3553
      %v3586 = vmul.f32 %v3414, %v3554
      %v3587 = vmul.f32 %v3416, %v3555
      %v3588 = vmul.f32 %v3418, %v3556
      %v3589 = vmul.f32 %v3420, %v3557
      %v3590 = vmul.f32 %v3422, %v3558
      %v3591 = vmul.f32 %v3424, %v3559
      %v3592 = vmul.f32 %v3426, %v3560
      %v3593 = vmul.f32 %v3428, %v3561
      %v3594 = vmul.f32 %v3430, %v3562
      %v3595 = vmul.f32 %v3432, %v3563
      %v3596 = vmul.f32 %v3434, %v3564
      %v3597 = vmul.f32 %v3436, %v3565
      %v3598 = vmul.f32 %v3438, %v3566
      %v3599 = vpack.c.bf16 %v3568, %v3567
      %v3600 = vpack.c.bf16 %v3570, %v3569
      %v3601 = vpack.c.bf16 %v3572, %v3571
      %v3602 = vpack.c.bf16 %v3574, %v3573
      %v3603 = vpack.c.bf16 %v3576, %v3575
      %v3604 = vpack.c.bf16 %v3578, %v3577
      %v3605 = vpack.c.bf16 %v3580, %v3579
      %v3606 = vpack.c.bf16 %v3582, %v3581
      %v3607 = vpack.c.bf16 %v3584, %v3583
      %v3608 = vpack.c.bf16 %v3586, %v3585
      %v3609 = vpack.c.bf16 %v3588, %v3587
      %v3610 = vpack.c.bf16 %v3590, %v3589
      %v3611 = vpack.c.bf16 %v3592, %v3591
      %v3612 = vpack.c.bf16 %v3594, %v3593
      %v3613 = vpack.c.bf16 %v3596, %v3595
      %v3614 = vpack.c.bf16 %v3598, %v3597
      %3615 = vrot.lane.b32.xlu0 %v1107, 88
      %v3616 = vpop.permute.xlu0 %3615
      %3617 = vrot.lane.b32.xlu0 %v1108, 88
      %v3618 = vpop.permute.xlu0 %3617
      %v3622 = vsel %vm1668, %v3599, 0
      %v3625 = vsel %vm1668, %v3600, 0
      %3627 = vmatprep.subr.bf16.mxu0 0
      %3628 = vmatpush1.bf16.msra.mxu0 0
      %3629 = vmatprep.subr.bf16.mxu0 0
      %3630 = vmatpush1.bf16.msra.mxu0 0
      %3631 = vmatprep.subr.bf16.mxu0 0
      %3632 = vmatpush1.bf16.msra.mxu0 0
      %3633 = vmatprep.subr.bf16.mxu0 0
      %3634 = vmatpush1.bf16.msra.mxu0 0
      %3635 = vmatprep.subr.bf16.mxu0 0
      %3636 = vmatpush1.bf16.msra.mxu0 0
      %3637 = vmatprep.subr.bf16.mxu0 0
      %3638 = vmatpush1.bf16.msra.mxu0 0
      %3639 = vmatprep.subr.bf16.mxu0 0
      %3640 = vmatpush1.bf16.msra.mxu0 %v3618
      %3641 = vmatprep.subr.bf16.mxu0 0
      %3642 = vmatpush1.bf16.msra.mxu0 %v3616
      %3643 = vmatprep.subr.bf16.mxu0 0
      %3644 = vmatpush2.bf16.msra.mxu0 0
      %3645 = vmatprep.subr.bf16.mxu0 0
      %3646 = vmatpush2.bf16.msra.mxu0 0
      %3647 = vmatprep.subr.bf16.mxu0 0
      %3648 = vmatpush2.bf16.msra.mxu0 0
      %3649 = vmatprep.subr.bf16.mxu0 0
      %3650 = vmatpush2.bf16.msra.mxu0 0
      %3651 = vmatprep.subr.bf16.mxu0 0
      %3652 = vmatpush2.bf16.msra.mxu0 0
      %3653 = vmatprep.subr.bf16.mxu0 0
      %3654 = vmatpush2.bf16.msra.mxu0 0
      %3655 = vmatprep.subr.bf16.mxu0 0
      %3656 = vmatpush2.bf16.msra.mxu0 0
      %3657 = vmatprep.subr.bf16.mxu0 0
      %3658 = vmatpush2.bf16.msra.mxu0 0
      %3659 = vmatprep.mubr.bf16.mxu0 0
      %3660 = vmatmul.mubr.bf16.gmra.mxu0 %v3622
      %v3661 = vpop.f32.mrf.mxu0
      %v3662 = vadd.f32 0.0, %v3661
      %v3663 = vpop.f32.mrf.mxu0
      %v3664 = vpop.f32.mrf.mxu0
      %v3665 = vadd.f32 0.0, %v3664
      %v3666 = vpop.f32.mrf.mxu0
      %3667 = vmatprep.mubr.bf16.mxu0 0
      %3668 = vmatmul.mubr.bf16.gmra.mxu0 %v3625
      %v3669 = vpop.f32.mrf.mxu0
      %v3670 = vadd.f32 0.0, %v3669
      %v3671 = vpop.f32.mrf.mxu0
      %v3672 = vpop.f32.mrf.mxu0
      %v3673 = vadd.f32 0.0, %v3672
      %v3674 = vpop.f32.mrf.mxu0
      %3675 = vdwg.mxu0
      %3676 = vrot.lane.b32.xlu0 %v1109, 88
      %v3677 = vpop.permute.xlu0 %3676
      %3678 = vrot.lane.b32.xlu0 %v1110, 88
      %v3679 = vpop.permute.xlu0 %3678
      %v3683 = vsel %vm1668, %v3601, 0
      %v3686 = vsel %vm1668, %v3602, 0
      %3688 = vmatprep.subr.bf16.mxu0 0
      %3689 = vmatpush1.bf16.msra.mxu0 0
      %3690 = vmatprep.subr.bf16.mxu0 0
      %3691 = vmatpush1.bf16.msra.mxu0 0
      %3692 = vmatprep.subr.bf16.mxu0 0
      %3693 = vmatpush1.bf16.msra.mxu0 0
      %3694 = vmatprep.subr.bf16.mxu0 0
      %3695 = vmatpush1.bf16.msra.mxu0 0
      %3696 = vmatprep.subr.bf16.mxu0 0
      %3697 = vmatpush1.bf16.msra.mxu0 0
      %3698 = vmatprep.subr.bf16.mxu0 0
      %3699 = vmatpush1.bf16.msra.mxu0 0
      %3700 = vmatprep.subr.bf16.mxu0 0
      %3701 = vmatpush1.bf16.msra.mxu0 %v3679
      %3702 = vmatprep.subr.bf16.mxu0 0
      %3703 = vmatpush1.bf16.msra.mxu0 %v3677
      %3704 = vmatprep.subr.bf16.mxu0 0
      %3705 = vmatpush2.bf16.msra.mxu0 0
      %3706 = vmatprep.subr.bf16.mxu0 0
      %3707 = vmatpush2.bf16.msra.mxu0 0
      %3708 = vmatprep.subr.bf16.mxu0 0
      %3709 = vmatpush2.bf16.msra.mxu0 0
      %3710 = vmatprep.subr.bf16.mxu0 0
      %3711 = vmatpush2.bf16.msra.mxu0 0
      %3712 = vmatprep.subr.bf16.mxu0 0
      %3713 = vmatpush2.bf16.msra.mxu0 0
      %3714 = vmatprep.subr.bf16.mxu0 0
      %3715 = vmatpush2.bf16.msra.mxu0 0
      %3716 = vmatprep.subr.bf16.mxu0 0
      %3717 = vmatpush2.bf16.msra.mxu0 0
      %3718 = vmatprep.subr.bf16.mxu0 0
      %3719 = vmatpush2.bf16.msra.mxu0 0
      %3720 = vmatprep.mubr.bf16.mxu0 0
      %3721 = vmatmul.mubr.bf16.gmra.mxu0 %v3683
      %v3722 = vpop.f32.mrf.mxu0
      %v3723 = vadd.f32 0.0, %v3722
      %v3724 = vpop.f32.mrf.mxu0
      %v3725 = vpop.f32.mrf.mxu0
      %v3726 = vadd.f32 0.0, %v3725
      %v3727 = vpop.f32.mrf.mxu0
      %3728 = vmatprep.mubr.bf16.mxu0 0
      %3729 = vmatmul.mubr.bf16.gmra.mxu0 %v3686
      %v3730 = vpop.f32.mrf.mxu0
      %v3731 = vadd.f32 0.0, %v3730
      %v3732 = vpop.f32.mrf.mxu0
      %v3733 = vpop.f32.mrf.mxu0
      %v3734 = vadd.f32 0.0, %v3733
      %v3735 = vpop.f32.mrf.mxu0
      %3736 = vdwg.mxu0
      %3737 = vrot.lane.b32.xlu0 %v1111, 88
      %v3738 = vpop.permute.xlu0 %3737
      %3739 = vrot.lane.b32.xlu0 %v1112, 88
      %v3740 = vpop.permute.xlu0 %3739
      %v3744 = vsel %vm1668, %v3603, 0
      %v3747 = vsel %vm1668, %v3604, 0
      %3749 = vmatprep.subr.bf16.mxu0 0
      %3750 = vmatpush1.bf16.msra.mxu0 0
      %3751 = vmatprep.subr.bf16.mxu0 0
      %3752 = vmatpush1.bf16.msra.mxu0 0
      %3753 = vmatprep.subr.bf16.mxu0 0
      %3754 = vmatpush1.bf16.msra.mxu0 0
      %3755 = vmatprep.subr.bf16.mxu0 0
      %3756 = vmatpush1.bf16.msra.mxu0 0
      %3757 = vmatprep.subr.bf16.mxu0 0
      %3758 = vmatpush1.bf16.msra.mxu0 0
      %3759 = vmatprep.subr.bf16.mxu0 0
      %3760 = vmatpush1.bf16.msra.mxu0 0
      %3761 = vmatprep.subr.bf16.mxu0 0
      %3762 = vmatpush1.bf16.msra.mxu0 %v3740
      %3763 = vmatprep.subr.bf16.mxu0 0
      %3764 = vmatpush1.bf16.msra.mxu0 %v3738
      %3765 = vmatprep.subr.bf16.mxu0 0
      %3766 = vmatpush2.bf16.msra.mxu0 0
      %3767 = vmatprep.subr.bf16.mxu0 0
      %3768 = vmatpush2.bf16.msra.mxu0 0
      %3769 = vmatprep.subr.bf16.mxu0 0
      %3770 = vmatpush2.bf16.msra.mxu0 0
      %3771 = vmatprep.subr.bf16.mxu0 0
      %3772 = vmatpush2.bf16.msra.mxu0 0
      %3773 = vmatprep.subr.bf16.mxu0 0
      %3774 = vmatpush2.bf16.msra.mxu0 0
      %3775 = vmatprep.subr.bf16.mxu0 0
      %3776 = vmatpush2.bf16.msra.mxu0 0
      %3777 = vmatprep.subr.bf16.mxu0 0
      %3778 = vmatpush2.bf16.msra.mxu0 0
      %3779 = vmatprep.subr.bf16.mxu0 0
      %3780 = vmatpush2.bf16.msra.mxu0 0
      %3781 = vmatprep.mubr.bf16.mxu0 0
      %3782 = vmatmul.mubr.bf16.gmra.mxu0 %v3744
      %v3783 = vpop.f32.mrf.mxu0
      %v3784 = vadd.f32 0.0, %v3783
      %v3785 = vpop.f32.mrf.mxu0
      %v3786 = vpop.f32.mrf.mxu0
      %v3787 = vadd.f32 0.0, %v3786
      %v3788 = vpop.f32.mrf.mxu0
      %3789 = vmatprep.mubr.bf16.mxu0 0
      %3790 = vmatmul.mubr.bf16.gmra.mxu0 %v3747
      %v3791 = vpop.f32.mrf.mxu0
      %v3792 = vadd.f32 0.0, %v3791
      %v3793 = vpop.f32.mrf.mxu0
      %v3794 = vpop.f32.mrf.mxu0
      %v3795 = vadd.f32 0.0, %v3794
      %v3796 = vpop.f32.mrf.mxu0
      %3797 = vdwg.mxu0
      %3798 = vrot.lane.b32.xlu0 %v1113, 88
      %v3799 = vpop.permute.xlu0 %3798
      %3800 = vrot.lane.b32.xlu0 %v1114, 88
      %v3801 = vpop.permute.xlu0 %3800
      %v3805 = vsel %vm1668, %v3605, 0
      %v3808 = vsel %vm1668, %v3606, 0
      %3810 = vmatprep.subr.bf16.mxu0 0
      %3811 = vmatpush1.bf16.msra.mxu0 0
      %3812 = vmatprep.subr.bf16.mxu0 0
      %3813 = vmatpush1.bf16.msra.mxu0 0
      %3814 = vmatprep.subr.bf16.mxu0 0
      %3815 = vmatpush1.bf16.msra.mxu0 0
      %3816 = vmatprep.subr.bf16.mxu0 0
      %3817 = vmatpush1.bf16.msra.mxu0 0
      %3818 = vmatprep.subr.bf16.mxu0 0
      %3819 = vmatpush1.bf16.msra.mxu0 0
      %3820 = vmatprep.subr.bf16.mxu0 0
      %3821 = vmatpush1.bf16.msra.mxu0 0
      %3822 = vmatprep.subr.bf16.mxu0 0
      %3823 = vmatpush1.bf16.msra.mxu0 %v3801
      %3824 = vmatprep.subr.bf16.mxu0 0
      %3825 = vmatpush1.bf16.msra.mxu0 %v3799
      %3826 = vmatprep.subr.bf16.mxu0 0
      %3827 = vmatpush2.bf16.msra.mxu0 0
      %3828 = vmatprep.subr.bf16.mxu0 0
      %3829 = vmatpush2.bf16.msra.mxu0 0
      %3830 = vmatprep.subr.bf16.mxu0 0
      %3831 = vmatpush2.bf16.msra.mxu0 0
      %3832 = vmatprep.subr.bf16.mxu0 0
      %3833 = vmatpush2.bf16.msra.mxu0 0
      %3834 = vmatprep.subr.bf16.mxu0 0
      %3835 = vmatpush2.bf16.msra.mxu0 0
      %3836 = vmatprep.subr.bf16.mxu0 0
      %3837 = vmatpush2.bf16.msra.mxu0 0
      %3838 = vmatprep.subr.bf16.mxu0 0
      %3839 = vmatpush2.bf16.msra.mxu0 0
      %3840 = vmatprep.subr.bf16.mxu0 0
      %3841 = vmatpush2.bf16.msra.mxu0 0
      %3842 = vmatprep.mubr.bf16.mxu0 0
      %3843 = vmatmul.mubr.bf16.gmra.mxu0 %v3805
      %v3844 = vpop.f32.mrf.mxu0
      %v3845 = vadd.f32 0.0, %v3844
      %v3846 = vpop.f32.mrf.mxu0
      %v3847 = vpop.f32.mrf.mxu0
      %v3848 = vadd.f32 0.0, %v3847
      %v3849 = vpop.f32.mrf.mxu0
      %3850 = vmatprep.mubr.bf16.mxu0 0
      %3851 = vmatmul.mubr.bf16.gmra.mxu0 %v3808
      %v3852 = vpop.f32.mrf.mxu0
      %v3853 = vadd.f32 0.0, %v3852
      %v3854 = vpop.f32.mrf.mxu0
      %v3855 = vpop.f32.mrf.mxu0
      %v3856 = vadd.f32 0.0, %v3855
      %v3857 = vpop.f32.mrf.mxu0
      %3858 = vdwg.mxu0
      %3859 = vrot.lane.b32.xlu0 %v1115, 88
      %v3860 = vpop.permute.xlu0 %3859
      %3861 = vrot.lane.b32.xlu0 %v1116, 88
      %v3862 = vpop.permute.xlu0 %3861
      %v3866 = vsel %vm1668, %v3607, 0
      %v3869 = vsel %vm1668, %v3608, 0
      %3871 = vmatprep.subr.bf16.mxu0 0
      %3872 = vmatpush1.bf16.msra.mxu0 0
      %3873 = vmatprep.subr.bf16.mxu0 0
      %3874 = vmatpush1.bf16.msra.mxu0 0
      %3875 = vmatprep.subr.bf16.mxu0 0
      %3876 = vmatpush1.bf16.msra.mxu0 0
      %3877 = vmatprep.subr.bf16.mxu0 0
      %3878 = vmatpush1.bf16.msra.mxu0 0
      %3879 = vmatprep.subr.bf16.mxu0 0
      %3880 = vmatpush1.bf16.msra.mxu0 0
      %3881 = vmatprep.subr.bf16.mxu0 0
      %3882 = vmatpush1.bf16.msra.mxu0 0
      %3883 = vmatprep.subr.bf16.mxu0 0
      %3884 = vmatpush1.bf16.msra.mxu0 %v3862
      %3885 = vmatprep.subr.bf16.mxu0 0
      %3886 = vmatpush1.bf16.msra.mxu0 %v3860
      %3887 = vmatprep.subr.bf16.mxu0 0
      %3888 = vmatpush2.bf16.msra.mxu0 0
      %3889 = vmatprep.subr.bf16.mxu0 0
      %3890 = vmatpush2.bf16.msra.mxu0 0
      %3891 = vmatprep.subr.bf16.mxu0 0
      %3892 = vmatpush2.bf16.msra.mxu0 0
      %3893 = vmatprep.subr.bf16.mxu0 0
      %3894 = vmatpush2.bf16.msra.mxu0 0
      %3895 = vmatprep.subr.bf16.mxu0 0
      %3896 = vmatpush2.bf16.msra.mxu0 0
      %3897 = vmatprep.subr.bf16.mxu0 0
      %3898 = vmatpush2.bf16.msra.mxu0 0
      %3899 = vmatprep.subr.bf16.mxu0 0
      %3900 = vmatpush2.bf16.msra.mxu0 0
      %3901 = vmatprep.subr.bf16.mxu0 0
      %3902 = vmatpush2.bf16.msra.mxu0 0
      %3903 = vmatprep.mubr.bf16.mxu0 0
      %3904 = vmatmul.mubr.bf16.gmra.mxu0 %v3866
      %v3905 = vpop.f32.mrf.mxu0
      %v3906 = vadd.f32 0.0, %v3905
      %v3907 = vpop.f32.mrf.mxu0
      %v3908 = vpop.f32.mrf.mxu0
      %v3909 = vadd.f32 0.0, %v3908
      %v3910 = vpop.f32.mrf.mxu0
      %3911 = vmatprep.mubr.bf16.mxu0 0
      %3912 = vmatmul.mubr.bf16.gmra.mxu0 %v3869
      %v3913 = vpop.f32.mrf.mxu0
      %v3914 = vadd.f32 0.0, %v3913
      %v3915 = vpop.f32.mrf.mxu0
      %v3916 = vpop.f32.mrf.mxu0
      %v3917 = vadd.f32 0.0, %v3916
      %v3918 = vpop.f32.mrf.mxu0
      %3919 = vdwg.mxu0
      %3920 = vrot.lane.b32.xlu0 %v1117, 88
      %v3921 = vpop.permute.xlu0 %3920
      %3922 = vrot.lane.b32.xlu0 %v1118, 88
      %v3923 = vpop.permute.xlu0 %3922
      %v3927 = vsel %vm1668, %v3609, 0
      %v3930 = vsel %vm1668, %v3610, 0
      %3932 = vmatprep.subr.bf16.mxu0 0
      %3933 = vmatpush1.bf16.msra.mxu0 0
      %3934 = vmatprep.subr.bf16.mxu0 0
      %3935 = vmatpush1.bf16.msra.mxu0 0
      %3936 = vmatprep.subr.bf16.mxu0 0
      %3937 = vmatpush1.bf16.msra.mxu0 0
      %3938 = vmatprep.subr.bf16.mxu0 0
      %3939 = vmatpush1.bf16.msra.mxu0 0
      %3940 = vmatprep.subr.bf16.mxu0 0
      %3941 = vmatpush1.bf16.msra.mxu0 0
      %3942 = vmatprep.subr.bf16.mxu0 0
      %3943 = vmatpush1.bf16.msra.mxu0 0
      %3944 = vmatprep.subr.bf16.mxu0 0
      %3945 = vmatpush1.bf16.msra.mxu0 %v3923
      %3946 = vmatprep.subr.bf16.mxu0 0
      %3947 = vmatpush1.bf16.msra.mxu0 %v3921
      %3948 = vmatprep.subr.bf16.mxu0 0
      %3949 = vmatpush2.bf16.msra.mxu0 0
      %3950 = vmatprep.subr.bf16.mxu0 0
      %3951 = vmatpush2.bf16.msra.mxu0 0
      %3952 = vmatprep.subr.bf16.mxu0 0
      %3953 = vmatpush2.bf16.msra.mxu0 0
      %3954 = vmatprep.subr.bf16.mxu0 0
      %3955 = vmatpush2.bf16.msra.mxu0 0
      %3956 = vmatprep.subr.bf16.mxu0 0
      %3957 = vmatpush2.bf16.msra.mxu0 0
      %3958 = vmatprep.subr.bf16.mxu0 0
      %3959 = vmatpush2.bf16.msra.mxu0 0
      %3960 = vmatprep.subr.bf16.mxu0 0
      %3961 = vmatpush2.bf16.msra.mxu0 0
      %3962 = vmatprep.subr.bf16.mxu0 0
      %3963 = vmatpush2.bf16.msra.mxu0 0
      %3964 = vmatprep.mubr.bf16.mxu0 0
      %3965 = vmatmul.mubr.bf16.gmra.mxu0 %v3927
      %v3966 = vpop.f32.mrf.mxu0
      %v3967 = vadd.f32 0.0, %v3966
      %v3968 = vpop.f32.mrf.mxu0
      %v3969 = vpop.f32.mrf.mxu0
      %v3970 = vadd.f32 0.0, %v3969
      %v3971 = vpop.f32.mrf.mxu0
      %3972 = vmatprep.mubr.bf16.mxu0 0
      %3973 = vmatmul.mubr.bf16.gmra.mxu0 %v3930
      %v3974 = vpop.f32.mrf.mxu0
      %v3975 = vadd.f32 0.0, %v3974
      %v3976 = vpop.f32.mrf.mxu0
      %v3977 = vpop.f32.mrf.mxu0
      %v3978 = vadd.f32 0.0, %v3977
      %v3979 = vpop.f32.mrf.mxu0
      %3980 = vdwg.mxu0
      %3981 = vrot.lane.b32.xlu0 %v1119, 88
      %v3982 = vpop.permute.xlu0 %3981
      %3983 = vrot.lane.b32.xlu0 %v1120, 88
      %v3984 = vpop.permute.xlu0 %3983
      %v3988 = vsel %vm1668, %v3611, 0
      %v3991 = vsel %vm1668, %v3612, 0
      %3993 = vmatprep.subr.bf16.mxu0 0
      %3994 = vmatpush1.bf16.msra.mxu0 0
      %3995 = vmatprep.subr.bf16.mxu0 0
      %3996 = vmatpush1.bf16.msra.mxu0 0
      %3997 = vmatprep.subr.bf16.mxu0 0
      %3998 = vmatpush1.bf16.msra.mxu0 0
      %3999 = vmatprep.subr.bf16.mxu0 0
      %4000 = vmatpush1.bf16.msra.mxu0 0
      %4001 = vmatprep.subr.bf16.mxu0 0
      %4002 = vmatpush1.bf16.msra.mxu0 0
      %4003 = vmatprep.subr.bf16.mxu0 0
      %4004 = vmatpush1.bf16.msra.mxu0 0
      %4005 = vmatprep.subr.bf16.mxu0 0
      %4006 = vmatpush1.bf16.msra.mxu0 %v3984
      %4007 = vmatprep.subr.bf16.mxu0 0
      %4008 = vmatpush1.bf16.msra.mxu0 %v3982
      %4009 = vmatprep.subr.bf16.mxu0 0
      %4010 = vmatpush2.bf16.msra.mxu0 0
      %4011 = vmatprep.subr.bf16.mxu0 0
      %4012 = vmatpush2.bf16.msra.mxu0 0
      %4013 = vmatprep.subr.bf16.mxu0 0
      %4014 = vmatpush2.bf16.msra.mxu0 0
      %4015 = vmatprep.subr.bf16.mxu0 0
      %4016 = vmatpush2.bf16.msra.mxu0 0
      %4017 = vmatprep.subr.bf16.mxu0 0
      %4018 = vmatpush2.bf16.msra.mxu0 0
      %4019 = vmatprep.subr.bf16.mxu0 0
      %4020 = vmatpush2.bf16.msra.mxu0 0
      %4021 = vmatprep.subr.bf16.mxu0 0
      %4022 = vmatpush2.bf16.msra.mxu0 0
      %4023 = vmatprep.subr.bf16.mxu0 0
      %4024 = vmatpush2.bf16.msra.mxu0 0
      %4025 = vmatprep.mubr.bf16.mxu0 0
      %4026 = vmatmul.mubr.bf16.gmra.mxu0 %v3988
      %v4027 = vpop.f32.mrf.mxu0
      %v4028 = vadd.f32 0.0, %v4027
      %v4029 = vpop.f32.mrf.mxu0
      %v4030 = vpop.f32.mrf.mxu0
      %v4031 = vadd.f32 0.0, %v4030
      %v4032 = vpop.f32.mrf.mxu0
      %4033 = vmatprep.mubr.bf16.mxu0 0
      %4034 = vmatmul.mubr.bf16.gmra.mxu0 %v3991
      %v4035 = vpop.f32.mrf.mxu0
      %v4036 = vadd.f32 0.0, %v4035
      %v4037 = vpop.f32.mrf.mxu0
      %v4038 = vpop.f32.mrf.mxu0
      %v4039 = vadd.f32 0.0, %v4038
      %v4040 = vpop.f32.mrf.mxu0
      %4041 = vdwg.mxu0
      %4042 = vrot.lane.b32.xlu0 %v1121, 88
      %v4043 = vpop.permute.xlu0 %4042
      %4044 = vrot.lane.b32.xlu0 %v1122, 88
      %v4045 = vpop.permute.xlu0 %4044
      %v4049 = vsel %vm1668, %v3613, 0
      %v4052 = vsel %vm1668, %v3614, 0
      %4054 = vmatprep.subr.bf16.mxu0 0
      %4055 = vmatpush1.bf16.msra.mxu0 0
      %4056 = vmatprep.subr.bf16.mxu0 0
      %4057 = vmatpush1.bf16.msra.mxu0 0
      %4058 = vmatprep.subr.bf16.mxu0 0
      %4059 = vmatpush1.bf16.msra.mxu0 0
      %4060 = vmatprep.subr.bf16.mxu0 0
      %4061 = vmatpush1.bf16.msra.mxu0 0
      %4062 = vmatprep.subr.bf16.mxu0 0
      %4063 = vmatpush1.bf16.msra.mxu0 0
      %4064 = vmatprep.subr.bf16.mxu0 0
      %4065 = vmatpush1.bf16.msra.mxu0 0
      %4066 = vmatprep.subr.bf16.mxu0 0
      %4067 = vmatpush1.bf16.msra.mxu0 %v4045
      %4068 = vmatprep.subr.bf16.mxu0 0
      %4069 = vmatpush1.bf16.msra.mxu0 %v4043
      %4070 = vmatprep.subr.bf16.mxu0 0
      %4071 = vmatpush2.bf16.msra.mxu0 0
      %4072 = vmatprep.subr.bf16.mxu0 0
      %4073 = vmatpush2.bf16.msra.mxu0 0
      %4074 = vmatprep.subr.bf16.mxu0 0
      %4075 = vmatpush2.bf16.msra.mxu0 0
      %4076 = vmatprep.subr.bf16.mxu0 0
      %4077 = vmatpush2.bf16.msra.mxu0 0
      %4078 = vmatprep.subr.bf16.mxu0 0
      %4079 = vmatpush2.bf16.msra.mxu0 0
      %4080 = vmatprep.subr.bf16.mxu0 0
      %4081 = vmatpush2.bf16.msra.mxu0 0
      %4082 = vmatprep.subr.bf16.mxu0 0
      %4083 = vmatpush2.bf16.msra.mxu0 0
      %4084 = vmatprep.subr.bf16.mxu0 0
      %4085 = vmatpush2.bf16.msra.mxu0 0
      %4086 = vmatprep.mubr.bf16.mxu0 0
      %4087 = vmatmul.mubr.bf16.gmra.mxu0 %v4049
      %v4088 = vpop.f32.mrf.mxu0
      %v4089 = vadd.f32 0.0, %v4088
      %v4090 = vpop.f32.mrf.mxu0
      %v4091 = vpop.f32.mrf.mxu0
      %v4092 = vadd.f32 0.0, %v4091
      %v4093 = vpop.f32.mrf.mxu0
      %4094 = vmatprep.mubr.bf16.mxu0 0
      %4095 = vmatmul.mubr.bf16.gmra.mxu0 %v4052
      %v4096 = vpop.f32.mrf.mxu0
      %v4097 = vadd.f32 0.0, %v4096
      %v4098 = vpop.f32.mrf.mxu0
      %v4099 = vpop.f32.mrf.mxu0
      %v4100 = vadd.f32 0.0, %v4099
      %v4101 = vpop.f32.mrf.mxu0
      %4102 = vdwg.mxu0
      %v4103 = vpack.c.bf16 %v3665, %v3662
      %v4104 = vpack.c.bf16 %v3673, %v3670
      %v4105 = vpack.c.bf16 %v3726, %v3723
      %v4106 = vpack.c.bf16 %v3734, %v3731
      %v4107 = vpack.c.bf16 %v3787, %v3784
      %v4108 = vpack.c.bf16 %v3795, %v3792
      %v4109 = vpack.c.bf16 %v3848, %v3845
      %v4110 = vpack.c.bf16 %v3856, %v3853
      %v4111 = vpack.c.bf16 %v3909, %v3906
      %v4112 = vpack.c.bf16 %v3917, %v3914
      %v4113 = vpack.c.bf16 %v3970, %v3967
      %v4114 = vpack.c.bf16 %v3978, %v3975
      %v4115 = vpack.c.bf16 %v4031, %v4028
      %v4116 = vpack.c.bf16 %v4039, %v4036
      %v4117 = vpack.c.bf16 %v4092, %v4089
      %v4118 = vpack.c.bf16 %v4100, %v4097
      %v4135 = vunpack.c.l.b16 %v4103
      %v4136 = vunpack.c.h.b16 %v4103
      %v4137 = vunpack.c.l.b16 %v4104
      %v4138 = vunpack.c.h.b16 %v4104
      %v4139 = vunpack.c.l.b16 %v4105
      %v4140 = vunpack.c.h.b16 %v4105
      %v4141 = vunpack.c.l.b16 %v4106
      %v4142 = vunpack.c.h.b16 %v4106
      %v4143 = vunpack.c.l.b16 %v4107
      %v4144 = vunpack.c.h.b16 %v4107
      %v4145 = vunpack.c.l.b16 %v4108
      %v4146 = vunpack.c.h.b16 %v4108
      %v4147 = vunpack.c.l.b16 %v4109
      %v4148 = vunpack.c.h.b16 %v4109
      %v4149 = vunpack.c.l.b16 %v4110
      %v4150 = vunpack.c.h.b16 %v4110
      %v4151 = vunpack.c.l.b16 %v4111
      %v4152 = vunpack.c.h.b16 %v4111
      %v4153 = vunpack.c.l.b16 %v4112
      %v4154 = vunpack.c.h.b16 %v4112
      %v4155 = vunpack.c.l.b16 %v4113
      %v4156 = vunpack.c.h.b16 %v4113
      %v4157 = vunpack.c.l.b16 %v4114
      %v4158 = vunpack.c.h.b16 %v4114
      %v4159 = vunpack.c.l.b16 %v4115
      %v4160 = vunpack.c.h.b16 %v4115
      %v4161 = vunpack.c.l.b16 %v4116
      %v4162 = vunpack.c.h.b16 %v4116
      %v4163 = vunpack.c.l.b16 %v4117
      %v4164 = vunpack.c.h.b16 %v4117
      %v4165 = vunpack.c.l.b16 %v4118
      %v4166 = vunpack.c.h.b16 %v4118
      %v4167 = vpack.c.b16 %v4135, %v4135
      %v4168 = vpack.c.b16 %v4136, %v4136
      %v4169 = vpack.c.b16 %v4137, %v4137
      %v4170 = vpack.c.b16 %v4138, %v4138
      %v4171 = vpack.c.b16 %v4139, %v4139
      %v4172 = vpack.c.b16 %v4140, %v4140
      %v4173 = vpack.c.b16 %v4141, %v4141
      %v4174 = vpack.c.b16 %v4142, %v4142
      %v4175 = vpack.c.b16 %v4143, %v4143
      %v4176 = vpack.c.b16 %v4144, %v4144
      %v4177 = vpack.c.b16 %v4145, %v4145
      %v4178 = vpack.c.b16 %v4146, %v4146
      %v4179 = vpack.c.b16 %v4147, %v4147
      %v4180 = vpack.c.b16 %v4148, %v4148
      %v4181 = vpack.c.b16 %v4149, %v4149
      %v4182 = vpack.c.b16 %v4150, %v4150
      %v4183 = vpack.c.b16 %v4151, %v4151
      %v4184 = vpack.c.b16 %v4152, %v4152
      %v4185 = vpack.c.b16 %v4153, %v4153
      %v4186 = vpack.c.b16 %v4154, %v4154
      %v4187 = vpack.c.b16 %v4155, %v4155
      %v4188 = vpack.c.b16 %v4156, %v4156
      %v4189 = vpack.c.b16 %v4157, %v4157
      %v4190 = vpack.c.b16 %v4158, %v4158
      %v4191 = vpack.c.b16 %v4159, %v4159
      %v4192 = vpack.c.b16 %v4160, %v4160
      %v4193 = vpack.c.b16 %v4161, %v4161
      %v4194 = vpack.c.b16 %v4162, %v4162
      %v4195 = vpack.c.b16 %v4163, %v4163
      %v4196 = vpack.c.b16 %v4164, %v4164
      %v4197 = vpack.c.b16 %v4165, %v4165
      %v4198 = vpack.c.b16 %v4166, %v4166
      %4199 = vrot.lane.b32.xlu0 %v4167, 8
      %v4200 = vpop.permute.xlu0 %4199
      %4201 = vrot.lane.b32.xlu0 %v4168, 8
      %v4202 = vpop.permute.xlu0 %4201
      %4203 = vrot.lane.b32.xlu0 %v4169, 8
      %v4204 = vpop.permute.xlu0 %4203
      %4205 = vrot.lane.b32.xlu0 %v4170, 8
      %v4206 = vpop.permute.xlu0 %4205
      %4207 = vrot.lane.b32.xlu0 %v4171, 8
      %v4208 = vpop.permute.xlu0 %4207
      %4209 = vrot.lane.b32.xlu0 %v4172, 8
      %v4210 = vpop.permute.xlu0 %4209
      %4211 = vrot.lane.b32.xlu0 %v4173, 8
      %v4212 = vpop.permute.xlu0 %4211
      %4213 = vrot.lane.b32.xlu0 %v4174, 8
      %v4214 = vpop.permute.xlu0 %4213
      %4215 = vrot.lane.b32.xlu0 %v4175, 8
      %v4216 = vpop.permute.xlu0 %4215
      %4217 = vrot.lane.b32.xlu0 %v4176, 8
      %v4218 = vpop.permute.xlu0 %4217
      %4219 = vrot.lane.b32.xlu0 %v4177, 8
      %v4220 = vpop.permute.xlu0 %4219
      %4221 = vrot.lane.b32.xlu0 %v4178, 8
      %v4222 = vpop.permute.xlu0 %4221
      %4223 = vrot.lane.b32.xlu0 %v4179, 8
      %v4224 = vpop.permute.xlu0 %4223
      %4225 = vrot.lane.b32.xlu0 %v4180, 8
      %v4226 = vpop.permute.xlu0 %4225
      %4227 = vrot.lane.b32.xlu0 %v4181, 8
      %v4228 = vpop.permute.xlu0 %4227
      %4229 = vrot.lane.b32.xlu0 %v4182, 8
      %v4230 = vpop.permute.xlu0 %4229
      %4231 = vrot.lane.b32.xlu0 %v4183, 8
      %v4232 = vpop.permute.xlu0 %4231
      %4233 = vrot.lane.b32.xlu0 %v4184, 8
      %v4234 = vpop.permute.xlu0 %4233
      %4235 = vrot.lane.b32.xlu0 %v4185, 8
      %v4236 = vpop.permute.xlu0 %4235
      %4237 = vrot.lane.b32.xlu0 %v4186, 8
      %v4238 = vpop.permute.xlu0 %4237
      %4239 = vrot.lane.b32.xlu0 %v4187, 8
      %v4240 = vpop.permute.xlu0 %4239
      %4241 = vrot.lane.b32.xlu0 %v4188, 8
      %v4242 = vpop.permute.xlu0 %4241
      %4243 = vrot.lane.b32.xlu0 %v4189, 8
      %v4244 = vpop.permute.xlu0 %4243
      %4245 = vrot.lane.b32.xlu0 %v4190, 8
      %v4246 = vpop.permute.xlu0 %4245
      %4247 = vrot.lane.b32.xlu0 %v4191, 8
      %v4248 = vpop.permute.xlu0 %4247
      %4249 = vrot.lane.b32.xlu0 %v4192, 8
      %v4250 = vpop.permute.xlu0 %4249
      %4251 = vrot.lane.b32.xlu0 %v4193, 8
      %v4252 = vpop.permute.xlu0 %4251
      %4253 = vrot.lane.b32.xlu0 %v4194, 8
      %v4254 = vpop.permute.xlu0 %4253
      %4255 = vrot.lane.b32.xlu0 %v4195, 8
      %v4256 = vpop.permute.xlu0 %4255
      %4257 = vrot.lane.b32.xlu0 %v4196, 8
      %v4258 = vpop.permute.xlu0 %4257
      %4259 = vrot.lane.b32.xlu0 %v4197, 8
      %v4260 = vpop.permute.xlu0 %4259
      %4261 = vrot.lane.b32.xlu0 %v4198, 8
      %v4262 = vpop.permute.xlu0 %4261
      %vm4295 = vcmask 126016
      %4296 = vst.msk [vmem:[#allocation2] sm:$0xf] %vm4295, %v4200
      %4297 = vst.msk [vmem:[#allocation2 + $0x4] sm:$0xf] %vm4295, %v4202
      %4298 = vst.msk [vmem:[#allocation2 + $0x8] sm:$0xf] %vm4295, %v4204
      %4299 = vst.msk [vmem:[#allocation2 + $0xc] sm:$0xf] %vm4295, %v4206
      %4300 = vst.msk [vmem:[#allocation2 + $0x10] sm:$0xf] %vm4295, %v4208
      %4301 = vst.msk [vmem:[#allocation2 + $0x14] sm:$0xf] %vm4295, %v4210
      %4302 = vst.msk [vmem:[#allocation2 + $0x18] sm:$0xf] %vm4295, %v4212
      %4303 = vst.msk [vmem:[#allocation2 + $0x1c] sm:$0xf] %vm4295, %v4214
      %4304 = vst.msk [vmem:[#allocation2 + $0x20] sm:$0xf] %vm4295, %v4216
      %4305 = vst.msk [vmem:[#allocation2 + $0x24] sm:$0xf] %vm4295, %v4218
      %4306 = vst.msk [vmem:[#allocation2 + $0x28] sm:$0xf] %vm4295, %v4220
      %4307 = vst.msk [vmem:[#allocation2 + $0x2c] sm:$0xf] %vm4295, %v4222
      %4308 = vst.msk [vmem:[#allocation2 + $0x30] sm:$0xf] %vm4295, %v4224
      %4309 = vst.msk [vmem:[#allocation2 + $0x34] sm:$0xf] %vm4295, %v4226
      %4310 = vst.msk [vmem:[#allocation2 + $0x38] sm:$0xf] %vm4295, %v4228
      %4311 = vst.msk [vmem:[#allocation2 + $0x3c] sm:$0xf] %vm4295, %v4230
      %4312 = vst.msk [vmem:[#allocation2 + $0x40] sm:$0xf] %vm4295, %v4232
      %4313 = vst.msk [vmem:[#allocation2 + $0x44] sm:$0xf] %vm4295, %v4234
      %4314 = vst.msk [vmem:[#allocation2 + $0x48] sm:$0xf] %vm4295, %v4236
      %4315 = vst.msk [vmem:[#allocation2 + $0x4c] sm:$0xf] %vm4295, %v4238
      %4316 = vst.msk [vmem:[#allocation2 + $0x50] sm:$0xf] %vm4295, %v4240
      %4317 = vst.msk [vmem:[#allocation2 + $0x54] sm:$0xf] %vm4295, %v4242
      %4318 = vst.msk [vmem:[#allocation2 + $0x58] sm:$0xf] %vm4295, %v4244
      %4319 = vst.msk [vmem:[#allocation2 + $0x5c] sm:$0xf] %vm4295, %v4246
      %4320 = vst.msk [vmem:[#allocation2 + $0x60] sm:$0xf] %vm4295, %v4248
      %4321 = vst.msk [vmem:[#allocation2 + $0x64] sm:$0xf] %vm4295, %v4250
      %4322 = vst.msk [vmem:[#allocation2 + $0x68] sm:$0xf] %vm4295, %v4252
      %4323 = vst.msk [vmem:[#allocation2 + $0x6c] sm:$0xf] %vm4295, %v4254
      %4324 = vst.msk [vmem:[#allocation2 + $0x70] sm:$0xf] %vm4295, %v4256
      %4325 = vst.msk [vmem:[#allocation2 + $0x74] sm:$0xf] %vm4295, %v4258
      %4326 = vst.msk [vmem:[#allocation2 + $0x78] sm:$0xf] %vm4295, %v4260
      %4327 = vst.msk [vmem:[#allocation2 + $0x7c] sm:$0xf] %vm4295, %v4262
      %v4328 = vld [vmem:[#allocation2] sm:$0xf]
      %v4329 = vld [vmem:[#allocation2 + $0x4] sm:$0xf]
      %v4330 = vld [vmem:[#allocation2 + $0x8] sm:$0xf]
      %v4331 = vld [vmem:[#allocation2 + $0xc] sm:$0xf]
      %v4332 = vld [vmem:[#allocation2 + $0x10] sm:$0xf]
      %v4333 = vld [vmem:[#allocation2 + $0x14] sm:$0xf]
      %v4334 = vld [vmem:[#allocation2 + $0x18] sm:$0xf]
      %v4335 = vld [vmem:[#allocation2 + $0x1c] sm:$0xf]
      %v4336 = vld [vmem:[#allocation2 + $0x20] sm:$0xf]
      %v4337 = vld [vmem:[#allocation2 + $0x24] sm:$0xf]
      %v4338 = vld [vmem:[#allocation2 + $0x28] sm:$0xf]
      %v4339 = vld [vmem:[#allocation2 + $0x2c] sm:$0xf]
      %v4340 = vld [vmem:[#allocation2 + $0x30] sm:$0xf]
      %v4341 = vld [vmem:[#allocation2 + $0x34] sm:$0xf]
      %v4342 = vld [vmem:[#allocation2 + $0x38] sm:$0xf]
      %v4343 = vld [vmem:[#allocation2 + $0x3c] sm:$0xf]
      %v4344 = vld [vmem:[#allocation2 + $0x40] sm:$0xf]
      %v4345 = vld [vmem:[#allocation2 + $0x44] sm:$0xf]
      %v4346 = vld [vmem:[#allocation2 + $0x48] sm:$0xf]
      %v4347 = vld [vmem:[#allocation2 + $0x4c] sm:$0xf]
      %v4348 = vld [vmem:[#allocation2 + $0x50] sm:$0xf]
      %v4349 = vld [vmem:[#allocation2 + $0x54] sm:$0xf]
      %v4350 = vld [vmem:[#allocation2 + $0x58] sm:$0xf]
      %v4351 = vld [vmem:[#allocation2 + $0x5c] sm:$0xf]
      %v4352 = vld [vmem:[#allocation2 + $0x60] sm:$0xf]
      %v4353 = vld [vmem:[#allocation2 + $0x64] sm:$0xf]
      %v4354 = vld [vmem:[#allocation2 + $0x68] sm:$0xf]
      %v4355 = vld [vmem:[#allocation2 + $0x6c] sm:$0xf]
      %v4356 = vld [vmem:[#allocation2 + $0x70] sm:$0xf]
      %v4357 = vld [vmem:[#allocation2 + $0x74] sm:$0xf]
      %v4358 = vld [vmem:[#allocation2 + $0x78] sm:$0xf]
      %v4359 = vld [vmem:[#allocation2 + $0x7c] sm:$0xf]
      %v4360 = vld [vmem:[%s6] sm:$0xf]
      %v4361 = vld [vmem:[%s6 + $0x4] sm:$0xf]
      %v4362 = vld [vmem:[%s7] sm:$0x1]
      %v4364 = vlaneseq
      %v4365 = vshrl.u32 %v4364, 7
      %v4366 = vsub.s32 0, %v4365
      %v4367 = vrot.slane %v4362, %v4366
      %v4401 = vunpack.c.l.b16 %v4328
      %v4402 = vunpack.c.l.b16 %v4329
      %v4403 = vunpack.c.l.b16 %v4330
      %v4404 = vunpack.c.l.b16 %v4331
      %v4405 = vunpack.c.l.b16 %v4332
      %v4406 = vunpack.c.l.b16 %v4333
      %v4407 = vunpack.c.l.b16 %v4334
      %v4408 = vunpack.c.l.b16 %v4335
      %v4409 = vunpack.c.l.b16 %v4336
      %v4410 = vunpack.c.l.b16 %v4337
      %v4411 = vunpack.c.l.b16 %v4338
      %v4412 = vunpack.c.l.b16 %v4339
      %v4413 = vunpack.c.l.b16 %v4340
      %v4414 = vunpack.c.l.b16 %v4341
      %v4415 = vunpack.c.l.b16 %v4342
      %v4416 = vunpack.c.l.b16 %v4343
      %v4417 = vunpack.c.l.b16 %v4344
      %v4418 = vunpack.c.l.b16 %v4345
      %v4419 = vunpack.c.l.b16 %v4346
      %v4420 = vunpack.c.l.b16 %v4347
      %v4421 = vunpack.c.l.b16 %v4348
      %v4422 = vunpack.c.l.b16 %v4349
      %v4423 = vunpack.c.l.b16 %v4350
      %v4424 = vunpack.c.l.b16 %v4351
      %v4425 = vunpack.c.l.b16 %v4352
      %v4426 = vunpack.c.l.b16 %v4353
      %v4427 = vunpack.c.l.b16 %v4354
      %v4428 = vunpack.c.l.b16 %v4355
      %v4429 = vunpack.c.l.b16 %v4356
      %v4430 = vunpack.c.l.b16 %v4357
      %v4431 = vunpack.c.l.b16 %v4358
      %v4432 = vunpack.c.l.b16 %v4359
      %v4433 = vpack.c.b16 %v4402, %v4401
      %v4434 = vpack.c.b16 %v4404, %v4403
      %v4435 = vpack.c.b16 %v4406, %v4405
      %v4436 = vpack.c.b16 %v4408, %v4407
      %v4437 = vpack.c.b16 %v4410, %v4409
      %v4438 = vpack.c.b16 %v4412, %v4411
      %v4439 = vpack.c.b16 %v4414, %v4413
      %v4440 = vpack.c.b16 %v4416, %v4415
      %v4441 = vpack.c.b16 %v4418, %v4417
      %v4442 = vpack.c.b16 %v4420, %v4419
      %v4443 = vpack.c.b16 %v4422, %v4421
      %v4444 = vpack.c.b16 %v4424, %v4423
      %v4445 = vpack.c.b16 %v4426, %v4425
      %v4446 = vpack.c.b16 %v4428, %v4427
      %v4447 = vpack.c.b16 %v4430, %v4429
      %v4448 = vpack.c.b16 %v4432, %v4431
      %v4451 = vunpack.c.l.b16 %v4360
      %v4452 = vunpack.c.l.b16 %v4361
      %v4453 = vpack.c.b16 %v4452, %v4451
      %v4456 = vsel %vm371, %v4433, 0
      %v4459 = vsel %vm371, %v4434, 0
      %v4462 = vsel %vm371, %v4435, 0
      %v4465 = vsel %vm371, %v4436, 0
      %v4468 = vsel %vm371, %v4437, 0
      %v4471 = vsel %vm371, %v4438, 0
      %v4474 = vsel %vm371, %v4439, 0
      %v4477 = vsel %vm371, %v4440, 0
      %v4480 = vsel %vm371, %v4441, 0
      %v4483 = vsel %vm371, %v4442, 0
      %v4486 = vsel %vm371, %v4443, 0
      %v4489 = vsel %vm371, %v4444, 0
      %v4492 = vsel %vm371, %v4445, 0
      %v4495 = vsel %vm371, %v4446, 0
      %v4498 = vsel %vm371, %v4447, 0
      %v4501 = vsel %vm371, %v4448, 0
      %4503 = vmatprep.subr.bf16.mxu0 0
      %4504 = vmatpush1.bf16.msra.mxu0 0
      %4505 = vmatprep.subr.bf16.mxu0 0
      %4506 = vmatpush1.bf16.msra.mxu0 0
      %4507 = vmatprep.subr.bf16.mxu0 0
      %4508 = vmatpush1.bf16.msra.mxu0 0
      %4509 = vmatprep.subr.bf16.mxu0 0
      %4510 = vmatpush1.bf16.msra.mxu0 0
      %4511 = vmatprep.subr.bf16.mxu0 0
      %4512 = vmatpush1.bf16.msra.mxu0 0
      %4513 = vmatprep.subr.bf16.mxu0 0
      %4514 = vmatpush1.bf16.msra.mxu0 0
      %4515 = vmatprep.subr.bf16.mxu0 0
      %4516 = vmatpush1.bf16.msra.mxu0 0
      %4517 = vmatprep.subr.bf16.mxu0 0
      %4518 = vmatpush1.bf16.msra.mxu0 %v4453
      %4519 = vmatprep.subr.bf16.mxu0 0
      %4520 = vmatpush2.bf16.msra.mxu0 0
      %4521 = vmatprep.subr.bf16.mxu0 0
      %4522 = vmatpush2.bf16.msra.mxu0 0
      %4523 = vmatprep.subr.bf16.mxu0 0
      %4524 = vmatpush2.bf16.msra.mxu0 0
      %4525 = vmatprep.subr.bf16.mxu0 0
      %4526 = vmatpush2.bf16.msra.mxu0 0
      %4527 = vmatprep.subr.bf16.mxu0 0
      %4528 = vmatpush2.bf16.msra.mxu0 0
      %4529 = vmatprep.subr.bf16.mxu0 0
      %4530 = vmatpush2.bf16.msra.mxu0 0
      %4531 = vmatprep.subr.bf16.mxu0 0
      %4532 = vmatpush2.bf16.msra.mxu0 0
      %4533 = vmatprep.subr.bf16.mxu0 0
      %4534 = vmatpush2.bf16.msra.mxu0 0
      %4535 = vmatprep.mubr.bf16.mxu0 0
      %4536 = vmatmul.mubr.bf16.gmra.mxu0 %v4456
      %v4537 = vpop.f32.mrf.mxu0
      %v4538 = vadd.f32 %v4367, %v4537
      %v4539 = vpop.f32.mrf.mxu0
      %v4540 = vpop.f32.mrf.mxu0
      %v4541 = vadd.f32 %v4367, %v4540
      %v4542 = vpop.f32.mrf.mxu0
      %4543 = vmatprep.mubr.bf16.mxu0 0
      %4544 = vmatmul.mubr.bf16.gmra.mxu0 %v4459
      %v4545 = vpop.f32.mrf.mxu0
      %v4546 = vadd.f32 %v4367, %v4545
      %v4547 = vpop.f32.mrf.mxu0
      %v4548 = vpop.f32.mrf.mxu0
      %v4549 = vadd.f32 %v4367, %v4548
      %v4550 = vpop.f32.mrf.mxu0
      %4551 = vmatprep.mubr.bf16.mxu0 0
      %4552 = vmatmul.mubr.bf16.gmra.mxu0 %v4462
      %v4553 = vpop.f32.mrf.mxu0
      %v4554 = vadd.f32 %v4367, %v4553
      %v4555 = vpop.f32.mrf.mxu0
      %v4556 = vpop.f32.mrf.mxu0
      %v4557 = vadd.f32 %v4367, %v4556
      %v4558 = vpop.f32.mrf.mxu0
      %4559 = vmatprep.mubr.bf16.mxu0 0
      %4560 = vmatmul.mubr.bf16.gmra.mxu0 %v4465
      %v4561 = vpop.f32.mrf.mxu0
      %v4562 = vadd.f32 %v4367, %v4561
      %v4563 = vpop.f32.mrf.mxu0
      %v4564 = vpop.f32.mrf.mxu0
      %v4565 = vadd.f32 %v4367, %v4564
      %v4566 = vpop.f32.mrf.mxu0
      %4567 = vmatprep.mubr.bf16.mxu0 0
      %4568 = vmatmul.mubr.bf16.gmra.mxu0 %v4468
      %v4569 = vpop.f32.mrf.mxu0
      %v4570 = vadd.f32 %v4367, %v4569
      %v4571 = vpop.f32.mrf.mxu0
      %v4572 = vpop.f32.mrf.mxu0
      %v4573 = vadd.f32 %v4367, %v4572
      %v4574 = vpop.f32.mrf.mxu0
      %4575 = vmatprep.mubr.bf16.mxu0 0
      %4576 = vmatmul.mubr.bf16.gmra.mxu0 %v4471
      %v4577 = vpop.f32.mrf.mxu0
      %v4578 = vadd.f32 %v4367, %v4577
      %v4579 = vpop.f32.mrf.mxu0
      %v4580 = vpop.f32.mrf.mxu0
      %v4581 = vadd.f32 %v4367, %v4580
      %v4582 = vpop.f32.mrf.mxu0
      %4583 = vmatprep.mubr.bf16.mxu0 0
      %4584 = vmatmul.mubr.bf16.gmra.mxu0 %v4474
      %v4585 = vpop.f32.mrf.mxu0
      %v4586 = vadd.f32 %v4367, %v4585
      %v4587 = vpop.f32.mrf.mxu0
      %v4588 = vpop.f32.mrf.mxu0
      %v4589 = vadd.f32 %v4367, %v4588
      %v4590 = vpop.f32.mrf.mxu0
      %4591 = vmatprep.mubr.bf16.mxu0 0
      %4592 = vmatmul.mubr.bf16.gmra.mxu0 %v4477
      %v4593 = vpop.f32.mrf.mxu0
      %v4594 = vadd.f32 %v4367, %v4593
      %v4595 = vpop.f32.mrf.mxu0
      %v4596 = vpop.f32.mrf.mxu0
      %v4597 = vadd.f32 %v4367, %v4596
      %v4598 = vpop.f32.mrf.mxu0
      %4599 = vmatprep.mubr.bf16.mxu0 0
      %4600 = vmatmul.mubr.bf16.gmra.mxu0 %v4480
      %v4601 = vpop.f32.mrf.mxu0
      %v4602 = vadd.f32 %v4367, %v4601
      %v4603 = vpop.f32.mrf.mxu0
      %v4604 = vpop.f32.mrf.mxu0
      %v4605 = vadd.f32 %v4367, %v4604
      %v4606 = vpop.f32.mrf.mxu0
      %4607 = vmatprep.mubr.bf16.mxu0 0
      %4608 = vmatmul.mubr.bf16.gmra.mxu0 %v4483
      %v4609 = vpop.f32.mrf.mxu0
      %v4610 = vadd.f32 %v4367, %v4609
      %v4611 = vpop.f32.mrf.mxu0
      %v4612 = vpop.f32.mrf.mxu0
      %v4613 = vadd.f32 %v4367, %v4612
      %v4614 = vpop.f32.mrf.mxu0
      %4615 = vmatprep.mubr.bf16.mxu0 0
      %4616 = vmatmul.mubr.bf16.gmra.mxu0 %v4486
      %v4617 = vpop.f32.mrf.mxu0
      %v4618 = vadd.f32 %v4367, %v4617
      %v4619 = vpop.f32.mrf.mxu0
      %v4620 = vpop.f32.mrf.mxu0
      %v4621 = vadd.f32 %v4367, %v4620
      %v4622 = vpop.f32.mrf.mxu0
      %4623 = vmatprep.mubr.bf16.mxu0 0
      %4624 = vmatmul.mubr.bf16.gmra.mxu0 %v4489
      %v4625 = vpop.f32.mrf.mxu0
      %v4626 = vadd.f32 %v4367, %v4625
      %v4627 = vpop.f32.mrf.mxu0
      %v4628 = vpop.f32.mrf.mxu0
      %v4629 = vadd.f32 %v4367, %v4628
      %v4630 = vpop.f32.mrf.mxu0
      %4631 = vmatprep.mubr.bf16.mxu0 0
      %4632 = vmatmul.mubr.bf16.gmra.mxu0 %v4492
      %v4633 = vpop.f32.mrf.mxu0
      %v4634 = vadd.f32 %v4367, %v4633
      %v4635 = vpop.f32.mrf.mxu0
      %v4636 = vpop.f32.mrf.mxu0
      %v4637 = vadd.f32 %v4367, %v4636
      %v4638 = vpop.f32.mrf.mxu0
      %4639 = vmatprep.mubr.bf16.mxu0 0
      %4640 = vmatmul.mubr.bf16.gmra.mxu0 %v4495
      %v4641 = vpop.f32.mrf.mxu0
      %v4642 = vadd.f32 %v4367, %v4641
      %v4643 = vpop.f32.mrf.mxu0
      %v4644 = vpop.f32.mrf.mxu0
      %v4645 = vadd.f32 %v4367, %v4644
      %v4646 = vpop.f32.mrf.mxu0
      %4647 = vmatprep.mubr.bf16.mxu0 0
      %4648 = vmatmul.mubr.bf16.gmra.mxu0 %v4498
      %v4649 = vpop.f32.mrf.mxu0
      %v4650 = vadd.f32 %v4367, %v4649
      %v4651 = vpop.f32.mrf.mxu0
      %v4652 = vpop.f32.mrf.mxu0
      %v4653 = vadd.f32 %v4367, %v4652
      %v4654 = vpop.f32.mrf.mxu0
      %4655 = vmatprep.mubr.bf16.mxu0 0
      %4656 = vmatmul.mubr.bf16.gmra.mxu0 %v4501
      %v4657 = vpop.f32.mrf.mxu0
      %v4658 = vadd.f32 %v4367, %v4657
      %v4659 = vpop.f32.mrf.mxu0
      %v4660 = vpop.f32.mrf.mxu0
      %v4661 = vadd.f32 %v4367, %v4660
      %v4662 = vpop.f32.mrf.mxu0
      %4663 = vdwg.mxu0
      %4664 = vst.msk [vmem:[%s335] sm:$0xff] %vm371, %v4538
      %4665 = vst.msk [vmem:[%s335 + $0x8] sm:$0xff] %vm371, %v4541
      %4666 = vst.msk [vmem:[%s335 + $0x10] sm:$0xff] %vm371, %v4546
      %4667 = vst.msk [vmem:[%s335 + $0x18] sm:$0xff] %vm371, %v4549
      %4668 = vst.msk [vmem:[%s335 + $0x20] sm:$0xff] %vm371, %v4554
      %4669 = vst.msk [vmem:[%s335 + $0x28] sm:$0xff] %vm371, %v4557
      %4670 = vst.msk [vmem:[%s335 + $0x30] sm:$0xff] %vm371, %v4562
      %4671 = vst.msk [vmem:[%s335 + $0x38] sm:$0xff] %vm371, %v4565
      %4672 = vst.msk [vmem:[%s335 + $0x40] sm:$0xff] %vm371, %v4570
      %4673 = vst.msk [vmem:[%s335 + $0x48] sm:$0xff] %vm371, %v4573
      %4674 = vst.msk [vmem:[%s335 + $0x50] sm:$0xff] %vm371, %v4578
      %4675 = vst.msk [vmem:[%s335 + $0x58] sm:$0xff] %vm371, %v4581
      %4676 = vst.msk [vmem:[%s335 + $0x60] sm:$0xff] %vm371, %v4586
      %4677 = vst.msk [vmem:[%s335 + $0x68] sm:$0xff] %vm371, %v4589
      %4678 = vst.msk [vmem:[%s335 + $0x70] sm:$0xff] %vm371, %v4594
      %4679 = vst.msk [vmem:[%s335 + $0x78] sm:$0xff] %vm371, %v4597
      %4680 = vst.msk [vmem:[%s335 + $0x80] sm:$0xff] %vm371, %v4602
      %4681 = vst.msk [vmem:[%s335 + $0x88] sm:$0xff] %vm371, %v4605
      %4682 = vst.msk [vmem:[%s335 + $0x90] sm:$0xff] %vm371, %v4610
      %4683 = vst.msk [vmem:[%s335 + $0x98] sm:$0xff] %vm371, %v4613
      %4684 = vst.msk [vmem:[%s335 + $0xa0] sm:$0xff] %vm371, %v4618
      %4685 = vst.msk [vmem:[%s335 + $0xa8] sm:$0xff] %vm371, %v4621
      %4686 = vst.msk [vmem:[%s335 + $0xb0] sm:$0xff] %vm371, %v4626
      %4687 = vst.msk [vmem:[%s335 + $0xb8] sm:$0xff] %vm371, %v4629
      %4688 = vst.msk [vmem:[%s335 + $0xc0] sm:$0xff] %vm371, %v4634
      %4689 = vst.msk [vmem:[%s335 + $0xc8] sm:$0xff] %vm371, %v4637
      %4690 = vst.msk [vmem:[%s335 + $0xd0] sm:$0xff] %vm371, %v4642
      %4691 = vst.msk [vmem:[%s335 + $0xd8] sm:$0xff] %vm371, %v4645
      %4692 = vst.msk [vmem:[%s335 + $0xe0] sm:$0xff] %vm371, %v4650
      %4693 = vst.msk [vmem:[%s335 + $0xe8] sm:$0xff] %vm371, %v4653
      %4694 = vst.msk [vmem:[%s335 + $0xf0] sm:$0xff] %vm371, %v4658
      %4695 = vst.msk [vmem:[%s335 + $0xf8] sm:$0xff] %vm371, %v4661
      %s4696 = sadd.s32 %s24, %s23
      %s4697 = smul.u32 8, %s4696
      %p4698 = scmp.lt.s32.totalorder %s4697, 15
      %s4699 = scalar_select %p4698, %s4697, 15
      %s4700 = smul.addr %s4699, 4
      %s4701 = smul.addr %s4700, 8
      %s4702 = scalar_lea.vmem %s8, %s4701
      // Predicated region
      $region53: #{tpu_custom_call.1} parent=51 // pred_check
        %p4703 = pneg %p226
      $region54: #{tpu_custom_call.1} parent=51 // pred_check_branch
        %4705 = sbr.rel (%p4703) target = $region56
      $region55: #{tpu_custom_call.1} parent=51 // pred_region
        %s4706 = sadd.s32 %s24, %s23
        %s4707 = smul.u32 8, %s4706
      $region56: #{tpu_custom_call.1} parent=51 // pred_fallthru
        _
    $region52: #{tpu_custom_call.1} parent=5 // pred_fallthru
      _
    %p4708 = scmp.le.s32.totalorder 2, %s14
    // Predicated region
    $region57: #{tpu_custom_call.1} parent=5 // pred_check
      %p4709 = pneg %p4708
    $region58: #{tpu_custom_call.1} parent=5 // pred_check_branch
      %4711 = sbr.rel (%p4709) target = $region60
    $region59: #{tpu_custom_call.1} parent=5 // pred_region
      %s4712 = ssub.s32 %s14, 2
      // Predicated region
      $region61: #{tpu_custom_call.1} parent=59 // pred_check
        %p4713 = pneg %p232
      $region62: #{tpu_custom_call.1} parent=59 // pred_check_branch
        %4715 = sbr.rel (%p4713) target = $region64
      $region63: #{tpu_custom_call.1} parent=59 // pred_region
        %s4716 = sadd.s32 %s26, %s25
        %s4717 = smul.u32 8, %s4716
        %p4718 = scmp.lt.s32.totalorder %s4717, 15
        %s4719 = scalar_select %p4718, %s4717, 15
        %s4720 = smul.addr %s4719, 4
        %s4721 = smul.addr %s4720, 8
        %s4722 = scalar_lea.vmem %s8, %s4721
      $region64: #{tpu_custom_call.1} parent=59 // pred_fallthru
        _
    $region60: #{tpu_custom_call.1} parent=5 // pred_fallthru
      _
  $region6: #{tpu_custom_call.1} parent=0 // loop_footer
    %s18 = sadd.s32 1, %s14
  $region7: #{tpu_custom_call.1} parent=0 // loop_footer_branch
    %13 = sbr.rel target = $region3
  $region8: #{tpu_custom_call.1} parent=0 // loop_exit
    _

</llo_original>
